<compile_context>
chip_gen: v7x
topology: tpu7x:2x2x1
jax: 0.10.0
libtpu: 0.0.40
codegen_flags: <defaults>
</compile_context>

<pallas_src>
import math
import functools

import jax
import jax.numpy as jnp
from jax.experimental import pallas as pl
from jax.experimental.pallas import tpu as pltpu


# ----------------------------- in-kernel helpers -----------------------------

def _erf(x):
    # Abramowitz & Stegun 7.1.26 rational approximation (f32-level accuracy).
    # Matches nn.GELU() (exact erf) semantics; exp() and the reciprocal land on the EUP.
    a1, a2, a3, a4, a5 = 0.254829592, -0.284496736, 1.421413741, -1.453152027, 1.061405429
    p = 0.3275911
    sgn = jnp.where(x >= 0.0, 1.0, -1.0)
    ax = jnp.abs(x)
    t = pl.reciprocal(1.0 + p * ax, approx=True)     # divide moved off the VALU
    poly = ((((a5 * t + a4) * t + a3) * t + a2) * t + a1) * t
    return sgn * (1.0 - poly * jnp.exp(-ax * ax))


def _gelu(x):
    # exact (erf-based) GELU, matching nn.GELU() default; elementwise math kept in f32
    return 0.5 * x * (1.0 + _erf(x * (1.0 / math.sqrt(2.0))))


def _softmax(s):
    m = jnp.max(s, axis=-1, keepdims=True)
    e = jnp.exp(s - m)
    return e * pl.reciprocal(jnp.sum(e, axis=-1, keepdims=True), approx=True)


def _layernorm(x, gamma, beta, eps=1e-5):
    mu = jnp.mean(x, axis=-1, keepdims=True)
    var = jnp.mean((x - mu) ** 2, axis=-1, keepdims=True)
    return (x - mu) * jax.lax.rsqrt(var + eps) * gamma + beta


def _pad_lanes(a, target):
    pad = target - a.shape[-1]
    if pad == 0:
        return a
    return jnp.concatenate([a, jnp.zeros(a.shape[:-1] + (pad,), a.dtype)], axis=-1)


def _round_up(n, m):
    return (n + m - 1) // m * m


# --------------------------------- the kernel --------------------------------

def decoder_layer_kernel(
    x_ref, mem_ref,
    # nn.MultiheadAttention params (in_proj pre-sliced into q/k/v; weights (in, out), bf16;
    # 1/sqrt(hd) already folded into sa_q weight AND bias at init time)
    sa_q_wT, sa_k_wT, sa_v_wT, sa_q_b, sa_k_b, sa_v_b,
    sa_out_wT, sa_out_b,
    # norm1
    n1_g, n1_b,
    # ATM params (qkv_bias=False; hd**-5 scale folded into atm_q weight at init time)
    atm_q_wT, atm_k_wT, atm_v_wT, atm_p_wT, atm_p_b,
    # norm2
    n2_g, n2_b,
    # feed forward
    ff_w1T, ff_b1, ff_w2T, ff_b2,
    # norm3
    n3_g, n3_b,
    # outputs (lane-padded)
    out_ref, attn_ref,
    *, num_heads,
):
    f32 = jnp.float32
    bf16 = jnp.bfloat16
    H = num_heads
    Nq, C = x_ref.shape
    Nk = mem_ref.shape[0]
    hd = C // H

    def attention(q2d, k2d, v2d, nk):
        # Single batched QK^T / softmax / PV over all heads; bf16 before the head
        # reshape, bf16 again before the head merge.
        qh = q2d.astype(bf16).reshape(Nq, H, hd)
        kh = k2d.astype(bf16).reshape(nk, H, hd)
        vh = v2d.astype(bf16).reshape(nk, H, hd)
        s = jnp.einsum('qhd,khd->hqk', qh, kh, preferred_element_type=f32)   # (H, Nq, nk)
        p = _softmax(s)
        o = jnp.einsum('hqk,khd->qhd', p.astype(bf16), vh, preferred_element_type=f32)
        return s, o.astype(bf16).reshape(Nq, C)                              # heads merged

    x = x_ref[...].astype(f32)            # residual stream stays f32
    x_bf = x.astype(bf16)
    mem_bf = mem_ref[...].astype(bf16)    # only used as a matmul operand

    # ---------------- self attention (nn.MultiheadAttention, eval mode) ----------
    # TODO(synk): attention dropout (p=0.1) is train-mode only; eval (no-op) semantics used.
    q = jnp.dot(x_bf, sa_q_wT[...], preferred_element_type=f32) + sa_q_b[...]   # scale pre-folded
    k = jnp.dot(x_bf, sa_k_wT[...], preferred_element_type=f32) + sa_k_b[...]
    v = jnp.dot(x_bf, sa_v_wT[...], preferred_element_type=f32) + sa_v_b[...]
    _, sa = attention(q, k, v, Nq)
    x2 = jnp.dot(sa, sa_out_wT[...], preferred_element_type=f32) + sa_out_b[...]
    x = x + _layernorm(x2, n1_g[...], n1_b[...])                                # x += norm1(x2)

    # ---------------- ATM cross attention ----------------------------------------
    # NOTE: scale = head_dim ** (-5) exactly as in the PyTorch module (folded into atm_q_wT).
    x_bf = x.astype(bf16)
    qm = jnp.dot(x_bf, atm_q_wT[...], preferred_element_type=f32)
    km = jnp.dot(mem_bf, atm_k_wT[...], preferred_element_type=f32)
    vm = jnp.dot(mem_bf, atm_v_wT[...], preferred_element_type=f32)
    s, atm = attention(qm, km, vm, Nk)
    x2 = jnp.dot(atm, atm_p_wT[...], preferred_element_type=f32) + atm_p_b[...]
    x = x + _layernorm(x2, n2_g[...], n2_b[...])                                # x += norm2(x2)

    # attn_save: pre-softmax scores (scale included), averaged over heads.
    attn_avg = jnp.sum(s, axis=0) * (1.0 / H)                                   # (Nq, Nk)
    attn_ref[...] = _pad_lanes(attn_avg, attn_ref.shape[-1]).astype(attn_ref.dtype)

    # ---------------- feed forward -------------------------------------------------
    x_bf = x.astype(bf16)
    h1 = jnp.dot(x_bf, ff_w1T[...], preferred_element_type=f32) + ff_b1[...]
    h1 = _gelu(h1)
    x2 = jnp.dot(h1.astype(bf16), ff_w2T[...], preferred_element_type=f32) + ff_b2[...]
    x = x + x2
    x = _layernorm(x, n3_g[...], n3_b[...])                                     # x = norm3(x)

    out_ref[...] = _pad_lanes(x, out_ref.shape[-1]).astype(out_ref.dtype)


# --------------------------------- wrapper ------------------------------------

def transformer_decoder_layer(x, memory, params, num_heads):
    B, Nq, C = x.shape
    Nk = memory.shape[1]
    Cp = _round_up(C, 128)       # lane-dense output widths
    Nkp = _round_up(Nk, 128)

    kernel = functools.partial(decoder_layer_kernel, num_heads=num_heads)

    def act_spec(n, c):
        # one batch element per grid step, leading dim squeezed out of the kernel ref
        return pl.BlockSpec((None, n, c), lambda b: (b, 0, 0))

    def w_spec(shape):
        nd = len(shape)
        return pl.BlockSpec(shape, lambda b, _n=nd: (0,) * _n)   # constant -> stays resident

    in_specs = [act_spec(Nq, C), act_spec(Nk, C)] + [w_spec(p.shape) for p in params]
    out_specs = [
        pl.BlockSpec((None, Nq, Cp), lambda b: (b, 0, 0)),
        pl.BlockSpec((None, Nq, Nkp), lambda b: (b, 0, 0)),
    ]
    out_shape = [
        jax.ShapeDtypeStruct((B, Nq, Cp), x.dtype),
        jax.ShapeDtypeStruct((B, Nq, Nkp), jnp.float32),
    ]

    out_p, attn_p = pl.pallas_call(
        kernel,
        grid=(B,),                       # batch elements are independent -> megacore parallel
        in_specs=in_specs,
        out_specs=out_specs,
        out_shape=out_shape,
        compiler_params=pltpu.CompilerParams(dimension_semantics=("parallel",)),
    )(x, memory, *params)

    out = out_p[:, :, :C]
    attn = attn_p[:, :, :Nk]
    return out, attn


# ------------------------- deterministic parameter init -----------------------

def init_params(key, dim, num_heads, feed_forward_dim=None):
    if feed_forward_dim is None:
        feed_forward_dim = dim * 4
    hd = dim // num_heads
    ks = jax.random.split(key, 16)

    def w(k, shape, scale=0.05):
        return (scale * jax.random.normal(k, shape)).astype(jnp.float32)

    bf = lambda a: a.astype(jnp.bfloat16)           # matmul operands stored in bf16
    ones = lambda: jnp.ones((1, dim), jnp.float32)
    zeros = lambda: jnp.zeros((1, dim), jnp.float32)

    sa_scale = 1.0 / math.sqrt(hd)                  # nn.MultiheadAttention q-scale
    atm_scale = float(hd) ** (-5)                   # exactly as in the PyTorch ATM module

    # nn.MultiheadAttention in_proj (packs q|k|v): slice host-side; fold scale into q.
    in_proj_wT = w(ks[0], (dim, 3 * dim))           # weight^T, (in, out)
    in_proj_b = w(ks[1], (1, 3 * dim))
    sa_q_wT = in_proj_wT[:, :dim] * sa_scale
    sa_k_wT = in_proj_wT[:, dim:2 * dim]
    sa_v_wT = in_proj_wT[:, 2 * dim:]
    sa_q_b = in_proj_b[:, :dim] * sa_scale
    sa_k_b = in_proj_b[:, dim:2 * dim]
    sa_v_b = in_proj_b[:, 2 * dim:]

    return [
        # self attention
        bf(sa_q_wT), bf(sa_k_wT), bf(sa_v_wT),
        sa_q_b, sa_k_b, sa_v_b,
        bf(w(ks[2], (dim, dim))),                    # out_proj.weight^T
        w(ks[3], (1, dim)),                          # out_proj.bias
        ones(), zeros(),                             # norm1 gamma, beta
        # ATM (qkv_bias=False); scale folded into q weight
        bf(w(ks[4], (dim, dim)) * atm_scale),        # q.weight^T * hd**-5
        bf(w(ks[5], (dim, dim))),                    # k.weight^T
        bf(w(ks[6], (dim, dim))),                    # v.weight^T
        bf(w(ks[7], (dim, dim))),                    # proj.weight^T
        w(ks[8], (1, dim)),                          # proj.bias
        ones(), zeros(),                             # norm2 gamma, beta
        # feed forward
        bf(w(ks[9], (dim, feed_forward_dim))),       # linear1.weight^T
        w(ks[10], (1, feed_forward_dim)),            # linear1.bias
        bf(w(ks[11], (feed_forward_dim, dim))),      # linear2.weight^T
        w(ks[12], (1, dim)),                         # linear2.bias
        ones(), zeros(),                             # norm3 gamma, beta
    ]


# ----------------------------------- main --------------------------------------

if __name__ == "__main__":
    key = jax.random.PRNGKey(0)
    dim, num_heads = 32, 2
    B, Nq, Nk = 2, 8, 16

    kx, km, kp = jax.random.split(key, 3)
    x = jax.random.normal(kx, (B, Nq, dim), jnp.float32)
    memory = jax.random.normal(km, (B, Nk, dim), jnp.float32)
    params = init_params(kp, dim, num_heads)

    out, attn = transformer_decoder_layer(x, memory, params, num_heads)
    jax.block_until_ready((out, attn))

    assert out.shape == (B, Nq, dim), out.shape
    assert attn.shape == (B, Nq, Nk), attn.shape
    assert bool(jnp.all(jnp.isfinite(out))) and bool(jnp.all(jnp.isfinite(attn)))
    print("KERNEL_OK")
</pallas_src>

<mosaic_0001>
module attributes {stable_mosaic.version = 11 : i64} {
  func.func @decoder_layer_kernel(%arg0: i32, %arg1: memref<1x8x32xf32, #tpu.memory_space<vmem>>, %arg2: memref<1x16x32xf32, #tpu.memory_space<vmem>>, %arg3: memref<32x32xbf16, #tpu.memory_space<vmem>>, %arg4: memref<32x32xbf16, #tpu.memory_space<vmem>>, %arg5: memref<32x32xbf16, #tpu.memory_space<vmem>>, %arg6: memref<1x32xf32, #tpu.memory_space<vmem>>, %arg7: memref<1x32xf32, #tpu.memory_space<vmem>>, %arg8: memref<1x32xf32, #tpu.memory_space<vmem>>, %arg9: memref<32x32xbf16, #tpu.memory_space<vmem>>, %arg10: memref<1x32xf32, #tpu.memory_space<vmem>>, %arg11: memref<1x32xf32, #tpu.memory_space<vmem>>, %arg12: memref<1x32xf32, #tpu.memory_space<vmem>>, %arg13: memref<32x32xbf16, #tpu.memory_space<vmem>>, %arg14: memref<32x32xbf16, #tpu.memory_space<vmem>>, %arg15: memref<32x32xbf16, #tpu.memory_space<vmem>>, %arg16: memref<32x32xbf16, #tpu.memory_space<vmem>>, %arg17: memref<1x32xf32, #tpu.memory_space<vmem>>, %arg18: memref<1x32xf32, #tpu.memory_space<vmem>>, %arg19: memref<1x32xf32, #tpu.memory_space<vmem>>, %arg20: memref<32x128xbf16, #tpu.memory_space<vmem>>, %arg21: memref<1x128xf32, #tpu.memory_space<vmem>>, %arg22: memref<128x32xbf16, #tpu.memory_space<vmem>>, %arg23: memref<1x32xf32, #tpu.memory_space<vmem>>, %arg24: memref<1x32xf32, #tpu.memory_space<vmem>>, %arg25: memref<1x32xf32, #tpu.memory_space<vmem>>, %arg26: memref<1x8x128xf32, #tpu.memory_space<vmem>>, %arg27: memref<1x8x128xf32, #tpu.memory_space<vmem>>) attributes {dimension_semantics = [#tpu.dimension_semantics<parallel>], iteration_bounds = array<i64: 2>, scalar_prefetch = 0 : i64, scratch_operands = 0 : i64, tpu.core_type = #tpu.core_type<tc>, window_params = [{transform_indices = @transform_0, window_bounds = array<i64: 1, 8, 32>}, {transform_indices = @transform_1, window_bounds = array<i64: 1, 16, 32>}, {pipeline_mode = #tpu.pipeline_mode<synchronous>, transform_indices = @transform_2, window_bounds = array<i64: 32, 32>}, {pipeline_mode = #tpu.pipeline_mode<synchronous>, transform_indices = @transform_3, window_bounds = array<i64: 32, 32>}, {pipeline_mode = #tpu.pipeline_mode<synchronous>, transform_indices = @transform_4, window_bounds = array<i64: 32, 32>}, {pipeline_mode = #tpu.pipeline_mode<synchronous>, transform_indices = @transform_5, window_bounds = array<i64: 1, 32>}, {pipeline_mode = #tpu.pipeline_mode<synchronous>, transform_indices = @transform_6, window_bounds = array<i64: 1, 32>}, {pipeline_mode = #tpu.pipeline_mode<synchronous>, transform_indices = @transform_7, window_bounds = array<i64: 1, 32>}, {pipeline_mode = #tpu.pipeline_mode<synchronous>, transform_indices = @transform_8, window_bounds = array<i64: 32, 32>}, {pipeline_mode = #tpu.pipeline_mode<synchronous>, transform_indices = @transform_9, window_bounds = array<i64: 1, 32>}, {pipeline_mode = #tpu.pipeline_mode<synchronous>, transform_indices = @transform_10, window_bounds = array<i64: 1, 32>}, {pipeline_mode = #tpu.pipeline_mode<synchronous>, transform_indices = @transform_11, window_bounds = array<i64: 1, 32>}, {pipeline_mode = #tpu.pipeline_mode<synchronous>, transform_indices = @transform_12, window_bounds = array<i64: 32, 32>}, {pipeline_mode = #tpu.pipeline_mode<synchronous>, transform_indices = @transform_13, window_bounds = array<i64: 32, 32>}, {pipeline_mode = #tpu.pipeline_mode<synchronous>, transform_indices = @transform_14, window_bounds = array<i64: 32, 32>}, {pipeline_mode = #tpu.pipeline_mode<synchronous>, transform_indices = @transform_15, window_bounds = array<i64: 32, 32>}, {pipeline_mode = #tpu.pipeline_mode<synchronous>, transform_indices = @transform_16, window_bounds = array<i64: 1, 32>}, {pipeline_mode = #tpu.pipeline_mode<synchronous>, transform_indices = @transform_17, window_bounds = array<i64: 1, 32>}, {pipeline_mode = #tpu.pipeline_mode<synchronous>, transform_indices = @transform_18, window_bounds = array<i64: 1, 32>}, {pipeline_mode = #tpu.pipeline_mode<synchronous>, transform_indices = @transform_19, window_bounds = array<i64: 32, 128>}, {pipeline_mode = #tpu.pipeline_mode<synchronous>, transform_indices = @transform_20, window_bounds = array<i64: 1, 128>}, {pipeline_mode = #tpu.pipeline_mode<synchronous>, transform_indices = @transform_21, window_bounds = array<i64: 128, 32>}, {pipeline_mode = #tpu.pipeline_mode<synchronous>, transform_indices = @transform_22, window_bounds = array<i64: 1, 32>}, {pipeline_mode = #tpu.pipeline_mode<synchronous>, transform_indices = @transform_23, window_bounds = array<i64: 1, 32>}, {pipeline_mode = #tpu.pipeline_mode<synchronous>, transform_indices = @transform_24, window_bounds = array<i64: 1, 32>}, {transform_indices = @transform_25, window_bounds = array<i64: 1, 8, 128>}, {transform_indices = @transform_26, window_bounds = array<i64: 1, 8, 128>}]} {
    %c0 = arith.constant 0 : index
    %c0_0 = arith.constant 0 : index
    %c0_1 = arith.constant 0 : index
    %0 = vector.load %arg1[%c0, %c0_0, %c0_1] : memref<1x8x32xf32, #tpu.memory_space<vmem>>, vector<1x8x32xf32>
    %1 = vector.shape_cast %0 : vector<1x8x32xf32> to vector<8x32xf32>
    %2 = arith.truncf %1 : vector<8x32xf32> to vector<8x32xbf16>
    %c0_2 = arith.constant 0 : index
    %c0_3 = arith.constant 0 : index
    %c0_4 = arith.constant 0 : index
    %3 = vector.load %arg2[%c0_2, %c0_3, %c0_4] : memref<1x16x32xf32, #tpu.memory_space<vmem>>, vector<1x16x32xf32>
    %4 = vector.shape_cast %3 : vector<1x16x32xf32> to vector<16x32xf32>
    %5 = arith.truncf %4 : vector<16x32xf32> to vector<16x32xbf16>
    %c0_5 = arith.constant 0 : index
    %c0_6 = arith.constant 0 : index
    %6 = vector.load %arg3[%c0_5, %c0_6] : memref<32x32xbf16, #tpu.memory_space<vmem>>, vector<32x32xbf16>
    %cst = arith.constant dense<0.000000e+00> : vector<8x32xf32>
    %7 = tpu.matmul %2, %6, %cst {dimension_numbers = #tpu.dot_dimension_numbers<[1], [0], [0], [1], [0, 0, 1, 1], [], []>} : vector<8x32xbf16>, vector<32x32xbf16>, vector<8x32xf32> -> vector<8x32xf32>
    %c0_7 = arith.constant 0 : index
    %c0_8 = arith.constant 0 : index
    %8 = vector.load %arg6[%c0_7, %c0_8] : memref<1x32xf32, #tpu.memory_space<vmem>>, vector<1x32xf32>
    %9 = vector.broadcast %8 : vector<1x32xf32> to vector<8x32xf32>
    %10 = arith.addf %7, %9 : vector<8x32xf32>
    %c0_9 = arith.constant 0 : index
    %c0_10 = arith.constant 0 : index
    %11 = vector.load %arg4[%c0_9, %c0_10] : memref<32x32xbf16, #tpu.memory_space<vmem>>, vector<32x32xbf16>
    %cst_11 = arith.constant dense<0.000000e+00> : vector<8x32xf32>
    %12 = tpu.matmul %2, %11, %cst_11 {dimension_numbers = #tpu.dot_dimension_numbers<[1], [0], [0], [1], [0, 0, 1, 1], [], []>} : vector<8x32xbf16>, vector<32x32xbf16>, vector<8x32xf32> -> vector<8x32xf32>
    %c0_12 = arith.constant 0 : index
    %c0_13 = arith.constant 0 : index
    %13 = vector.load %arg7[%c0_12, %c0_13] : memref<1x32xf32, #tpu.memory_space<vmem>>, vector<1x32xf32>
    %14 = vector.broadcast %13 : vector<1x32xf32> to vector<8x32xf32>
    %15 = arith.addf %12, %14 : vector<8x32xf32>
    %c0_14 = arith.constant 0 : index
    %c0_15 = arith.constant 0 : index
    %16 = vector.load %arg5[%c0_14, %c0_15] : memref<32x32xbf16, #tpu.memory_space<vmem>>, vector<32x32xbf16>
    %cst_16 = arith.constant dense<0.000000e+00> : vector<8x32xf32>
    %17 = tpu.matmul %2, %16, %cst_16 {dimension_numbers = #tpu.dot_dimension_numbers<[1], [0], [0], [1], [0, 0, 1, 1], [], []>} : vector<8x32xbf16>, vector<32x32xbf16>, vector<8x32xf32> -> vector<8x32xf32>
    %c0_17 = arith.constant 0 : index
    %c0_18 = arith.constant 0 : index
    %18 = vector.load %arg8[%c0_17, %c0_18] : memref<1x32xf32, #tpu.memory_space<vmem>>, vector<1x32xf32>
    %19 = vector.broadcast %18 : vector<1x32xf32> to vector<8x32xf32>
    %20 = arith.addf %17, %19 : vector<8x32xf32>
    %21 = arith.truncf %10 : vector<8x32xf32> to vector<8x32xbf16>
    %22 = vector.shape_cast %21 : vector<8x32xbf16> to vector<8x2x16xbf16>
    %23 = arith.truncf %15 : vector<8x32xf32> to vector<8x32xbf16>
    %24 = vector.shape_cast %23 : vector<8x32xbf16> to vector<8x2x16xbf16>
    %25 = arith.truncf %20 : vector<8x32xf32> to vector<8x32xbf16>
    %26 = vector.shape_cast %25 : vector<8x32xbf16> to vector<8x2x16xbf16>
    "tpu.trace_start"() <{level = 10 : i32, message = "qhd,khd->hqk"}> : () -> ()
    %cst_19 = arith.constant dense<0.000000e+00> : vector<2x8x8xf32>
    %27 = tpu.matmul %22, %24, %cst_19 {dimension_numbers = #tpu.dot_dimension_numbers<[2], [2], [0], [0], [0, 1, 0, 0, 1, 0], [1], [1]>} : vector<8x2x16xbf16>, vector<8x2x16xbf16>, vector<2x8x8xf32> -> vector<2x8x8xf32>
    "tpu.trace_stop"() : () -> ()
    %cst_20 = arith.constant dense<0xFF800000> : vector<2x8xf32>
    %28 = vector.multi_reduction <maximumf>, %27, %cst_20 [2] : vector<2x8x8xf32> to vector<2x8xf32>
    %29 = vector.shape_cast %28 : vector<2x8xf32> to vector<2x8x1xf32>
    %30 = vector.broadcast %29 : vector<2x8x1xf32> to vector<2x8x8xf32>
    %31 = arith.subf %27, %30 : vector<2x8x8xf32>
    %32 = math.exp %31 : vector<2x8x8xf32>
    %cst_21 = arith.constant dense<0.000000e+00> : vector<2x8xf32>
    %33 = vector.multi_reduction <add>, %32, %cst_21 [2] : vector<2x8x8xf32> to vector<2x8xf32>
    %34 = vector.shape_cast %33 : vector<2x8xf32> to vector<2x8x1xf32>
    %35 = tpu.reciprocal %34 {approx = true} : vector<2x8x1xf32> -> vector<2x8x1xf32>
    %36 = vector.broadcast %35 : vector<2x8x1xf32> to vector<2x8x8xf32>
    %37 = arith.mulf %32, %36 : vector<2x8x8xf32>
    %38 = arith.truncf %37 : vector<2x8x8xf32> to vector<2x8x8xbf16>
    "tpu.trace_start"() <{level = 10 : i32, message = "hqk,khd->qhd"}> : () -> ()
    %cst_22 = arith.constant dense<0.000000e+00> : vector<2x16x8xf32>
    %39 = tpu.matmul %26, %38, %cst_22 {dimension_numbers = #tpu.dot_dimension_numbers<[0], [2], [2], [1], [0, 1, 0, 2, 1, 1], [1], [0]>} : vector<8x2x16xbf16>, vector<2x8x8xbf16>, vector<2x16x8xf32> -> vector<2x16x8xf32>
    %40 = tpu.transpose %39, [2, 0, 1] : vector<2x16x8xf32> -> vector<8x2x16xf32>
    "tpu.trace_stop"() : () -> ()
    %41 = arith.truncf %40 : vector<8x2x16xf32> to vector<8x2x16xbf16>
    %42 = vector.shape_cast %41 : vector<8x2x16xbf16> to vector<8x32xbf16>
    %c0_23 = arith.constant 0 : index
    %c0_24 = arith.constant 0 : index
    %43 = vector.load %arg9[%c0_23, %c0_24] : memref<32x32xbf16, #tpu.memory_space<vmem>>, vector<32x32xbf16>
    %cst_25 = arith.constant dense<0.000000e+00> : vector<8x32xf32>
    %44 = tpu.matmul %42, %43, %cst_25 {dimension_numbers = #tpu.dot_dimension_numbers<[1], [0], [0], [1], [0, 0, 1, 1], [], []>} : vector<8x32xbf16>, vector<32x32xbf16>, vector<8x32xf32> -> vector<8x32xf32>
    %c0_26 = arith.constant 0 : index
    %c0_27 = arith.constant 0 : index
    %45 = vector.load %arg10[%c0_26, %c0_27] : memref<1x32xf32, #tpu.memory_space<vmem>>, vector<1x32xf32>
    %46 = vector.broadcast %45 : vector<1x32xf32> to vector<8x32xf32>
    %47 = arith.addf %44, %46 : vector<8x32xf32>
    %c0_28 = arith.constant 0 : index
    %c0_29 = arith.constant 0 : index
    %48 = vector.load %arg11[%c0_28, %c0_29] : memref<1x32xf32, #tpu.memory_space<vmem>>, vector<1x32xf32>
    %c0_30 = arith.constant 0 : index
    %c0_31 = arith.constant 0 : index
    %49 = vector.load %arg12[%c0_30, %c0_31] : memref<1x32xf32, #tpu.memory_space<vmem>>, vector<1x32xf32>
    %cst_32 = arith.constant dense<0.000000e+00> : vector<8xf32>
    %50 = vector.multi_reduction <add>, %47, %cst_32 [1] : vector<8x32xf32> to vector<8xf32>
    %51 = vector.shape_cast %50 : vector<8xf32> to vector<8x1xf32>
    %cst_33 = arith.constant 3.200000e+01 : f32
    %52 = vector.broadcast %cst_33 : f32 to vector<8x1xf32>
    %53 = arith.divf %51, %52 : vector<8x1xf32>
    %54 = vector.broadcast %53 : vector<8x1xf32> to vector<8x32xf32>
    %55 = arith.subf %47, %54 : vector<8x32xf32>
    %56 = arith.mulf %55, %55 : vector<8x32xf32>
    %cst_34 = arith.constant dense<0.000000e+00> : vector<8xf32>
    %57 = vector.multi_reduction <add>, %56, %cst_34 [1] : vector<8x32xf32> to vector<8xf32>
    %58 = vector.shape_cast %57 : vector<8xf32> to vector<8x1xf32>
    %cst_35 = arith.constant 3.200000e+01 : f32
    %59 = vector.broadcast %cst_35 : f32 to vector<8x1xf32>
    %60 = arith.divf %58, %59 : vector<8x1xf32>
    %61 = vector.broadcast %53 : vector<8x1xf32> to vector<8x32xf32>
    %62 = arith.subf %47, %61 : vector<8x32xf32>
    %cst_36 = arith.constant 9.99999974E-6 : f32
    %63 = vector.broadcast %cst_36 : f32 to vector<8x1xf32>
    %64 = arith.addf %60, %63 : vector<8x1xf32>
    %65 = math.rsqrt %64 : vector<8x1xf32>
    %66 = vector.broadcast %65 : vector<8x1xf32> to vector<8x32xf32>
    %67 = arith.mulf %62, %66 : vector<8x32xf32>
    %68 = vector.broadcast %48 : vector<1x32xf32> to vector<8x32xf32>
    %69 = arith.mulf %67, %68 : vector<8x32xf32>
    %70 = vector.broadcast %49 : vector<1x32xf32> to vector<8x32xf32>
    %71 = arith.addf %69, %70 : vector<8x32xf32>
    %72 = arith.addf %1, %71 : vector<8x32xf32>
    %73 = arith.truncf %72 : vector<8x32xf32> to vector<8x32xbf16>
    %c0_37 = arith.constant 0 : index
    %c0_38 = arith.constant 0 : index
    %74 = vector.load %arg13[%c0_37, %c0_38] : memref<32x32xbf16, #tpu.memory_space<vmem>>, vector<32x32xbf16>
    %cst_39 = arith.constant dense<0.000000e+00> : vector<8x32xf32>
    %75 = tpu.matmul %73, %74, %cst_39 {dimension_numbers = #tpu.dot_dimension_numbers<[1], [0], [0], [1], [0, 0, 1, 1], [], []>} : vector<8x32xbf16>, vector<32x32xbf16>, vector<8x32xf32> -> vector<8x32xf32>
    %c0_40 = arith.constant 0 : index
    %c0_41 = arith.constant 0 : index
    %76 = vector.load %arg14[%c0_40, %c0_41] : memref<32x32xbf16, #tpu.memory_space<vmem>>, vector<32x32xbf16>
    %cst_42 = arith.constant dense<0.000000e+00> : vector<16x32xf32>
    %77 = tpu.matmul %5, %76, %cst_42 {dimension_numbers = #tpu.dot_dimension_numbers<[1], [0], [0], [1], [0, 0, 1, 1], [], []>} : vector<16x32xbf16>, vector<32x32xbf16>, vector<16x32xf32> -> vector<16x32xf32>
    %c0_43 = arith.constant 0 : index
    %c0_44 = arith.constant 0 : index
    %78 = vector.load %arg15[%c0_43, %c0_44] : memref<32x32xbf16, #tpu.memory_space<vmem>>, vector<32x32xbf16>
    %cst_45 = arith.constant dense<0.000000e+00> : vector<16x32xf32>
    %79 = tpu.matmul %5, %78, %cst_45 {dimension_numbers = #tpu.dot_dimension_numbers<[1], [0], [0], [1], [0, 0, 1, 1], [], []>} : vector<16x32xbf16>, vector<32x32xbf16>, vector<16x32xf32> -> vector<16x32xf32>
    %80 = arith.truncf %75 : vector<8x32xf32> to vector<8x32xbf16>
    %81 = vector.shape_cast %80 : vector<8x32xbf16> to vector<8x2x16xbf16>
    %82 = arith.truncf %77 : vector<16x32xf32> to vector<16x32xbf16>
    %83 = vector.shape_cast %82 : vector<16x32xbf16> to vector<16x2x16xbf16>
    %84 = arith.truncf %79 : vector<16x32xf32> to vector<16x32xbf16>
    %85 = vector.shape_cast %84 : vector<16x32xbf16> to vector<16x2x16xbf16>
    "tpu.trace_start"() <{level = 10 : i32, message = "qhd,khd->hqk"}> : () -> ()
    %cst_46 = arith.constant dense<0.000000e+00> : vector<2x8x16xf32>
    %86 = tpu.matmul %81, %83, %cst_46 {dimension_numbers = #tpu.dot_dimension_numbers<[2], [2], [0], [0], [0, 1, 0, 0, 1, 0], [1], [1]>} : vector<8x2x16xbf16>, vector<16x2x16xbf16>, vector<2x8x16xf32> -> vector<2x8x16xf32>
    "tpu.trace_stop"() : () -> ()
    %cst_47 = arith.constant dense<0xFF800000> : vector<2x8xf32>
    %87 = vector.multi_reduction <maximumf>, %86, %cst_47 [2] : vector<2x8x16xf32> to vector<2x8xf32>
    %88 = vector.shape_cast %87 : vector<2x8xf32> to vector<2x8x1xf32>
    %89 = vector.broadcast %88 : vector<2x8x1xf32> to vector<2x8x16xf32>
    %90 = arith.subf %86, %89 : vector<2x8x16xf32>
    %91 = math.exp %90 : vector<2x8x16xf32>
    %cst_48 = arith.constant dense<0.000000e+00> : vector<2x8xf32>
    %92 = vector.multi_reduction <add>, %91, %cst_48 [2] : vector<2x8x16xf32> to vector<2x8xf32>
    %93 = vector.shape_cast %92 : vector<2x8xf32> to vector<2x8x1xf32>
    %94 = tpu.reciprocal %93 {approx = true} : vector<2x8x1xf32> -> vector<2x8x1xf32>
    %95 = vector.broadcast %94 : vector<2x8x1xf32> to vector<2x8x16xf32>
    %96 = arith.mulf %91, %95 : vector<2x8x16xf32>
    %97 = arith.truncf %96 : vector<2x8x16xf32> to vector<2x8x16xbf16>
    "tpu.trace_start"() <{level = 10 : i32, message = "hqk,khd->qhd"}> : () -> ()
    %cst_49 = arith.constant dense<0.000000e+00> : vector<2x16x8xf32>
    %98 = tpu.matmul %85, %97, %cst_49 {dimension_numbers = #tpu.dot_dimension_numbers<[0], [2], [2], [1], [0, 1, 0, 2, 1, 1], [1], [0]>} : vector<16x2x16xbf16>, vector<2x8x16xbf16>, vector<2x16x8xf32> -> vector<2x16x8xf32>
    %99 = tpu.transpose %98, [2, 0, 1] : vector<2x16x8xf32> -> vector<8x2x16xf32>
    "tpu.trace_stop"() : () -> ()
    %100 = arith.truncf %99 : vector<8x2x16xf32> to vector<8x2x16xbf16>
    %101 = vector.shape_cast %100 : vector<8x2x16xbf16> to vector<8x32xbf16>
    %c0_50 = arith.constant 0 : index
    %c0_51 = arith.constant 0 : index
    %102 = vector.load %arg16[%c0_50, %c0_51] : memref<32x32xbf16, #tpu.memory_space<vmem>>, vector<32x32xbf16>
    %cst_52 = arith.constant dense<0.000000e+00> : vector<8x32xf32>
    %103 = tpu.matmul %101, %102, %cst_52 {dimension_numbers = #tpu.dot_dimension_numbers<[1], [0], [0], [1], [0, 0, 1, 1], [], []>} : vector<8x32xbf16>, vector<32x32xbf16>, vector<8x32xf32> -> vector<8x32xf32>
    %c0_53 = arith.constant 0 : index
    %c0_54 = arith.constant 0 : index
    %104 = vector.load %arg17[%c0_53, %c0_54] : memref<1x32xf32, #tpu.memory_space<vmem>>, vector<1x32xf32>
    %105 = vector.broadcast %104 : vector<1x32xf32> to vector<8x32xf32>
    %106 = arith.addf %103, %105 : vector<8x32xf32>
    %c0_55 = arith.constant 0 : index
    %c0_56 = arith.constant 0 : index
    %107 = vector.load %arg18[%c0_55, %c0_56] : memref<1x32xf32, #tpu.memory_space<vmem>>, vector<1x32xf32>
    %c0_57 = arith.constant 0 : index
    %c0_58 = arith.constant 0 : index
    %108 = vector.load %arg19[%c0_57, %c0_58] : memref<1x32xf32, #tpu.memory_space<vmem>>, vector<1x32xf32>
    %cst_59 = arith.constant dense<0.000000e+00> : vector<8xf32>
    %109 = vector.multi_reduction <add>, %106, %cst_59 [1] : vector<8x32xf32> to vector<8xf32>
    %110 = vector.shape_cast %109 : vector<8xf32> to vector<8x1xf32>
    %cst_60 = arith.constant 3.200000e+01 : f32
    %111 = vector.broadcast %cst_60 : f32 to vector<8x1xf32>
    %112 = arith.divf %110, %111 : vector<8x1xf32>
    %113 = vector.broadcast %112 : vector<8x1xf32> to vector<8x32xf32>
    %114 = arith.subf %106, %113 : vector<8x32xf32>
    %115 = arith.mulf %114, %114 : vector<8x32xf32>
    %cst_61 = arith.constant dense<0.000000e+00> : vector<8xf32>
    %116 = vector.multi_reduction <add>, %115, %cst_61 [1] : vector<8x32xf32> to vector<8xf32>
    %117 = vector.shape_cast %116 : vector<8xf32> to vector<8x1xf32>
    %cst_62 = arith.constant 3.200000e+01 : f32
    %118 = vector.broadcast %cst_62 : f32 to vector<8x1xf32>
    %119 = arith.divf %117, %118 : vector<8x1xf32>
    %120 = vector.broadcast %112 : vector<8x1xf32> to vector<8x32xf32>
    %121 = arith.subf %106, %120 : vector<8x32xf32>
    %cst_63 = arith.constant 9.99999974E-6 : f32
    %122 = vector.broadcast %cst_63 : f32 to vector<8x1xf32>
    %123 = arith.addf %119, %122 : vector<8x1xf32>
    %124 = math.rsqrt %123 : vector<8x1xf32>
    %125 = vector.broadcast %124 : vector<8x1xf32> to vector<8x32xf32>
    %126 = arith.mulf %121, %125 : vector<8x32xf32>
    %127 = vector.broadcast %107 : vector<1x32xf32> to vector<8x32xf32>
    %128 = arith.mulf %126, %127 : vector<8x32xf32>
    %129 = vector.broadcast %108 : vector<1x32xf32> to vector<8x32xf32>
    %130 = arith.addf %128, %129 : vector<8x32xf32>
    %131 = arith.addf %72, %130 : vector<8x32xf32>
    %cst_64 = arith.constant dense<0.000000e+00> : vector<8x16xf32>
    %132 = vector.multi_reduction <add>, %86, %cst_64 [0] : vector<2x8x16xf32> to vector<8x16xf32>
    %cst_65 = arith.constant 5.000000e-01 : f32
    %133 = vector.broadcast %cst_65 : f32 to vector<8x16xf32>
    %134 = arith.mulf %132, %133 : vector<8x16xf32>
    %cst_66 = arith.constant 0.000000e+00 : f32
    %135 = vector.broadcast %cst_66 : f32 to vector<8x112xf32>
    %136 = tpu.concatenate %134, %135 in 1 : vector<8x16xf32>, vector<8x112xf32> -> vector<8x128xf32>
    %c0_67 = arith.constant 0 : index
    %c0_68 = arith.constant 0 : index
    %c0_69 = arith.constant 0 : index
    %137 = vector.load %arg27[%c0_67, %c0_68, %c0_69] : memref<1x8x128xf32, #tpu.memory_space<vmem>>, vector<1x8x128xf32>
    %138 = vector.shape_cast %137 : vector<1x8x128xf32> to vector<8x128xf32>
    %139 = vector.shape_cast %136 : vector<8x128xf32> to vector<1x8x128xf32>
    tpu.vector_store %arg27[%c0_67, %c0_68, %c0_69], %139 {strides = array<i32>} : memref<1x8x128xf32, #tpu.memory_space<vmem>>, vector<1x8x128xf32>,
    %140 = arith.truncf %131 : vector<8x32xf32> to vector<8x32xbf16>
    %c0_70 = arith.constant 0 : index
    %c0_71 = arith.constant 0 : index
    %141 = vector.load %arg20[%c0_70, %c0_71] : memref<32x128xbf16, #tpu.memory_space<vmem>>, vector<32x128xbf16>
    %cst_72 = arith.constant dense<0.000000e+00> : vector<8x128xf32>
    %142 = tpu.matmul %140, %141, %cst_72 {dimension_numbers = #tpu.dot_dimension_numbers<[1], [0], [0], [1], [0, 0, 1, 1], [], []>} : vector<8x32xbf16>, vector<32x128xbf16>, vector<8x128xf32> -> vector<8x128xf32>
    %c0_73 = arith.constant 0 : index
    %c0_74 = arith.constant 0 : index
    %143 = vector.load %arg21[%c0_73, %c0_74] : memref<1x128xf32, #tpu.memory_space<vmem>>, vector<1x128xf32>
    %144 = vector.broadcast %143 : vector<1x128xf32> to vector<8x128xf32>
    %145 = arith.addf %142, %144 : vector<8x128xf32>
    %cst_75 = arith.constant 5.000000e-01 : f32
    %146 = vector.broadcast %cst_75 : f32 to vector<8x128xf32>
    %147 = arith.mulf %146, %145 : vector<8x128xf32>
    %cst_76 = arith.constant 0.707106769 : f32
    %148 = vector.broadcast %cst_76 : f32 to vector<8x128xf32>
    %149 = arith.mulf %145, %148 : vector<8x128xf32>
    %cst_77 = arith.constant 0.000000e+00 : f32
    %150 = vector.broadcast %cst_77 : f32 to vector<8x128xf32>
    %151 = arith.cmpf oge, %149, %150 : vector<8x128xf32>
    %cst_78 = arith.constant 1.000000e+00 : f32
    %cst_79 = arith.constant -1.000000e+00 : f32
    %152 = vector.broadcast %cst_78 : f32 to vector<8x128xf32>
    %153 = vector.broadcast %cst_79 : f32 to vector<8x128xf32>
    %154 = arith.select %151, %152, %153 : vector<8x128xi1>, vector<8x128xf32>
    %155 = math.absf %149 : vector<8x128xf32>
    %cst_80 = arith.constant 0.327591091 : f32
    %156 = vector.broadcast %cst_80 : f32 to vector<8x128xf32>
    %157 = arith.mulf %156, %155 : vector<8x128xf32>
    %cst_81 = arith.constant 1.000000e+00 : f32
    %158 = vector.broadcast %cst_81 : f32 to vector<8x128xf32>
    %159 = arith.addf %158, %157 : vector<8x128xf32>
    %160 = tpu.reciprocal %159 {approx = true} : vector<8x128xf32> -> vector<8x128xf32>
    %cst_82 = arith.constant 1.06140542 : f32
    %161 = vector.broadcast %cst_82 : f32 to vector<8x128xf32>
    %162 = arith.mulf %161, %160 : vector<8x128xf32>
    %cst_83 = arith.constant -1.45315206 : f32
    %163 = vector.broadcast %cst_83 : f32 to vector<8x128xf32>
    %164 = arith.addf %162, %163 : vector<8x128xf32>
    %165 = arith.mulf %164, %160 : vector<8x128xf32>
    %cst_84 = arith.constant 1.42141378 : f32
    %166 = vector.broadcast %cst_84 : f32 to vector<8x128xf32>
    %167 = arith.addf %165, %166 : vector<8x128xf32>
    %168 = arith.mulf %167, %160 : vector<8x128xf32>
    %cst_85 = arith.constant -0.284496725 : f32
    %169 = vector.broadcast %cst_85 : f32 to vector<8x128xf32>
    %170 = arith.addf %168, %169 : vector<8x128xf32>
    %171 = arith.mulf %170, %160 : vector<8x128xf32>
    %cst_86 = arith.constant 0.254829586 : f32
    %172 = vector.broadcast %cst_86 : f32 to vector<8x128xf32>
    %173 = arith.addf %171, %172 : vector<8x128xf32>
    %174 = arith.mulf %173, %160 : vector<8x128xf32>
    %cst_87 = arith.constant 0.000000e+00 : f32
    %175 = vector.broadcast %cst_87 : f32 to vector<8x128xf32>
    %176 = arith.subf %175, %155 : vector<8x128xf32>
    %177 = arith.mulf %176, %155 : vector<8x128xf32>
    %178 = math.exp %177 : vector<8x128xf32>
    %179 = arith.mulf %174, %178 : vector<8x128xf32>
    %cst_88 = arith.constant 1.000000e+00 : f32
    %180 = vector.broadcast %cst_88 : f32 to vector<8x128xf32>
    %181 = arith.subf %180, %179 : vector<8x128xf32>
    %182 = arith.mulf %154, %181 : vector<8x128xf32>
    %cst_89 = arith.constant 1.000000e+00 : f32
    %183 = vector.broadcast %cst_89 : f32 to vector<8x128xf32>
    %184 = arith.addf %183, %182 : vector<8x128xf32>
    %185 = arith.mulf %147, %184 : vector<8x128xf32>
    %186 = arith.truncf %185 : vector<8x128xf32> to vector<8x128xbf16>
    %c0_90 = arith.constant 0 : index
    %c0_91 = arith.constant 0 : index
    %187 = vector.load %arg22[%c0_90, %c0_91] : memref<128x32xbf16, #tpu.memory_space<vmem>>, vector<128x32xbf16>
    %cst_92 = arith.constant dense<0.000000e+00> : vector<8x32xf32>
    %188 = tpu.matmul %186, %187, %cst_92 {dimension_numbers = #tpu.dot_dimension_numbers<[1], [0], [0], [1], [0, 0, 1, 1], [], []>} : vector<8x128xbf16>, vector<128x32xbf16>, vector<8x32xf32> -> vector<8x32xf32>
    %c0_93 = arith.constant 0 : index
    %c0_94 = arith.constant 0 : index
    %189 = vector.load %arg23[%c0_93, %c0_94] : memref<1x32xf32, #tpu.memory_space<vmem>>, vector<1x32xf32>
    %190 = vector.broadcast %189 : vector<1x32xf32> to vector<8x32xf32>
    %191 = arith.addf %188, %190 : vector<8x32xf32>
    %192 = arith.addf %131, %191 : vector<8x32xf32>
    %c0_95 = arith.constant 0 : index
    %c0_96 = arith.constant 0 : index
    %193 = vector.load %arg24[%c0_95, %c0_96] : memref<1x32xf32, #tpu.memory_space<vmem>>, vector<1x32xf32>
    %c0_97 = arith.constant 0 : index
    %c0_98 = arith.constant 0 : index
    %194 = vector.load %arg25[%c0_97, %c0_98] : memref<1x32xf32, #tpu.memory_space<vmem>>, vector<1x32xf32>
    %cst_99 = arith.constant dense<0.000000e+00> : vector<8xf32>
    %195 = vector.multi_reduction <add>, %192, %cst_99 [1] : vector<8x32xf32> to vector<8xf32>
    %196 = vector.shape_cast %195 : vector<8xf32> to vector<8x1xf32>
    %cst_100 = arith.constant 3.200000e+01 : f32
    %197 = vector.broadcast %cst_100 : f32 to vector<8x1xf32>
    %198 = arith.divf %196, %197 : vector<8x1xf32>
    %199 = vector.broadcast %198 : vector<8x1xf32> to vector<8x32xf32>
    %200 = arith.subf %192, %199 : vector<8x32xf32>
    %201 = arith.mulf %200, %200 : vector<8x32xf32>
    %cst_101 = arith.constant dense<0.000000e+00> : vector<8xf32>
    %202 = vector.multi_reduction <add>, %201, %cst_101 [1] : vector<8x32xf32> to vector<8xf32>
    %203 = vector.shape_cast %202 : vector<8xf32> to vector<8x1xf32>
    %cst_102 = arith.constant 3.200000e+01 : f32
    %204 = vector.broadcast %cst_102 : f32 to vector<8x1xf32>
    %205 = arith.divf %203, %204 : vector<8x1xf32>
    %206 = vector.broadcast %198 : vector<8x1xf32> to vector<8x32xf32>
    %207 = arith.subf %192, %206 : vector<8x32xf32>
    %cst_103 = arith.constant 9.99999974E-6 : f32
    %208 = vector.broadcast %cst_103 : f32 to vector<8x1xf32>
    %209 = arith.addf %205, %208 : vector<8x1xf32>
    %210 = math.rsqrt %209 : vector<8x1xf32>
    %211 = vector.broadcast %210 : vector<8x1xf32> to vector<8x32xf32>
    %212 = arith.mulf %207, %211 : vector<8x32xf32>
    %213 = vector.broadcast %193 : vector<1x32xf32> to vector<8x32xf32>
    %214 = arith.mulf %212, %213 : vector<8x32xf32>
    %215 = vector.broadcast %194 : vector<1x32xf32> to vector<8x32xf32>
    %216 = arith.addf %214, %215 : vector<8x32xf32>
    %cst_104 = arith.constant 0.000000e+00 : f32
    %217 = vector.broadcast %cst_104 : f32 to vector<8x96xf32>
    %218 = tpu.concatenate %216, %217 in 1 : vector<8x32xf32>, vector<8x96xf32> -> vector<8x128xf32>
    %c0_105 = arith.constant 0 : index
    %c0_106 = arith.constant 0 : index
    %c0_107 = arith.constant 0 : index
    %219 = vector.load %arg26[%c0_105, %c0_106, %c0_107] : memref<1x8x128xf32, #tpu.memory_space<vmem>>, vector<1x8x128xf32>
    %220 = vector.shape_cast %219 : vector<1x8x128xf32> to vector<8x128xf32>
    %221 = vector.shape_cast %218 : vector<8x128xf32> to vector<1x8x128xf32>
    tpu.vector_store %arg26[%c0_105, %c0_106, %c0_107], %221 {strides = array<i32>} : memref<1x8x128xf32, #tpu.memory_space<vmem>>, vector<1x8x128xf32>,
    return
  }
  func.func @transform_0(%arg0: i32) -> (i32, i32, i32) {
    %c0_i32 = arith.constant 0 : i32
    %c0_i32_0 = arith.constant 0 : i32
    %c0_i32_1 = arith.constant 0 : i32
    return %arg0, %c0_i32, %c0_i32_0 : i32, i32, i32
  }
  func.func @transform_1(%arg0: i32) -> (i32, i32, i32) {
    %c0_i32 = arith.constant 0 : i32
    %c0_i32_0 = arith.constant 0 : i32
    %c0_i32_1 = arith.constant 0 : i32
    return %arg0, %c0_i32, %c0_i32_0 : i32, i32, i32
  }
  func.func @transform_2(%arg0: i32) -> (i32, i32) {
    %c0_i32 = arith.constant 0 : i32
    %c0_i32_0 = arith.constant 0 : i32
    %c0_i32_1 = arith.constant 0 : i32
    return %c0_i32, %c0_i32_0 : i32, i32
  }
  func.func @transform_3(%arg0: i32) -> (i32, i32) {
    %c0_i32 = arith.constant 0 : i32
    %c0_i32_0 = arith.constant 0 : i32
    %c0_i32_1 = arith.constant 0 : i32
    return %c0_i32, %c0_i32_0 : i32, i32
  }
  func.func @transform_4(%arg0: i32) -> (i32, i32) {
    %c0_i32 = arith.constant 0 : i32
    %c0_i32_0 = arith.constant 0 : i32
    %c0_i32_1 = arith.constant 0 : i32
    return %c0_i32, %c0_i32_0 : i32, i32
  }
  func.func @transform_5(%arg0: i32) -> (i32, i32) {
    %c0_i32 = arith.constant 0 : i32
    %c0_i32_0 = arith.constant 0 : i32
    %c0_i32_1 = arith.constant 0 : i32
    return %c0_i32, %c0_i32_0 : i32, i32
  }
  func.func @transform_6(%arg0: i32) -> (i32, i32) {
    %c0_i32 = arith.constant 0 : i32
    %c0_i32_0 = arith.constant 0 : i32
    %c0_i32_1 = arith.constant 0 : i32
    return %c0_i32, %c0_i32_0 : i32, i32
  }
  func.func @transform_7(%arg0: i32) -> (i32, i32) {
    %c0_i32 = arith.constant 0 : i32
    %c0_i32_0 = arith.constant 0 : i32
    %c0_i32_1 = arith.constant 0 : i32
    return %c0_i32, %c0_i32_0 : i32, i32
  }
  func.func @transform_8(%arg0: i32) -> (i32, i32) {
    %c0_i32 = arith.constant 0 : i32
    %c0_i32_0 = arith.constant 0 : i32
    %c0_i32_1 = arith.constant 0 : i32
    return %c0_i32, %c0_i32_0 : i32, i32
  }
  func.func @transform_9(%arg0: i32) -> (i32, i32) {
    %c0_i32 = arith.constant 0 : i32
    %c0_i32_0 = arith.constant 0 : i32
    %c0_i32_1 = arith.constant 0 : i32
    return %c0_i32, %c0_i32_0 : i32, i32
  }
  func.func @transform_10(%arg0: i32) -> (i32, i32) {
    %c0_i32 = arith.constant 0 : i32
    %c0_i32_0 = arith.constant 0 : i32
    %c0_i32_1 = arith.constant 0 : i32
    return %c0_i32, %c0_i32_0 : i32, i32
  }
  func.func @transform_11(%arg0: i32) -> (i32, i32) {
    %c0_i32 = arith.constant 0 : i32
    %c0_i32_0 = arith.constant 0 : i32
    %c0_i32_1 = arith.constant 0 : i32
    return %c0_i32, %c0_i32_0 : i32, i32
  }
  func.func @transform_12(%arg0: i32) -> (i32, i32) {
    %c0_i32 = arith.constant 0 : i32
    %c0_i32_0 = arith.constant 0 : i32
    %c0_i32_1 = arith.constant 0 : i32
    return %c0_i32, %c0_i32_0 : i32, i32
  }
  func.func @transform_13(%arg0: i32) -> (i32, i32) {
    %c0_i32 = arith.constant 0 : i32
    %c0_i32_0 = arith.constant 0 : i32
    %c0_i32_1 = arith.constant 0 : i32
    return %c0_i32, %c0_i32_0 : i32, i32
  }
  func.func @transform_14(%arg0: i32) -> (i32, i32) {
    %c0_i32 = arith.constant 0 : i32
    %c0_i32_0 = arith.constant 0 : i32
    %c0_i32_1 = arith.constant 0 : i32
    return %c0_i32, %c0_i32_0 : i32, i32
  }
  func.func @transform_15(%arg0: i32) -> (i32, i32) {
    %c0_i32 = arith.constant 0 : i32
    %c0_i32_0 = arith.constant 0 : i32
    %c0_i32_1 = arith.constant 0 : i32
    return %c0_i32, %c0_i32_0 : i32, i32
  }
  func.func @transform_16(%arg0: i32) -> (i32, i32) {
    %c0_i32 = arith.constant 0 : i32
    %c0_i32_0 = arith.constant 0 : i32
    %c0_i32_1 = arith.constant 0 : i32
    return %c0_i32, %c0_i32_0 : i32, i32
  }
  func.func @transform_17(%arg0: i32) -> (i32, i32) {
    %c0_i32 = arith.constant 0 : i32
    %c0_i32_0 = arith.constant 0 : i32
    %c0_i32_1 = arith.constant 0 : i32
    return %c0_i32, %c0_i32_0 : i32, i32
  }
  func.func @transform_18(%arg0: i32) -> (i32, i32) {
    %c0_i32 = arith.constant 0 : i32
    %c0_i32_0 = arith.constant 0 : i32
    %c0_i32_1 = arith.constant 0 : i32
    return %c0_i32, %c0_i32_0 : i32, i32
  }
  func.func @transform_19(%arg0: i32) -> (i32, i32) {
    %c0_i32 = arith.constant 0 : i32
    %c0_i32_0 = arith.constant 0 : i32
    %c0_i32_1 = arith.constant 0 : i32
    return %c0_i32, %c0_i32_0 : i32, i32
  }
  func.func @transform_20(%arg0: i32) -> (i32, i32) {
    %c0_i32 = arith.constant 0 : i32
    %c0_i32_0 = arith.constant 0 : i32
    %c0_i32_1 = arith.constant 0 : i32
    return %c0_i32, %c0_i32_0 : i32, i32
  }
  func.func @transform_21(%arg0: i32) -> (i32, i32) {
    %c0_i32 = arith.constant 0 : i32
    %c0_i32_0 = arith.constant 0 : i32
    %c0_i32_1 = arith.constant 0 : i32
    return %c0_i32, %c0_i32_0 : i32, i32
  }
  func.func @transform_22(%arg0: i32) -> (i32, i32) {
    %c0_i32 = arith.constant 0 : i32
    %c0_i32_0 = arith.constant 0 : i32
    %c0_i32_1 = arith.constant 0 : i32
    return %c0_i32, %c0_i32_0 : i32, i32
  }
  func.func @transform_23(%arg0: i32) -> (i32, i32) {
    %c0_i32 = arith.constant 0 : i32
    %c0_i32_0 = arith.constant 0 : i32
    %c0_i32_1 = arith.constant 0 : i32
    return %c0_i32, %c0_i32_0 : i32, i32
  }
  func.func @transform_24(%arg0: i32) -> (i32, i32) {
    %c0_i32 = arith.constant 0 : i32
    %c0_i32_0 = arith.constant 0 : i32
    %c0_i32_1 = arith.constant 0 : i32
    return %c0_i32, %c0_i32_0 : i32, i32
  }
  func.func @transform_25(%arg0: i32) -> (i32, i32, i32) {
    %c0_i32 = arith.constant 0 : i32
    %c0_i32_0 = arith.constant 0 : i32
    %c0_i32_1 = arith.constant 0 : i32
    return %arg0, %c0_i32, %c0_i32_0 : i32, i32, i32
  }
  func.func @transform_26(%arg0: i32) -> (i32, i32, i32) {
    %c0_i32 = arith.constant 0 : i32
    %c0_i32_0 = arith.constant 0 : i32
    %c0_i32_1 = arith.constant 0 : i32
    return %arg0, %c0_i32, %c0_i32_0 : i32, i32, i32
  }
}

</mosaic_0001>

<llo_original>
// kernel: tpu_custom_call.1
$region0: #{tpu_custom_call.1}
  #allocation0 [shape = 'u32[]', space=smem, size = 0x4, offset = 0x4, fixed_abs, tag = 'smem constant byte address 0x4 - core index']
  #allocation1 [shape = 'u32[144,128]{1,0:T(1,128)}', space=vmem, size = 0x12000, scoped, tag = 'internal scratch']
  %s0 = inlined_call_operand.vmem [shape: f32[2,8,32], index: 0, kind: input, shape index: {}]
  %s1 = inlined_call_operand.vmem [shape: f32[2,16,32], index: 1, kind: input, shape index: {}]
  %s2 = inlined_call_operand.vmem [shape: bf16[32,32], index: 2, kind: input, shape index: {}]
  %s3 = inlined_call_operand.vmem [shape: bf16[32,32], index: 3, kind: input, shape index: {}]
  %s4 = inlined_call_operand.hbm [shape: bf16[32,32], index: 4, kind: input, shape index: {}]
  %s5 = inlined_call_operand.hbm [shape: f32[1,32], index: 5, kind: input, shape index: {}]
  %s6 = inlined_call_operand.hbm [shape: f32[1,32], index: 6, kind: input, shape index: {}]
  %s7 = inlined_call_operand.hbm [shape: f32[1,32], index: 7, kind: input, shape index: {}]
  %s8 = inlined_call_operand.hbm [shape: bf16[32,32], index: 8, kind: input, shape index: {}]
  %s9 = inlined_call_operand.hbm [shape: f32[1,32], index: 9, kind: input, shape index: {}]
  %s10 = inlined_call_operand.hbm [shape: f32[1,32], index: 10, kind: input, shape index: {}]
  %s11 = inlined_call_operand.hbm [shape: f32[1,32], index: 11, kind: input, shape index: {}]
  %s12 = inlined_call_operand.vmem [shape: bf16[32,32], index: 12, kind: input, shape index: {}]
  %s13 = inlined_call_operand.vmem [shape: bf16[32,32], index: 13, kind: input, shape index: {}]
  %s14 = inlined_call_operand.hbm [shape: bf16[32,32], index: 14, kind: input, shape index: {}]
  %s15 = inlined_call_operand.hbm [shape: bf16[32,32], index: 15, kind: input, shape index: {}]
  %s16 = inlined_call_operand.hbm [shape: f32[1,32], index: 16, kind: input, shape index: {}]
  %s17 = inlined_call_operand.hbm [shape: f32[1,32], index: 17, kind: input, shape index: {}]
  %s18 = inlined_call_operand.vmem [shape: f32[1,32], index: 18, kind: input, shape index: {}]
  %s19 = inlined_call_operand.vmem [shape: bf16[32,128], index: 19, kind: input, shape index: {}]
  %s20 = inlined_call_operand.vmem [shape: f32[1,128], index: 20, kind: input, shape index: {}]
  %s21 = inlined_call_operand.vmem [shape: bf16[128,32], index: 21, kind: input, shape index: {}]
  %s22 = inlined_call_operand.vmem [shape: f32[1,32], index: 22, kind: input, shape index: {}]
  %s23 = inlined_call_operand.vmem [shape: f32[1,32], index: 23, kind: input, shape index: {}]
  %s24 = inlined_call_operand.vmem [shape: f32[1,32], index: 24, kind: input, shape index: {}]
  %s25 = inlined_call_operand.hbm [shape: f32[2,8,128], index: 25, kind: output, shape index: {0}]
  %s26 = inlined_call_operand.hbm [shape: f32[2,8,128], index: 26, kind: output, shape index: {1}]
  %27 = xla_tuple %s25, %s26
  %s28 = sld [smem:[#allocation0]]
  $region189: #{tpu_custom_call.1} parent=0
    _
  %s30 = ssub.s32 1, %s28
  %s31 = scalar_select 0, %s30, %s28
  $region1: #{tpu_custom_call.1} parent=0
    #allocation2 [shape = 'u8[8192]{0}', space=vmem, size = 0x2000, scoped, tag = 'input window, operand 4, single buffered']
    #allocation3 [shape = 's32[2]{0}', space=sflag, size = 0x8, scoped, tag = 'scoped memory for tpu_custom_call.1']
    #allocation4 [shape = 's32[2]{0}', space=sflag, size = 0x8, scoped, tag = 'scoped memory for tpu_custom_call.1']
    #allocation5 [shape = 'u8[512]{0}', space=vmem, size = 0x400, scoped, tag = 'input window, operand 5, single buffered']
    #allocation6 [shape = 's32[1]{0}', space=sflag, size = 0x4, scoped, tag = 'scoped memory for tpu_custom_call.1']
    #allocation7 [shape = 'u8[512]{0}', space=vmem, size = 0x400, scoped, tag = 'input window, operand 6, single buffered']
    #allocation8 [shape = 'u8[512]{0}', space=vmem, size = 0x400, scoped, tag = 'input window, operand 7, single buffered']
    #allocation9 [shape = 's32[1]{0}', space=sflag, size = 0x4, scoped, tag = 'scoped memory for tpu_custom_call.1']
    #allocation10 [shape = 'u8[8192]{0}', space=vmem, size = 0x2000, scoped, tag = 'input window, operand 8, single buffered']
    #allocation11 [shape = 'u8[512]{0}', space=vmem, size = 0x400, scoped, tag = 'input window, operand 9, single buffered']
    #allocation12 [shape = 's32[1]{0}', space=sflag, size = 0x4, scoped, tag = 'scoped memory for tpu_custom_call.1']
    #allocation13 [shape = 'u8[512]{0}', space=vmem, size = 0x400, scoped, tag = 'input window, operand 10, single buffered']
    #allocation14 [shape = 'u8[512]{0}', space=vmem, size = 0x400, scoped, tag = 'input window, operand 11, single buffered']
    #allocation15 [shape = 's32[1]{0}', space=sflag, size = 0x4, scoped, tag = 'scoped memory for tpu_custom_call.1']
    #allocation16 [shape = 'u8[8192]{0}', space=vmem, size = 0x2000, scoped, tag = 'input window, operand 14, single buffered']
    #allocation17 [shape = 'u8[8192]{0}', space=vmem, size = 0x2000, scoped, tag = 'input window, operand 15, single buffered']
    #allocation18 [shape = 's32[1]{0}', space=sflag, size = 0x4, scoped, tag = 'scoped memory for tpu_custom_call.1']
    #allocation19 [shape = 'u8[512]{0}', space=vmem, size = 0x400, scoped, tag = 'input window, operand 16, single buffered']
    #allocation20 [shape = 'u8[512]{0}', space=vmem, size = 0x400, scoped, tag = 'input window, operand 17, single buffered']
    #allocation21 [shape = 's32[1]{0}', space=sflag, size = 0x4, scoped, tag = 'scoped memory for tpu_custom_call.1']
    #allocation22 [shape = 'u8[8192]{0}', space=vmem, size = 0x2000, scoped, tag = 'output window, operand 0']
    #allocation23 [shape = 'u8[8192]{0}', space=vmem, size = 0x2000, scoped, tag = 'output window, operand 1']
    #allocation24 [shape = 's32[2]{0}', space=sflag, size = 0x8, scoped, tag = 'scoped memory for tpu_custom_call.1']
    %32 = vsyncpa [#allocation3], 0
    %33 = vsyncpa [#allocation6], 0
    %34 = vsyncpa [#allocation9], 0
    %35 = vsyncpa [#allocation12], 0
    %36 = vsyncpa [#allocation15], 0
    %37 = vsyncpa [#allocation18], 0
    %38 = vsyncpa [#allocation21], 0
    %39 = vsyncpa [#allocation4], 0
    %s40 = scalar_lea.sflag [#allocation4], 1
    %41 = vsyncpa %s40, 0
    %42 = vsyncpa [#allocation24], 0
    %s43 = scalar_lea.sflag [#allocation24], 1
    %44 = vsyncpa %s43, 0
    loop: start=0, step=1, limit=4
    $region2: #{tpu_custom_call.1} parent=1 // loop_pre_header
      _
    $region3: #{tpu_custom_call.1} parent=1 // loop_header
      %s46 = sphi 0, %s50
      %p47 = scmp.ge.s32.totalorder %s46, 4
      %s56 = sphi 0, %s58
      %s59 = sphi 0, %s56
      %s60 = sphi 0, %s59
      %s76 = sphi 0, %s60
      %s82 = sphi 0, %s84
      %s85 = sphi 0, %s82
      %s86 = sphi 0, %s85
      %s102 = sphi 0, %s86
      %s106 = sphi 0, %s106
      %s108 = sphi 0, %s106
      %s109 = sphi 0, %s108
      %s123 = sphi 0, %s109
      %s127 = sphi 0, %s127
      %s129 = sphi 0, %s127
      %s130 = sphi 0, %s129
      %s144 = sphi 0, %s130
      %s148 = sphi 0, %s148
      %s150 = sphi 0, %s148
      %s151 = sphi 0, %s150
      %s165 = sphi 0, %s151
      %s169 = sphi 0, %s169
      %s171 = sphi 0, %s169
      %s172 = sphi 0, %s171
      %s186 = sphi 0, %s172
      %s190 = sphi 0, %s190
      %s192 = sphi 0, %s190
      %s193 = sphi 0, %s192
      %s207 = sphi 0, %s193
      %s211 = sphi 0, %s211
      %s213 = sphi 0, %s211
      %s214 = sphi 0, %s213
      %s228 = sphi 0, %s214
      %s232 = sphi 0, %s232
      %s234 = sphi 0, %s232
      %s235 = sphi 0, %s234
      %s249 = sphi 0, %s235
      %s253 = sphi 0, %s253
      %s255 = sphi 0, %s253
      %s256 = sphi 0, %s255
      %s270 = sphi 0, %s256
      %s274 = sphi 0, %s274
      %s276 = sphi 0, %s274
      %s277 = sphi 0, %s276
      %s291 = sphi 0, %s277
      %s295 = sphi 0, %s295
      %s297 = sphi 0, %s295
      %s298 = sphi 0, %s297
      %s312 = sphi 0, %s298
      %s316 = sphi 0, %s316
      %s318 = sphi 0, %s316
      %s319 = sphi 0, %s318
      %s333 = sphi 0, %s319
      %s337 = sphi 0, %s337
      %s339 = sphi 0, %s337
      %s340 = sphi 0, %s339
      %s354 = sphi 0, %s340
      %s358 = sphi 0, %s358
      %s360 = sphi 0, %s358
      %s361 = sphi 0, %s360
      %s375 = sphi 0, %s361
      %s379 = sphi 0, %s379
      %s381 = sphi 0, %s379
      %s382 = sphi 0, %s381
      %s396 = sphi 0, %s382
      %s400 = sphi 0, %s400
      %s402 = sphi 0, %s400
      %s403 = sphi 0, %s402
      %s417 = sphi 0, %s403
      %s421 = sphi 0, %s421
      %s423 = sphi 0, %s421
      %s424 = sphi 0, %s423
      %s438 = sphi 0, %s424
      %s442 = sphi 0, %s442
      %s444 = sphi 0, %s442
      %s445 = sphi 0, %s444
      %s459 = sphi 0, %s445
      %s463 = sphi 0, %s463
      %s465 = sphi 0, %s463
      %s466 = sphi 0, %s465
      %s480 = sphi 0, %s466
      %s484 = sphi 0, %s484
      %s486 = sphi 0, %s484
      %s487 = sphi 0, %s486
      %s501 = sphi 0, %s487
      %s505 = sphi 0, %s505
      %s507 = sphi 0, %s505
      %s508 = sphi 0, %s507
      %s522 = sphi 0, %s508
      %s526 = sphi 0, %s526
      %s528 = sphi 0, %s526
      %s529 = sphi 0, %s528
      %s543 = sphi 0, %s529
      %s547 = sphi 0, %s547
      %s549 = sphi 0, %s547
      %s550 = sphi 0, %s549
      %s564 = sphi 0, %s550
      %s568 = sphi 0, %s568
      %s570 = sphi 0, %s568
      %s571 = sphi 0, %s570
      %s585 = sphi 0, %s571
      %s591 = sphi 0, %s593
      %s594 = sphi 0, %s591
      %s595 = sphi 0, %s594
      %s611 = sphi 0, %s595
      %s617 = sphi 0, %s619
      %s620 = sphi 0, %s617
      %s621 = sphi 0, %s620
      %s637 = sphi 0, %s621
    $region4: #{tpu_custom_call.1} parent=1 // loop_header_branch
      %49 = sbr.rel (%p47) target = $region8
    $region5: #{tpu_custom_call.1} parent=1 // loop_body
      %s51 = ssub.s32 %s46, 1
      %s52 = ssub.s32 %s46, 2
      %s53 = sadd.s32 %s46, 1
      %s54 = ssub.s32 %s46, %s53
      %p55 = scmp.eq.s32.totalorder %s54, 0
      %s57 = sadd.s32 %s56, 1
      %s58 = scalar_select %p55, %s56, %s57
      %p61 = pneg %p55
      %p62 = scmp.eq.s32.totalorder %s46, 1
      %p63 = por %p61, %p62
      %p64 = scmp.ne.s32.totalorder %s56, %s59
      %p65 = scmp.eq.s32.totalorder %s46, 0
      %p66 = por %p64, %p65
      %p67 = scmp.ne.s32.totalorder %s56, %s59
      %p68 = scmp.eq.s32.totalorder %s51, 1
      %p69 = por %p67, %p68
      %p70 = scmp.ne.s32.totalorder %s59, %s60
      %p71 = scmp.eq.s32.totalorder %s51, 0
      %p72 = por %p70, %p71
      %p73 = scmp.ne.s32.totalorder %s59, %s60
      %p74 = scmp.eq.s32.totalorder %s52, 1
      %p75 = por %p73, %p74
      %p77 = scmp.ne.s32.totalorder %s60, %s76
      %p78 = scmp.eq.s32.totalorder %s52, 0
      %p79 = por %p77, %p78
      %s80 = ssub.s32 %s46, %s53
      %p81 = scmp.eq.s32.totalorder %s80, 0
      %s83 = sadd.s32 %s82, 1
      %s84 = scalar_select %p81, %s82, %s83
      %p87 = pneg %p81
      %p88 = scmp.eq.s32.totalorder %s46, 1
      %p89 = por %p87, %p88
      %p90 = scmp.ne.s32.totalorder %s82, %s85
      %p91 = scmp.eq.s32.totalorder %s46, 0
      %p92 = por %p90, %p91
      %p93 = scmp.ne.s32.totalorder %s82, %s85
      %p94 = scmp.eq.s32.totalorder %s51, 1
      %p95 = por %p93, %p94
      %p96 = scmp.ne.s32.totalorder %s85, %s86
      %p97 = scmp.eq.s32.totalorder %s51, 0
      %p98 = por %p96, %p97
      %p99 = scmp.ne.s32.totalorder %s85, %s86
      %p100 = scmp.eq.s32.totalorder %s52, 1
      %p101 = por %p99, %p100
      %p103 = scmp.ne.s32.totalorder %s86, %s102
      %p104 = scmp.eq.s32.totalorder %s52, 0
      %p105 = por %p103, %p104
      %s107 = sadd.s32 %s106, 1
      %p110 = scmp.eq.s32.totalorder %s46, 1
      %p111 = scmp.ne.s32.totalorder %s106, %s108
      %p112 = scmp.eq.s32.totalorder %s46, 0
      %p113 = por %p111, %p112
      %p114 = scmp.ne.s32.totalorder %s106, %s108
      %p115 = scmp.eq.s32.totalorder %s51, 1
      %p116 = por %p114, %p115
      %p117 = scmp.ne.s32.totalorder %s108, %s109
      %p118 = scmp.eq.s32.totalorder %s51, 0
      %p119 = por %p117, %p118
      %p120 = scmp.ne.s32.totalorder %s108, %s109
      %p121 = scmp.eq.s32.totalorder %s52, 1
      %p122 = por %p120, %p121
      %p124 = scmp.ne.s32.totalorder %s109, %s123
      %p125 = scmp.eq.s32.totalorder %s52, 0
      %p126 = por %p124, %p125
      %s128 = sadd.s32 %s127, 1
      %p131 = scmp.eq.s32.totalorder %s46, 1
      %p132 = scmp.ne.s32.totalorder %s127, %s129
      %p133 = scmp.eq.s32.totalorder %s46, 0
      %p134 = por %p132, %p133
      %p135 = scmp.ne.s32.totalorder %s127, %s129
      %p136 = scmp.eq.s32.totalorder %s51, 1
      %p137 = por %p135, %p136
      %p138 = scmp.ne.s32.totalorder %s129, %s130
      %p139 = scmp.eq.s32.totalorder %s51, 0
      %p140 = por %p138, %p139
      %p141 = scmp.ne.s32.totalorder %s129, %s130
      %p142 = scmp.eq.s32.totalorder %s52, 1
      %p143 = por %p141, %p142
      %p145 = scmp.ne.s32.totalorder %s130, %s144
      %p146 = scmp.eq.s32.totalorder %s52, 0
      %p147 = por %p145, %p146
      %s149 = sadd.s32 %s148, 1
      %p152 = scmp.eq.s32.totalorder %s46, 1
      %p153 = scmp.ne.s32.totalorder %s148, %s150
      %p154 = scmp.eq.s32.totalorder %s46, 0
      %p155 = por %p153, %p154
      %p156 = scmp.ne.s32.totalorder %s148, %s150
      %p157 = scmp.eq.s32.totalorder %s51, 1
      %p158 = por %p156, %p157
      %p159 = scmp.ne.s32.totalorder %s150, %s151
      %p160 = scmp.eq.s32.totalorder %s51, 0
      %p161 = por %p159, %p160
      %p162 = scmp.ne.s32.totalorder %s150, %s151
      %p163 = scmp.eq.s32.totalorder %s52, 1
      %p164 = por %p162, %p163
      %p166 = scmp.ne.s32.totalorder %s151, %s165
      %p167 = scmp.eq.s32.totalorder %s52, 0
      %p168 = por %p166, %p167
      %s170 = sadd.s32 %s169, 1
      %p173 = scmp.eq.s32.totalorder %s46, 1
      %p174 = scmp.ne.s32.totalorder %s169, %s171
      %p175 = scmp.eq.s32.totalorder %s46, 0
      %p176 = por %p174, %p175
      %p177 = scmp.ne.s32.totalorder %s169, %s171
      %p178 = scmp.eq.s32.totalorder %s51, 1
      %p179 = por %p177, %p178
      %p180 = scmp.ne.s32.totalorder %s171, %s172
      %p181 = scmp.eq.s32.totalorder %s51, 0
      %p182 = por %p180, %p181
      %p183 = scmp.ne.s32.totalorder %s171, %s172
      %p184 = scmp.eq.s32.totalorder %s52, 1
      %p185 = por %p183, %p184
      %p187 = scmp.ne.s32.totalorder %s172, %s186
      %p188 = scmp.eq.s32.totalorder %s52, 0
      %p189 = por %p187, %p188
      %s191 = sadd.s32 %s190, 1
      %p194 = scmp.eq.s32.totalorder %s46, 1
      %p195 = scmp.ne.s32.totalorder %s190, %s192
      %p196 = scmp.eq.s32.totalorder %s46, 0
      %p197 = por %p195, %p196
      %p198 = scmp.ne.s32.totalorder %s190, %s192
      %p199 = scmp.eq.s32.totalorder %s51, 1
      %p200 = por %p198, %p199
      %p201 = scmp.ne.s32.totalorder %s192, %s193
      %p202 = scmp.eq.s32.totalorder %s51, 0
      %p203 = por %p201, %p202
      %p204 = scmp.ne.s32.totalorder %s192, %s193
      %p205 = scmp.eq.s32.totalorder %s52, 1
      %p206 = por %p204, %p205
      %p208 = scmp.ne.s32.totalorder %s193, %s207
      %p209 = scmp.eq.s32.totalorder %s52, 0
      %p210 = por %p208, %p209
      %s212 = sadd.s32 %s211, 1
      %p215 = scmp.eq.s32.totalorder %s46, 1
      %p216 = scmp.ne.s32.totalorder %s211, %s213
      %p217 = scmp.eq.s32.totalorder %s46, 0
      %p218 = por %p216, %p217
      %p219 = scmp.ne.s32.totalorder %s211, %s213
      %p220 = scmp.eq.s32.totalorder %s51, 1
      %p221 = por %p219, %p220
      %p222 = scmp.ne.s32.totalorder %s213, %s214
      %p223 = scmp.eq.s32.totalorder %s51, 0
      %p224 = por %p222, %p223
      %p225 = scmp.ne.s32.totalorder %s213, %s214
      %p226 = scmp.eq.s32.totalorder %s52, 1
      %p227 = por %p225, %p226
      %p229 = scmp.ne.s32.totalorder %s214, %s228
      %p230 = scmp.eq.s32.totalorder %s52, 0
      %p231 = por %p229, %p230
      %s233 = sadd.s32 %s232, 1
      %p236 = scmp.eq.s32.totalorder %s46, 1
      %p237 = scmp.ne.s32.totalorder %s232, %s234
      %p238 = scmp.eq.s32.totalorder %s46, 0
      %p239 = por %p237, %p238
      %p240 = scmp.ne.s32.totalorder %s232, %s234
      %p241 = scmp.eq.s32.totalorder %s51, 1
      %p242 = por %p240, %p241
      %p243 = scmp.ne.s32.totalorder %s234, %s235
      %p244 = scmp.eq.s32.totalorder %s51, 0
      %p245 = por %p243, %p244
      %p246 = scmp.ne.s32.totalorder %s234, %s235
      %p247 = scmp.eq.s32.totalorder %s52, 1
      %p248 = por %p246, %p247
      %p250 = scmp.ne.s32.totalorder %s235, %s249
      %p251 = scmp.eq.s32.totalorder %s52, 0
      %p252 = por %p250, %p251
      %s254 = sadd.s32 %s253, 1
      %p257 = scmp.eq.s32.totalorder %s46, 1
      %p258 = scmp.ne.s32.totalorder %s253, %s255
      %p259 = scmp.eq.s32.totalorder %s46, 0
      %p260 = por %p258, %p259
      %p261 = scmp.ne.s32.totalorder %s253, %s255
      %p262 = scmp.eq.s32.totalorder %s51, 1
      %p263 = por %p261, %p262
      %p264 = scmp.ne.s32.totalorder %s255, %s256
      %p265 = scmp.eq.s32.totalorder %s51, 0
      %p266 = por %p264, %p265
      %p267 = scmp.ne.s32.totalorder %s255, %s256
      %p268 = scmp.eq.s32.totalorder %s52, 1
      %p269 = por %p267, %p268
      %p271 = scmp.ne.s32.totalorder %s256, %s270
      %p272 = scmp.eq.s32.totalorder %s52, 0
      %p273 = por %p271, %p272
      %s275 = sadd.s32 %s274, 1
      %p278 = scmp.eq.s32.totalorder %s46, 1
      %p279 = scmp.ne.s32.totalorder %s274, %s276
      %p280 = scmp.eq.s32.totalorder %s46, 0
      %p281 = por %p279, %p280
      %p282 = scmp.ne.s32.totalorder %s274, %s276
      %p283 = scmp.eq.s32.totalorder %s51, 1
      %p284 = por %p282, %p283
      %p285 = scmp.ne.s32.totalorder %s276, %s277
      %p286 = scmp.eq.s32.totalorder %s51, 0
      %p287 = por %p285, %p286
      %p288 = scmp.ne.s32.totalorder %s276, %s277
      %p289 = scmp.eq.s32.totalorder %s52, 1
      %p290 = por %p288, %p289
      %p292 = scmp.ne.s32.totalorder %s277, %s291
      %p293 = scmp.eq.s32.totalorder %s52, 0
      %p294 = por %p292, %p293
      %s296 = sadd.s32 %s295, 1
      %p299 = scmp.eq.s32.totalorder %s46, 1
      %p300 = scmp.ne.s32.totalorder %s295, %s297
      %p301 = scmp.eq.s32.totalorder %s46, 0
      %p302 = por %p300, %p301
      %p303 = scmp.ne.s32.totalorder %s295, %s297
      %p304 = scmp.eq.s32.totalorder %s51, 1
      %p305 = por %p303, %p304
      %p306 = scmp.ne.s32.totalorder %s297, %s298
      %p307 = scmp.eq.s32.totalorder %s51, 0
      %p308 = por %p306, %p307
      %p309 = scmp.ne.s32.totalorder %s297, %s298
      %p310 = scmp.eq.s32.totalorder %s52, 1
      %p311 = por %p309, %p310
      %p313 = scmp.ne.s32.totalorder %s298, %s312
      %p314 = scmp.eq.s32.totalorder %s52, 0
      %p315 = por %p313, %p314
      %s317 = sadd.s32 %s316, 1
      %p320 = scmp.eq.s32.totalorder %s46, 1
      %p321 = scmp.ne.s32.totalorder %s316, %s318
      %p322 = scmp.eq.s32.totalorder %s46, 0
      %p323 = por %p321, %p322
      %p324 = scmp.ne.s32.totalorder %s316, %s318
      %p325 = scmp.eq.s32.totalorder %s51, 1
      %p326 = por %p324, %p325
      %p327 = scmp.ne.s32.totalorder %s318, %s319
      %p328 = scmp.eq.s32.totalorder %s51, 0
      %p329 = por %p327, %p328
      %p330 = scmp.ne.s32.totalorder %s318, %s319
      %p331 = scmp.eq.s32.totalorder %s52, 1
      %p332 = por %p330, %p331
      %p334 = scmp.ne.s32.totalorder %s319, %s333
      %p335 = scmp.eq.s32.totalorder %s52, 0
      %p336 = por %p334, %p335
      %s338 = sadd.s32 %s337, 1
      %p341 = scmp.eq.s32.totalorder %s46, 1
      %p342 = scmp.ne.s32.totalorder %s337, %s339
      %p343 = scmp.eq.s32.totalorder %s46, 0
      %p344 = por %p342, %p343
      %p345 = scmp.ne.s32.totalorder %s337, %s339
      %p346 = scmp.eq.s32.totalorder %s51, 1
      %p347 = por %p345, %p346
      %p348 = scmp.ne.s32.totalorder %s339, %s340
      %p349 = scmp.eq.s32.totalorder %s51, 0
      %p350 = por %p348, %p349
      %p351 = scmp.ne.s32.totalorder %s339, %s340
      %p352 = scmp.eq.s32.totalorder %s52, 1
      %p353 = por %p351, %p352
      %p355 = scmp.ne.s32.totalorder %s340, %s354
      %p356 = scmp.eq.s32.totalorder %s52, 0
      %p357 = por %p355, %p356
      %s359 = sadd.s32 %s358, 1
      %p362 = scmp.eq.s32.totalorder %s46, 1
      %p363 = scmp.ne.s32.totalorder %s358, %s360
      %p364 = scmp.eq.s32.totalorder %s46, 0
      %p365 = por %p363, %p364
      %p366 = scmp.ne.s32.totalorder %s358, %s360
      %p367 = scmp.eq.s32.totalorder %s51, 1
      %p368 = por %p366, %p367
      %p369 = scmp.ne.s32.totalorder %s360, %s361
      %p370 = scmp.eq.s32.totalorder %s51, 0
      %p371 = por %p369, %p370
      %p372 = scmp.ne.s32.totalorder %s360, %s361
      %p373 = scmp.eq.s32.totalorder %s52, 1
      %p374 = por %p372, %p373
      %p376 = scmp.ne.s32.totalorder %s361, %s375
      %p377 = scmp.eq.s32.totalorder %s52, 0
      %p378 = por %p376, %p377
      %s380 = sadd.s32 %s379, 1
      %p383 = scmp.eq.s32.totalorder %s46, 1
      %p384 = scmp.ne.s32.totalorder %s379, %s381
      %p385 = scmp.eq.s32.totalorder %s46, 0
      %p386 = por %p384, %p385
      %p387 = scmp.ne.s32.totalorder %s379, %s381
      %p388 = scmp.eq.s32.totalorder %s51, 1
      %p389 = por %p387, %p388
      %p390 = scmp.ne.s32.totalorder %s381, %s382
      %p391 = scmp.eq.s32.totalorder %s51, 0
      %p392 = por %p390, %p391
      %p393 = scmp.ne.s32.totalorder %s381, %s382
      %p394 = scmp.eq.s32.totalorder %s52, 1
      %p395 = por %p393, %p394
      %p397 = scmp.ne.s32.totalorder %s382, %s396
      %p398 = scmp.eq.s32.totalorder %s52, 0
      %p399 = por %p397, %p398
      %s401 = sadd.s32 %s400, 1
      %p404 = scmp.eq.s32.totalorder %s46, 1
      %p405 = scmp.ne.s32.totalorder %s400, %s402
      %p406 = scmp.eq.s32.totalorder %s46, 0
      %p407 = por %p405, %p406
      %p408 = scmp.ne.s32.totalorder %s400, %s402
      %p409 = scmp.eq.s32.totalorder %s51, 1
      %p410 = por %p408, %p409
      %p411 = scmp.ne.s32.totalorder %s402, %s403
      %p412 = scmp.eq.s32.totalorder %s51, 0
      %p413 = por %p411, %p412
      %p414 = scmp.ne.s32.totalorder %s402, %s403
      %p415 = scmp.eq.s32.totalorder %s52, 1
      %p416 = por %p414, %p415
      %p418 = scmp.ne.s32.totalorder %s403, %s417
      %p419 = scmp.eq.s32.totalorder %s52, 0
      %p420 = por %p418, %p419
      %s422 = sadd.s32 %s421, 1
      %p425 = scmp.eq.s32.totalorder %s46, 1
      %p426 = scmp.ne.s32.totalorder %s421, %s423
      %p427 = scmp.eq.s32.totalorder %s46, 0
      %p428 = por %p426, %p427
      %p429 = scmp.ne.s32.totalorder %s421, %s423
      %p430 = scmp.eq.s32.totalorder %s51, 1
      %p431 = por %p429, %p430
      %p432 = scmp.ne.s32.totalorder %s423, %s424
      %p433 = scmp.eq.s32.totalorder %s51, 0
      %p434 = por %p432, %p433
      %p435 = scmp.ne.s32.totalorder %s423, %s424
      %p436 = scmp.eq.s32.totalorder %s52, 1
      %p437 = por %p435, %p436
      %p439 = scmp.ne.s32.totalorder %s424, %s438
      %p440 = scmp.eq.s32.totalorder %s52, 0
      %p441 = por %p439, %p440
      %s443 = sadd.s32 %s442, 1
      %p446 = scmp.eq.s32.totalorder %s46, 1
      %p447 = scmp.ne.s32.totalorder %s442, %s444
      %p448 = scmp.eq.s32.totalorder %s46, 0
      %p449 = por %p447, %p448
      %p450 = scmp.ne.s32.totalorder %s442, %s444
      %p451 = scmp.eq.s32.totalorder %s51, 1
      %p452 = por %p450, %p451
      %p453 = scmp.ne.s32.totalorder %s444, %s445
      %p454 = scmp.eq.s32.totalorder %s51, 0
      %p455 = por %p453, %p454
      %p456 = scmp.ne.s32.totalorder %s444, %s445
      %p457 = scmp.eq.s32.totalorder %s52, 1
      %p458 = por %p456, %p457
      %p460 = scmp.ne.s32.totalorder %s445, %s459
      %p461 = scmp.eq.s32.totalorder %s52, 0
      %p462 = por %p460, %p461
      %s464 = sadd.s32 %s463, 1
      %p467 = scmp.eq.s32.totalorder %s46, 1
      %p468 = scmp.ne.s32.totalorder %s463, %s465
      %p469 = scmp.eq.s32.totalorder %s46, 0
      %p470 = por %p468, %p469
      %p471 = scmp.ne.s32.totalorder %s463, %s465
      %p472 = scmp.eq.s32.totalorder %s51, 1
      %p473 = por %p471, %p472
      %p474 = scmp.ne.s32.totalorder %s465, %s466
      %p475 = scmp.eq.s32.totalorder %s51, 0
      %p476 = por %p474, %p475
      %p477 = scmp.ne.s32.totalorder %s465, %s466
      %p478 = scmp.eq.s32.totalorder %s52, 1
      %p479 = por %p477, %p478
      %p481 = scmp.ne.s32.totalorder %s466, %s480
      %p482 = scmp.eq.s32.totalorder %s52, 0
      %p483 = por %p481, %p482
      %s485 = sadd.s32 %s484, 1
      %p488 = scmp.eq.s32.totalorder %s46, 1
      %p489 = scmp.ne.s32.totalorder %s484, %s486
      %p490 = scmp.eq.s32.totalorder %s46, 0
      %p491 = por %p489, %p490
      %p492 = scmp.ne.s32.totalorder %s484, %s486
      %p493 = scmp.eq.s32.totalorder %s51, 1
      %p494 = por %p492, %p493
      %p495 = scmp.ne.s32.totalorder %s486, %s487
      %p496 = scmp.eq.s32.totalorder %s51, 0
      %p497 = por %p495, %p496
      %p498 = scmp.ne.s32.totalorder %s486, %s487
      %p499 = scmp.eq.s32.totalorder %s52, 1
      %p500 = por %p498, %p499
      %p502 = scmp.ne.s32.totalorder %s487, %s501
      %p503 = scmp.eq.s32.totalorder %s52, 0
      %p504 = por %p502, %p503
      %s506 = sadd.s32 %s505, 1
      %p509 = scmp.eq.s32.totalorder %s46, 1
      %p510 = scmp.ne.s32.totalorder %s505, %s507
      %p511 = scmp.eq.s32.totalorder %s46, 0
      %p512 = por %p510, %p511
      %p513 = scmp.ne.s32.totalorder %s505, %s507
      %p514 = scmp.eq.s32.totalorder %s51, 1
      %p515 = por %p513, %p514
      %p516 = scmp.ne.s32.totalorder %s507, %s508
      %p517 = scmp.eq.s32.totalorder %s51, 0
      %p518 = por %p516, %p517
      %p519 = scmp.ne.s32.totalorder %s507, %s508
      %p520 = scmp.eq.s32.totalorder %s52, 1
      %p521 = por %p519, %p520
      %p523 = scmp.ne.s32.totalorder %s508, %s522
      %p524 = scmp.eq.s32.totalorder %s52, 0
      %p525 = por %p523, %p524
      %s527 = sadd.s32 %s526, 1
      %p530 = scmp.eq.s32.totalorder %s46, 1
      %p531 = scmp.ne.s32.totalorder %s526, %s528
      %p532 = scmp.eq.s32.totalorder %s46, 0
      %p533 = por %p531, %p532
      %p534 = scmp.ne.s32.totalorder %s526, %s528
      %p535 = scmp.eq.s32.totalorder %s51, 1
      %p536 = por %p534, %p535
      %p537 = scmp.ne.s32.totalorder %s528, %s529
      %p538 = scmp.eq.s32.totalorder %s51, 0
      %p539 = por %p537, %p538
      %p540 = scmp.ne.s32.totalorder %s528, %s529
      %p541 = scmp.eq.s32.totalorder %s52, 1
      %p542 = por %p540, %p541
      %p544 = scmp.ne.s32.totalorder %s529, %s543
      %p545 = scmp.eq.s32.totalorder %s52, 0
      %p546 = por %p544, %p545
      %s548 = sadd.s32 %s547, 1
      %p551 = scmp.eq.s32.totalorder %s46, 1
      %p552 = scmp.ne.s32.totalorder %s547, %s549
      %p553 = scmp.eq.s32.totalorder %s46, 0
      %p554 = por %p552, %p553
      %p555 = scmp.ne.s32.totalorder %s547, %s549
      %p556 = scmp.eq.s32.totalorder %s51, 1
      %p557 = por %p555, %p556
      %p558 = scmp.ne.s32.totalorder %s549, %s550
      %p559 = scmp.eq.s32.totalorder %s51, 0
      %p560 = por %p558, %p559
      %p561 = scmp.ne.s32.totalorder %s549, %s550
      %p562 = scmp.eq.s32.totalorder %s52, 1
      %p563 = por %p561, %p562
      %p565 = scmp.ne.s32.totalorder %s550, %s564
      %p566 = scmp.eq.s32.totalorder %s52, 0
      %p567 = por %p565, %p566
      %s569 = sadd.s32 %s568, 1
      %p572 = scmp.eq.s32.totalorder %s46, 1
      %p573 = scmp.ne.s32.totalorder %s568, %s570
      %p574 = scmp.eq.s32.totalorder %s46, 0
      %p575 = por %p573, %p574
      %p576 = scmp.ne.s32.totalorder %s568, %s570
      %p577 = scmp.eq.s32.totalorder %s51, 1
      %p578 = por %p576, %p577
      %p579 = scmp.ne.s32.totalorder %s570, %s571
      %p580 = scmp.eq.s32.totalorder %s51, 0
      %p581 = por %p579, %p580
      %p582 = scmp.ne.s32.totalorder %s570, %s571
      %p583 = scmp.eq.s32.totalorder %s52, 1
      %p584 = por %p582, %p583
      %p586 = scmp.ne.s32.totalorder %s571, %s585
      %p587 = scmp.eq.s32.totalorder %s52, 0
      %p588 = por %p586, %p587
      %s589 = ssub.s32 %s46, %s53
      %p590 = scmp.eq.s32.totalorder %s589, 0
      %s592 = sadd.s32 %s591, 1
      %s593 = scalar_select %p590, %s591, %s592
      %p596 = pneg %p590
      %p597 = scmp.eq.s32.totalorder %s46, 1
      %p598 = por %p596, %p597
      %p599 = scmp.ne.s32.totalorder %s591, %s594
      %p600 = scmp.eq.s32.totalorder %s46, 0
      %p601 = por %p599, %p600
      %p602 = scmp.ne.s32.totalorder %s591, %s594
      %p603 = scmp.eq.s32.totalorder %s51, 1
      %p604 = por %p602, %p603
      %p605 = scmp.ne.s32.totalorder %s594, %s595
      %p606 = scmp.eq.s32.totalorder %s51, 0
      %p607 = por %p605, %p606
      %p608 = scmp.ne.s32.totalorder %s594, %s595
      %p609 = scmp.eq.s32.totalorder %s52, 1
      %p610 = por %p608, %p609
      %p612 = scmp.ne.s32.totalorder %s595, %s611
      %p613 = scmp.eq.s32.totalorder %s52, 0
      %p614 = por %p612, %p613
      %s615 = ssub.s32 %s46, %s53
      %p616 = scmp.eq.s32.totalorder %s615, 0
      %s618 = sadd.s32 %s617, 1
      %s619 = scalar_select %p616, %s617, %s618
      %p622 = pneg %p616
      %p623 = scmp.eq.s32.totalorder %s46, 1
      %p624 = por %p622, %p623
      %p625 = scmp.ne.s32.totalorder %s617, %s620
      %p626 = scmp.eq.s32.totalorder %s46, 0
      %p627 = por %p625, %p626
      %p628 = scmp.ne.s32.totalorder %s617, %s620
      %p629 = scmp.eq.s32.totalorder %s51, 1
      %p630 = por %p628, %p629
      %p631 = scmp.ne.s32.totalorder %s620, %s621
      %p632 = scmp.eq.s32.totalorder %s51, 0
      %p633 = por %p631, %p632
      %p634 = scmp.ne.s32.totalorder %s620, %s621
      %p635 = scmp.eq.s32.totalorder %s52, 1
      %p636 = por %p634, %p635
      %p638 = scmp.ne.s32.totalorder %s621, %s637
      %p639 = scmp.eq.s32.totalorder %s52, 0
      %p640 = por %p638, %p639
      %p641 = scmp.le.s32.totalorder 1, %s46
      %p642 = scmp.lt.s32.totalorder %s46, 3
      %p643 = pnand %p641, %p642
      %p644 = pneg %p643
      // Predicated region
      $region9: #{tpu_custom_call.1} parent=5 // pred_check
        _
      $region10: #{tpu_custom_call.1} parent=5 // pred_check_branch
        %646 = sbr.rel (%p643) target = $region12
      $region11: #{tpu_custom_call.1} parent=5 // pred_region
        %s647 = ssub.s32 %s46, 1
        // Predicated region
        $region13: #{tpu_custom_call.1} parent=11 // pred_check
          %p648 = pneg %p119
        $region14: #{tpu_custom_call.1} parent=11 // pred_check_branch
          %650 = sbr.rel (%p648) target = $region16
        $region15: #{tpu_custom_call.1} parent=11 // pred_region
          _
        $region16: #{tpu_custom_call.1} parent=11 // pred_fallthru
          _
        // Predicated region
        $region17: #{tpu_custom_call.1} parent=11 // pred_check
          %p651 = pneg %p140
        $region18: #{tpu_custom_call.1} parent=11 // pred_check_branch
          %653 = sbr.rel (%p651) target = $region20
        $region19: #{tpu_custom_call.1} parent=11 // pred_region
          _
        $region20: #{tpu_custom_call.1} parent=11 // pred_fallthru
          _
        // Predicated region
        $region21: #{tpu_custom_call.1} parent=11 // pred_check
          %p654 = pneg %p161
        $region22: #{tpu_custom_call.1} parent=11 // pred_check_branch
          %656 = sbr.rel (%p654) target = $region24
        $region23: #{tpu_custom_call.1} parent=11 // pred_region
          %s658 = ssub.s32 256, 256
          %659 = vsyncadd [#allocation3], %s658
          %s660 = sshll.u32 [#allocation2], 4
          %s661 = int_to_ptr.vmem [resolvable:$true] %s660
          %666 = dma.hbm_to_vmem [thread:$0]  %s4, 256, %s661, [#allocation3], 64, 64, 4
        $region24: #{tpu_custom_call.1} parent=11 // pred_fallthru
          _
        // Predicated region
        $region25: #{tpu_custom_call.1} parent=11 // pred_check
          %p667 = pneg %p182
        $region26: #{tpu_custom_call.1} parent=11 // pred_check_branch
          %669 = sbr.rel (%p667) target = $region28
        $region27: #{tpu_custom_call.1} parent=11 // pred_region
          %s671 = ssub.s32 16, 16
          %672 = vsyncadd [#allocation6], %s671
          %s674 = sshll.u32 [#allocation5], 4
          %s675 = int_to_ptr.vmem [resolvable:$true] %s674
          %677 = dma.hbm_to_vmem [thread:$0]  %s5, 16, %s675, [#allocation6]
        $region28: #{tpu_custom_call.1} parent=11 // pred_fallthru
          _
        // Predicated region
        $region29: #{tpu_custom_call.1} parent=11 // pred_check
          %p678 = pneg %p203
        $region30: #{tpu_custom_call.1} parent=11 // pred_check_branch
          %680 = sbr.rel (%p678) target = $region32
        $region31: #{tpu_custom_call.1} parent=11 // pred_region
          %s682 = ssub.s32 16, 16
          %683 = vsyncadd [#allocation6], %s682
          %s685 = sshll.u32 [#allocation7], 4
          %s686 = int_to_ptr.vmem [resolvable:$true] %s685
          %688 = dma.hbm_to_vmem [thread:$0]  %s6, 16, %s686, [#allocation6]
        $region32: #{tpu_custom_call.1} parent=11 // pred_fallthru
          _
        // Predicated region
        $region33: #{tpu_custom_call.1} parent=11 // pred_check
          %p689 = pneg %p224
        $region34: #{tpu_custom_call.1} parent=11 // pred_check_branch
          %691 = sbr.rel (%p689) target = $region36
        $region35: #{tpu_custom_call.1} parent=11 // pred_region
          %s693 = ssub.s32 16, 16
          %694 = vsyncadd [#allocation9], %s693
          %s696 = sshll.u32 [#allocation8], 4
          %s697 = int_to_ptr.vmem [resolvable:$true] %s696
          %699 = dma.hbm_to_vmem [thread:$0]  %s7, 16, %s697, [#allocation9]
        $region36: #{tpu_custom_call.1} parent=11 // pred_fallthru
          _
        // Predicated region
        $region37: #{tpu_custom_call.1} parent=11 // pred_check
          %p700 = pneg %p245
        $region38: #{tpu_custom_call.1} parent=11 // pred_check_branch
          %702 = sbr.rel (%p700) target = $region40
        $region39: #{tpu_custom_call.1} parent=11 // pred_region
          %s704 = ssub.s32 256, 256
          %705 = vsyncadd [#allocation9], %s704
          %s706 = sshll.u32 [#allocation10], 4
          %s707 = int_to_ptr.vmem [resolvable:$true] %s706
          %712 = dma.hbm_to_vmem [thread:$0]  %s8, 256, %s707, [#allocation9], 64, 64, 4
        $region40: #{tpu_custom_call.1} parent=11 // pred_fallthru
          _
        // Predicated region
        $region41: #{tpu_custom_call.1} parent=11 // pred_check
          %p713 = pneg %p266
        $region42: #{tpu_custom_call.1} parent=11 // pred_check_branch
          %715 = sbr.rel (%p713) target = $region44
        $region43: #{tpu_custom_call.1} parent=11 // pred_region
          %s717 = ssub.s32 16, 16
          %718 = vsyncadd [#allocation12], %s717
          %s720 = sshll.u32 [#allocation11], 4
          %s721 = int_to_ptr.vmem [resolvable:$true] %s720
          %723 = dma.hbm_to_vmem [thread:$0]  %s9, 16, %s721, [#allocation12]
        $region44: #{tpu_custom_call.1} parent=11 // pred_fallthru
          _
        // Predicated region
        $region45: #{tpu_custom_call.1} parent=11 // pred_check
          %p724 = pneg %p287
        $region46: #{tpu_custom_call.1} parent=11 // pred_check_branch
          %726 = sbr.rel (%p724) target = $region48
        $region47: #{tpu_custom_call.1} parent=11 // pred_region
          %s728 = ssub.s32 16, 16
          %729 = vsyncadd [#allocation12], %s728
          %s731 = sshll.u32 [#allocation13], 4
          %s732 = int_to_ptr.vmem [resolvable:$true] %s731
          %734 = dma.hbm_to_vmem [thread:$0]  %s10, 16, %s732, [#allocation12]
        $region48: #{tpu_custom_call.1} parent=11 // pred_fallthru
          _
        // Predicated region
        $region49: #{tpu_custom_call.1} parent=11 // pred_check
          %p735 = pneg %p308
        $region50: #{tpu_custom_call.1} parent=11 // pred_check_branch
          %737 = sbr.rel (%p735) target = $region52
        $region51: #{tpu_custom_call.1} parent=11 // pred_region
          %s739 = ssub.s32 16, 16
          %740 = vsyncadd [#allocation15], %s739
          %s742 = sshll.u32 [#allocation14], 4
          %s743 = int_to_ptr.vmem [resolvable:$true] %s742
          %745 = dma.hbm_to_vmem [thread:$0]  %s11, 16, %s743, [#allocation15]
        $region52: #{tpu_custom_call.1} parent=11 // pred_fallthru
          _
        // Predicated region
        $region53: #{tpu_custom_call.1} parent=11 // pred_check
          %p746 = pneg %p329
        $region54: #{tpu_custom_call.1} parent=11 // pred_check_branch
          %748 = sbr.rel (%p746) target = $region56
        $region55: #{tpu_custom_call.1} parent=11 // pred_region
          _
        $region56: #{tpu_custom_call.1} parent=11 // pred_fallthru
          _
        // Predicated region
        $region57: #{tpu_custom_call.1} parent=11 // pred_check
          %p749 = pneg %p350
        $region58: #{tpu_custom_call.1} parent=11 // pred_check_branch
          %751 = sbr.rel (%p749) target = $region60
        $region59: #{tpu_custom_call.1} parent=11 // pred_region
          _
        $region60: #{tpu_custom_call.1} parent=11 // pred_fallthru
          _
        // Predicated region
        $region61: #{tpu_custom_call.1} parent=11 // pred_check
          %p752 = pneg %p371
        $region62: #{tpu_custom_call.1} parent=11 // pred_check_branch
          %754 = sbr.rel (%p752) target = $region64
        $region63: #{tpu_custom_call.1} parent=11 // pred_region
          %s756 = ssub.s32 256, 256
          %757 = vsyncadd [#allocation15], %s756
          %s758 = sshll.u32 [#allocation16], 4
          %s759 = int_to_ptr.vmem [resolvable:$true] %s758
          %764 = dma.hbm_to_vmem [thread:$0]  %s14, 256, %s759, [#allocation15], 64, 64, 4
        $region64: #{tpu_custom_call.1} parent=11 // pred_fallthru
          _
        // Predicated region
        $region65: #{tpu_custom_call.1} parent=11 // pred_check
          %p765 = pneg %p392
        $region66: #{tpu_custom_call.1} parent=11 // pred_check_branch
          %767 = sbr.rel (%p765) target = $region68
        $region67: #{tpu_custom_call.1} parent=11 // pred_region
          %s769 = ssub.s32 256, 256
          %770 = vsyncadd [#allocation18], %s769
          %s771 = sshll.u32 [#allocation17], 4
          %s772 = int_to_ptr.vmem [resolvable:$true] %s771
          %777 = dma.hbm_to_vmem [thread:$0]  %s15, 256, %s772, [#allocation18], 64, 64, 4
        $region68: #{tpu_custom_call.1} parent=11 // pred_fallthru
          _
        // Predicated region
        $region69: #{tpu_custom_call.1} parent=11 // pred_check
          %p778 = pneg %p413
        $region70: #{tpu_custom_call.1} parent=11 // pred_check_branch
          %780 = sbr.rel (%p778) target = $region72
        $region71: #{tpu_custom_call.1} parent=11 // pred_region
          %s782 = ssub.s32 16, 16
          %783 = vsyncadd [#allocation18], %s782
          %s785 = sshll.u32 [#allocation19], 4
          %s786 = int_to_ptr.vmem [resolvable:$true] %s785
          %788 = dma.hbm_to_vmem [thread:$0]  %s16, 16, %s786, [#allocation18]
        $region72: #{tpu_custom_call.1} parent=11 // pred_fallthru
          _
        // Predicated region
        $region73: #{tpu_custom_call.1} parent=11 // pred_check
          %p789 = pneg %p434
        $region74: #{tpu_custom_call.1} parent=11 // pred_check_branch
          %791 = sbr.rel (%p789) target = $region76
        $region75: #{tpu_custom_call.1} parent=11 // pred_region
          %s793 = ssub.s32 16, 16
          %794 = vsyncadd [#allocation21], %s793
          %s796 = sshll.u32 [#allocation20], 4
          %s797 = int_to_ptr.vmem [resolvable:$true] %s796
          %799 = dma.hbm_to_vmem [thread:$0]  %s17, 16, %s797, [#allocation21]
        $region76: #{tpu_custom_call.1} parent=11 // pred_fallthru
          _
        // Predicated region
        $region77: #{tpu_custom_call.1} parent=11 // pred_check
          %p800 = pneg %p455
        $region78: #{tpu_custom_call.1} parent=11 // pred_check_branch
          %802 = sbr.rel (%p800) target = $region80
        $region79: #{tpu_custom_call.1} parent=11 // pred_region
          _
        $region80: #{tpu_custom_call.1} parent=11 // pred_fallthru
          _
        // Predicated region
        $region81: #{tpu_custom_call.1} parent=11 // pred_check
          %p803 = pneg %p476
        $region82: #{tpu_custom_call.1} parent=11 // pred_check_branch
          %805 = sbr.rel (%p803) target = $region84
        $region83: #{tpu_custom_call.1} parent=11 // pred_region
          _
        $region84: #{tpu_custom_call.1} parent=11 // pred_fallthru
          _
        // Predicated region
        $region85: #{tpu_custom_call.1} parent=11 // pred_check
          %p806 = pneg %p497
        $region86: #{tpu_custom_call.1} parent=11 // pred_check_branch
          %808 = sbr.rel (%p806) target = $region88
        $region87: #{tpu_custom_call.1} parent=11 // pred_region
          _
        $region88: #{tpu_custom_call.1} parent=11 // pred_fallthru
          _
        // Predicated region
        $region89: #{tpu_custom_call.1} parent=11 // pred_check
          %p809 = pneg %p518
        $region90: #{tpu_custom_call.1} parent=11 // pred_check_branch
          %811 = sbr.rel (%p809) target = $region92
        $region91: #{tpu_custom_call.1} parent=11 // pred_region
          _
        $region92: #{tpu_custom_call.1} parent=11 // pred_fallthru
          _
        // Predicated region
        $region93: #{tpu_custom_call.1} parent=11 // pred_check
          %p812 = pneg %p539
        $region94: #{tpu_custom_call.1} parent=11 // pred_check_branch
          %814 = sbr.rel (%p812) target = $region96
        $region95: #{tpu_custom_call.1} parent=11 // pred_region
          _
        $region96: #{tpu_custom_call.1} parent=11 // pred_fallthru
          _
        // Predicated region
        $region97: #{tpu_custom_call.1} parent=11 // pred_check
          %p815 = pneg %p560
        $region98: #{tpu_custom_call.1} parent=11 // pred_check_branch
          %817 = sbr.rel (%p815) target = $region100
        $region99: #{tpu_custom_call.1} parent=11 // pred_region
          _
        $region100: #{tpu_custom_call.1} parent=11 // pred_fallthru
          _
        // Predicated region
        $region101: #{tpu_custom_call.1} parent=11 // pred_check
          %p818 = pneg %p581
        $region102: #{tpu_custom_call.1} parent=11 // pred_check_branch
          %820 = sbr.rel (%p818) target = $region104
        $region103: #{tpu_custom_call.1} parent=11 // pred_region
          _
        $region104: #{tpu_custom_call.1} parent=11 // pred_fallthru
          _
      $region12: #{tpu_custom_call.1} parent=5 // pred_fallthru
        _
      %p821 = scmp.lt.s32.totalorder %s46, 2
      // Predicated region
      $region105: #{tpu_custom_call.1} parent=5 // pred_check
        %p822 = pneg %p821
      $region106: #{tpu_custom_call.1} parent=5 // pred_check_branch
        %824 = sbr.rel (%p822) target = $region108
      $region107: #{tpu_custom_call.1} parent=5 // pred_region
        // Predicated region
        $region109: #{tpu_custom_call.1} parent=107 // pred_check
          %p825 = pneg %p66
        $region110: #{tpu_custom_call.1} parent=107 // pred_check_branch
          %827 = sbr.rel (%p825) target = $region112
        $region111: #{tpu_custom_call.1} parent=107 // pred_region
          %p828 = scmp.lt.s32.totalorder %s46, 1
          %s829 = scalar_select %p828, %s46, 1
          %s830 = smul.addr %s829, 8
          %s831 = scalar_lea.vmem %s0, %s830
        $region112: #{tpu_custom_call.1} parent=107 // pred_fallthru
          _
        // Predicated region
        $region113: #{tpu_custom_call.1} parent=107 // pred_check
          %p832 = pneg %p92
        $region114: #{tpu_custom_call.1} parent=107 // pred_check_branch
          %834 = sbr.rel (%p832) target = $region116
        $region115: #{tpu_custom_call.1} parent=107 // pred_region
          %p835 = scmp.lt.s32.totalorder %s46, 1
          %s836 = scalar_select %p835, %s46, 1
          %s837 = smul.addr %s836, 2
          %s838 = smul.addr %s837, 8
          %s839 = scalar_lea.vmem %s1, %s838
        $region116: #{tpu_custom_call.1} parent=107 // pred_fallthru
          _
      $region108: #{tpu_custom_call.1} parent=5 // pred_fallthru
        _
      %p840 = scmp.le.s32.totalorder 1, %s46
      %p841 = scmp.lt.s32.totalorder %s46, 3
      %p842 = pnand %p840, %p841
      %p843 = pneg %p842
      // Predicated region
      $region117: #{tpu_custom_call.1} parent=5 // pred_check
        _
      $region118: #{tpu_custom_call.1} parent=5 // pred_check_branch
        %845 = sbr.rel (%p842) target = $region120
      $region119: #{tpu_custom_call.1} parent=5 // pred_region
        %s846 = ssub.s32 %s46, 1
        // Predicated region
        $region121: #{tpu_custom_call.1} parent=119 // pred_check
          %p847 = pneg %p161
        $region122: #{tpu_custom_call.1} parent=119 // pred_check_branch
          %849 = sbr.rel (%p847) target = $region124
        $region123: #{tpu_custom_call.1} parent=119 // pred_region
          %850 = dma.done [#allocation3], 256
        $region124: #{tpu_custom_call.1} parent=119 // pred_fallthru
          _
        // Predicated region
        $region125: #{tpu_custom_call.1} parent=119 // pred_check
          %p851 = pneg %p182
        $region126: #{tpu_custom_call.1} parent=119 // pred_check_branch
          %853 = sbr.rel (%p851) target = $region128
        $region127: #{tpu_custom_call.1} parent=119 // pred_region
          %854 = dma.done [#allocation6], 16
        $region128: #{tpu_custom_call.1} parent=119 // pred_fallthru
          _
        // Predicated region
        $region129: #{tpu_custom_call.1} parent=119 // pred_check
          %p855 = pneg %p203
        $region130: #{tpu_custom_call.1} parent=119 // pred_check_branch
          %857 = sbr.rel (%p855) target = $region132
        $region131: #{tpu_custom_call.1} parent=119 // pred_region
          %858 = dma.done [#allocation6], 16
        $region132: #{tpu_custom_call.1} parent=119 // pred_fallthru
          _
        // Predicated region
        $region133: #{tpu_custom_call.1} parent=119 // pred_check
          %p859 = pneg %p224
        $region134: #{tpu_custom_call.1} parent=119 // pred_check_branch
          %861 = sbr.rel (%p859) target = $region136
        $region135: #{tpu_custom_call.1} parent=119 // pred_region
          %862 = dma.done [#allocation9], 16
        $region136: #{tpu_custom_call.1} parent=119 // pred_fallthru
          _
        // Predicated region
        $region137: #{tpu_custom_call.1} parent=119 // pred_check
          %p863 = pneg %p245
        $region138: #{tpu_custom_call.1} parent=119 // pred_check_branch
          %865 = sbr.rel (%p863) target = $region140
        $region139: #{tpu_custom_call.1} parent=119 // pred_region
          %866 = dma.done [#allocation9], 256
        $region140: #{tpu_custom_call.1} parent=119 // pred_fallthru
          _
        // Predicated region
        $region141: #{tpu_custom_call.1} parent=119 // pred_check
          %p867 = pneg %p266
        $region142: #{tpu_custom_call.1} parent=119 // pred_check_branch
          %869 = sbr.rel (%p867) target = $region144
        $region143: #{tpu_custom_call.1} parent=119 // pred_region
          %870 = dma.done [#allocation12], 16
        $region144: #{tpu_custom_call.1} parent=119 // pred_fallthru
          _
        // Predicated region
        $region145: #{tpu_custom_call.1} parent=119 // pred_check
          %p871 = pneg %p287
        $region146: #{tpu_custom_call.1} parent=119 // pred_check_branch
          %873 = sbr.rel (%p871) target = $region148
        $region147: #{tpu_custom_call.1} parent=119 // pred_region
          %874 = dma.done [#allocation12], 16
        $region148: #{tpu_custom_call.1} parent=119 // pred_fallthru
          _
        // Predicated region
        $region149: #{tpu_custom_call.1} parent=119 // pred_check
          %p875 = pneg %p308
        $region150: #{tpu_custom_call.1} parent=119 // pred_check_branch
          %877 = sbr.rel (%p875) target = $region152
        $region151: #{tpu_custom_call.1} parent=119 // pred_region
          %878 = dma.done [#allocation15], 16
        $region152: #{tpu_custom_call.1} parent=119 // pred_fallthru
          _
        // Predicated region
        $region153: #{tpu_custom_call.1} parent=119 // pred_check
          %p879 = pneg %p371
        $region154: #{tpu_custom_call.1} parent=119 // pred_check_branch
          %881 = sbr.rel (%p879) target = $region156
        $region155: #{tpu_custom_call.1} parent=119 // pred_region
          %882 = dma.done [#allocation15], 256
        $region156: #{tpu_custom_call.1} parent=119 // pred_fallthru
          _
        // Predicated region
        $region157: #{tpu_custom_call.1} parent=119 // pred_check
          %p883 = pneg %p392
        $region158: #{tpu_custom_call.1} parent=119 // pred_check_branch
          %885 = sbr.rel (%p883) target = $region160
        $region159: #{tpu_custom_call.1} parent=119 // pred_region
          %886 = dma.done [#allocation18], 256
        $region160: #{tpu_custom_call.1} parent=119 // pred_fallthru
          _
        // Predicated region
        $region161: #{tpu_custom_call.1} parent=119 // pred_check
          %p887 = pneg %p413
        $region162: #{tpu_custom_call.1} parent=119 // pred_check_branch
          %889 = sbr.rel (%p887) target = $region164
        $region163: #{tpu_custom_call.1} parent=119 // pred_region
          %890 = dma.done [#allocation18], 16
        $region164: #{tpu_custom_call.1} parent=119 // pred_fallthru
          _
        // Predicated region
        $region165: #{tpu_custom_call.1} parent=119 // pred_check
          %p891 = pneg %p434
        $region166: #{tpu_custom_call.1} parent=119 // pred_check_branch
          %893 = sbr.rel (%p891) target = $region168
        $region167: #{tpu_custom_call.1} parent=119 // pred_region
          %894 = dma.done [#allocation21], 16
        $region168: #{tpu_custom_call.1} parent=119 // pred_fallthru
          _
        %p895 = scmp.lt.s32.totalorder %s51, 1
        %s896 = scalar_select %p895, %s51, 1
        %s897 = smul.addr %s896, 8
        %s898 = scalar_lea.vmem %s0, %s897
        %p899 = pneg %p72
        %p900 = pneg %p69
        %p901 = scmp.lt.s32.totalorder %s51, 1
        %s902 = scalar_select %p901, %s51, 1
        %s903 = smul.addr %s902, 2
        %s904 = smul.addr %s903, 8
        %s905 = scalar_lea.vmem %s1, %s904
        %p906 = pneg %p98
        %p907 = pneg %p95
        %p908 = pneg %p119
        %p909 = pneg %p116
        %p910 = pneg %p140
        %p911 = pneg %p137
        %p912 = pneg %p161
        %p913 = pneg %p158
        %p914 = pneg %p182
        %p915 = pneg %p179
        %p916 = pneg %p203
        %p917 = pneg %p200
        %p918 = pneg %p224
        %p919 = pneg %p221
        %p920 = pneg %p245
        %p921 = pneg %p242
        %p922 = pneg %p266
        %p923 = pneg %p263
        %p924 = pneg %p287
        %p925 = pneg %p284
        %p926 = pneg %p308
        %p927 = pneg %p305
        %p928 = pneg %p329
        %p929 = pneg %p326
        %p930 = pneg %p350
        %p931 = pneg %p347
        %p932 = pneg %p371
        %p933 = pneg %p368
        %p934 = pneg %p392
        %p935 = pneg %p389
        %p936 = pneg %p413
        %p937 = pneg %p410
        %p938 = pneg %p434
        %p939 = pneg %p431
        %p940 = pneg %p455
        %p941 = pneg %p452
        %p942 = pneg %p476
        %p943 = pneg %p473
        %p944 = pneg %p497
        %p945 = pneg %p494
        %p946 = pneg %p518
        %p947 = pneg %p515
        %p948 = pneg %p539
        %p949 = pneg %p536
        %p950 = pneg %p560
        %p951 = pneg %p557
        %p952 = pneg %p581
        %p953 = pneg %p578
        %p954 = pneg %p607
        %p955 = pneg %p604
        %s956 = sand.u32 %s594, 1
        %s957 = scalar_lea.sflag [#allocation4], %s956
        %s958 = sand.u32 %s594, 1
        %s959 = smul.addr %s958, 8
        %s960 = scalar_lea.vmem [#allocation22], %s959
        %p961 = pneg %p633
        %p962 = pneg %p630
        %s963 = sand.u32 %s620, 1
        %s964 = scalar_lea.sflag [#allocation24], %s963
        %s965 = sand.u32 %s620, 1
        %s966 = smul.addr %s965, 8
        %s967 = scalar_lea.vmem [#allocation23], %s966
        %p968 = scmp.lt.s32.totalorder %s51, 1
        %s969 = scalar_select %p968, %s51, 1
        %s970 = smul.addr %s969, 8
        %s971 = scalar_lea.vmem %s0, %s970
        %p972 = scmp.lt.s32.totalorder %s51, 1
        %s973 = scalar_select %p972, %s51, 1
        %s974 = smul.addr %s973, 2
        %s975 = smul.addr %s974, 8
        %s976 = scalar_lea.vmem %s1, %s975
        %v978 = vld [vmem:[%s971] sm:$0xff]
        %v979 = vpack.c.bf16 %v978, %v978
        %v980 = vld [vmem:[%s976] sm:$0xff]
        %v981 = vld [vmem:[%s976 + $0x8] sm:$0xff]
        %v982 = vpack.c.bf16 %v981, %v980
        %v983 = vld [vmem:[%s2] sm:$0xf]
        %v984 = vld [vmem:[%s2 + $0x4] sm:$0xf]
        %v985 = vld [vmem:[%s2 + $0x8] sm:$0xf]
        %v986 = vld [vmem:[%s2 + $0xc] sm:$0xf]
        %v987 = vld [vmem:[#allocation5] sm:$0x1]
        %v989 = vlaneseq
        %v990 = vshrl.u32 %v989, 7
        %v991 = vsub.s32 0, %v990
        %v992 = vrot.slane %v987, %v991
        %v998 = vunpack.c.l.b16 %v983
        %v999 = vunpack.c.l.b16 %v984
        %v1000 = vunpack.c.l.b16 %v985
        %v1001 = vunpack.c.l.b16 %v986
        %v1002 = vpack.c.b16 %v999, %v998
        %v1003 = vpack.c.b16 %v1001, %v1000
        %vm1006 = vcmask 261120
        %v1008 = vsel %vm1006, %v979, 0
        %1010 = vmatprep.subr.bf16.mxu0 0
        %1011 = vmatpush1.bf16.msra.mxu0 %v1002
        %1012 = vmatprep.subr.bf16.mxu0 0
        %1013 = vmatpush1.bf16.msra.mxu0 %v1003
        %1014 = vmatprep.subr.bf16.mxu0 0
        %1015 = vmatpush1.bf16.msra.mxu0 0
        %1016 = vmatprep.subr.bf16.mxu0 0
        %1017 = vmatpush1.bf16.msra.mxu0 0
        %1018 = vmatprep.subr.bf16.mxu0 0
        %1019 = vmatpush1.bf16.msra.mxu0 0
        %1020 = vmatprep.subr.bf16.mxu0 0
        %1021 = vmatpush1.bf16.msra.mxu0 0
        %1022 = vmatprep.subr.bf16.mxu0 0
        %1023 = vmatpush1.bf16.msra.mxu0 0
        %1024 = vmatprep.subr.bf16.mxu0 0
        %1025 = vmatpush1.bf16.msra.mxu0 0
        %1026 = vmatprep.subr.bf16.mxu0 0
        %1027 = vmatpush1.bf16.msra.mxu0 0
        %1028 = vmatprep.subr.bf16.mxu0 0
        %1029 = vmatpush1.bf16.msra.mxu0 0
        %1030 = vmatprep.subr.bf16.mxu0 0
        %1031 = vmatpush1.bf16.msra.mxu0 0
        %1032 = vmatprep.subr.bf16.mxu0 0
        %1033 = vmatpush1.bf16.msra.mxu0 0
        %1034 = vmatprep.subr.bf16.mxu0 0
        %1035 = vmatpush1.bf16.msra.mxu0 0
        %1036 = vmatprep.subr.bf16.mxu0 0
        %1037 = vmatpush1.bf16.msra.mxu0 0
        %1038 = vmatprep.subr.bf16.mxu0 0
        %1039 = vmatpush1.bf16.msra.mxu0 0
        %1040 = vmatprep.subr.bf16.mxu0 0
        %1041 = vmatpush1.bf16.msra.mxu0 0
        %1042 = vmatprep.mubr.bf16.mxu0 0
        %1043 = vmatmul.mubr.bf16.gmra.mrb[0].mxu0 %v1008
        %v1044 = vpop.f32.mrb[0].mxu0
        %v1045 = vadd.f32 %v992, %v1044
        %v1046 = vpop.f32.mrb[0].mxu0
        %v1047 = vpop.f32.mrb[0].mxu0
        %v1048 = vpop.f32.mrb[0].mxu0
        %1049 = vdwg.mxu0
        %v1050 = vld [vmem:[%s3] sm:$0xf]
        %v1051 = vld [vmem:[%s3 + $0x4] sm:$0xf]
        %v1052 = vld [vmem:[%s3 + $0x8] sm:$0xf]
        %v1053 = vld [vmem:[%s3 + $0xc] sm:$0xf]
        %v1054 = vld [vmem:[#allocation7] sm:$0x1]
        %v1056 = vlaneseq
        %v1057 = vshrl.u32 %v1056, 7
        %v1058 = vsub.s32 0, %v1057
        %v1059 = vrot.slane %v1054, %v1058
        %v1065 = vunpack.c.l.b16 %v1050
        %v1066 = vunpack.c.l.b16 %v1051
        %v1067 = vunpack.c.l.b16 %v1052
        %v1068 = vunpack.c.l.b16 %v1053
        %v1069 = vpack.c.b16 %v1066, %v1065
        %v1070 = vpack.c.b16 %v1068, %v1067
        %1073 = vmatprep.subr.bf16.mxu0 0
        %1074 = vmatpush1.bf16.msra.mxu0 %v1069
        %1075 = vmatprep.subr.bf16.mxu0 0
        %1076 = vmatpush1.bf16.msra.mxu0 %v1070
        %1077 = vmatprep.subr.bf16.mxu0 0
        %1078 = vmatpush1.bf16.msra.mxu0 0
        %1079 = vmatprep.subr.bf16.mxu0 0
        %1080 = vmatpush1.bf16.msra.mxu0 0
        %1081 = vmatprep.subr.bf16.mxu0 0
        %1082 = vmatpush1.bf16.msra.mxu0 0
        %1083 = vmatprep.subr.bf16.mxu0 0
        %1084 = vmatpush1.bf16.msra.mxu0 0
        %1085 = vmatprep.subr.bf16.mxu0 0
        %1086 = vmatpush1.bf16.msra.mxu0 0
        %1087 = vmatprep.subr.bf16.mxu0 0
        %1088 = vmatpush1.bf16.msra.mxu0 0
        %1089 = vmatprep.subr.bf16.mxu0 0
        %1090 = vmatpush1.bf16.msra.mxu0 0
        %1091 = vmatprep.subr.bf16.mxu0 0
        %1092 = vmatpush1.bf16.msra.mxu0 0
        %1093 = vmatprep.subr.bf16.mxu0 0
        %1094 = vmatpush1.bf16.msra.mxu0 0
        %1095 = vmatprep.subr.bf16.mxu0 0
        %1096 = vmatpush1.bf16.msra.mxu0 0
        %1097 = vmatprep.subr.bf16.mxu0 0
        %1098 = vmatpush1.bf16.msra.mxu0 0
        %1099 = vmatprep.subr.bf16.mxu0 0
        %1100 = vmatpush1.bf16.msra.mxu0 0
        %1101 = vmatprep.subr.bf16.mxu0 0
        %1102 = vmatpush1.bf16.msra.mxu0 0
        %1103 = vmatprep.subr.bf16.mxu0 0
        %1104 = vmatpush1.bf16.msra.mxu0 0
        %1105 = vmatprep.mubr.bf16.mxu0 0
        %1106 = vmatmul.mubr.bf16.gmra.mrb[0].mxu0 %v1008
        %v1107 = vpop.f32.mrb[0].mxu0
        %v1108 = vadd.f32 %v1059, %v1107
        %v1109 = vpop.f32.mrb[0].mxu0
        %v1110 = vpop.f32.mrb[0].mxu0
        %v1111 = vpop.f32.mrb[0].mxu0
        %1112 = vdwg.mxu0
        %v1113 = vld [vmem:[#allocation2] sm:$0xf]
        %v1114 = vld [vmem:[#allocation2 + $0x4] sm:$0xf]
        %v1115 = vld [vmem:[#allocation2 + $0x8] sm:$0xf]
        %v1116 = vld [vmem:[#allocation2 + $0xc] sm:$0xf]
        %v1117 = vld [vmem:[#allocation8] sm:$0x1]
        %v1119 = vlaneseq
        %v1120 = vshrl.u32 %v1119, 7
        %v1121 = vsub.s32 0, %v1120
        %v1122 = vrot.slane %v1117, %v1121
        %v1128 = vunpack.c.l.b16 %v1113
        %v1129 = vunpack.c.l.b16 %v1114
        %v1130 = vunpack.c.l.b16 %v1115
        %v1131 = vunpack.c.l.b16 %v1116
        %v1132 = vpack.c.b16 %v1129, %v1128
        %v1133 = vpack.c.b16 %v1131, %v1130
        %1136 = vmatprep.subr.bf16.mxu0 0
        %1137 = vmatpush1.bf16.msra.mxu0 %v1132
        %1138 = vmatprep.subr.bf16.mxu0 0
        %1139 = vmatpush1.bf16.msra.mxu0 %v1133
        %1140 = vmatprep.subr.bf16.mxu0 0
        %1141 = vmatpush1.bf16.msra.mxu0 0
        %1142 = vmatprep.subr.bf16.mxu0 0
        %1143 = vmatpush1.bf16.msra.mxu0 0
        %1144 = vmatprep.subr.bf16.mxu0 0
        %1145 = vmatpush1.bf16.msra.mxu0 0
        %1146 = vmatprep.subr.bf16.mxu0 0
        %1147 = vmatpush1.bf16.msra.mxu0 0
        %1148 = vmatprep.subr.bf16.mxu0 0
        %1149 = vmatpush1.bf16.msra.mxu0 0
        %1150 = vmatprep.subr.bf16.mxu0 0
        %1151 = vmatpush1.bf16.msra.mxu0 0
        %1152 = vmatprep.subr.bf16.mxu0 0
        %1153 = vmatpush1.bf16.msra.mxu0 0
        %1154 = vmatprep.subr.bf16.mxu0 0
        %1155 = vmatpush1.bf16.msra.mxu0 0
        %1156 = vmatprep.subr.bf16.mxu0 0
        %1157 = vmatpush1.bf16.msra.mxu0 0
        %1158 = vmatprep.subr.bf16.mxu0 0
        %1159 = vmatpush1.bf16.msra.mxu0 0
        %1160 = vmatprep.subr.bf16.mxu0 0
        %1161 = vmatpush1.bf16.msra.mxu0 0
        %1162 = vmatprep.subr.bf16.mxu0 0
        %1163 = vmatpush1.bf16.msra.mxu0 0
        %1164 = vmatprep.subr.bf16.mxu0 0
        %1165 = vmatpush1.bf16.msra.mxu0 0
        %1166 = vmatprep.subr.bf16.mxu0 0
        %1167 = vmatpush1.bf16.msra.mxu0 0
        %1168 = vmatprep.mubr.bf16.mxu0 0
        %1169 = vmatmul.mubr.bf16.gmra.mrb[0].mxu0 %v1008
        %v1170 = vpop.f32.mrb[0].mxu0
        %v1171 = vadd.f32 %v1122, %v1170
        %v1172 = vpop.f32.mrb[0].mxu0
        %v1173 = vpop.f32.mrb[0].mxu0
        %v1174 = vpop.f32.mrb[0].mxu0
        %1175 = vdwg.mxu0
        %v1176 = vpack.c.bf16 %v1045, %v1045
        %1178 = vrot.lane.b32.xlu0 %v1176, 112
        %v1179 = vpop.permute.xlu0 %1178
        %v1180 = vpack.c.bf16 %v1108, %v1108
        %1182 = vrot.lane.b32.xlu0 %v1180, 112
        %v1183 = vpop.permute.xlu0 %1182
        %v1185 = vpack.c.bf16 %v1171, %v1171
        %1187 = vrot.lane.b32.xlu0 %v1185, 112
        %v1188 = vpop.permute.xlu0 %1187
        %1190 = vxpose.xlu0.c.b16.start [1/8] %v1180, 128
        %1191 = vxpose.xlu0.c.b16.cont [2/8] 0, 128
        %1192 = vxpose.xlu0.c.b16.cont [3/8] 0, 128
        %1193 = vxpose.xlu0.c.b16.cont [4/8] 0, 128
        %1194 = vxpose.xlu0.c.b16.cont [5/8] 0, 128
        %1195 = vxpose.xlu0.c.b16.cont [6/8] 0, 128
        %1196 = vxpose.xlu0.c.b16.cont [7/8] 0, 128
        %1197 = vxpose.xlu0.c.b16.end [8/8] 0, 128
        %v1198 = vpop.trf.xlu0
        %v1199 = vpop.trf.xlu0
        %v1200 = vpop.trf.xlu0
        %v1201 = vpop.trf.xlu0
        %v1202 = vpop.trf.xlu0
        %v1203 = vpop.trf.xlu0
        %v1204 = vpop.trf.xlu0
        %v1205 = vpop.trf.xlu0
        %1206 = vxpose.xlu0.c.b16.start [1/8] %v1183, 128
        %1207 = vxpose.xlu0.c.b16.cont [2/8] 0, 128
        %1208 = vxpose.xlu0.c.b16.cont [3/8] 0, 128
        %1209 = vxpose.xlu0.c.b16.cont [4/8] 0, 128
        %1210 = vxpose.xlu0.c.b16.cont [5/8] 0, 128
        %1211 = vxpose.xlu0.c.b16.cont [6/8] 0, 128
        %1212 = vxpose.xlu0.c.b16.cont [7/8] 0, 128
        %1213 = vxpose.xlu0.c.b16.end [8/8] 0, 128
        %v1214 = vpop.trf.xlu0
        %v1215 = vpop.trf.xlu0
        %v1216 = vpop.trf.xlu0
        %v1217 = vpop.trf.xlu0
        %v1218 = vpop.trf.xlu0
        %v1219 = vpop.trf.xlu0
        %v1220 = vpop.trf.xlu0
        %v1221 = vpop.trf.xlu0
        %vm1222 = vcmask 130048
        %v1224 = vsel %vm1222, %v1176, 0
        %1226 = vmatprep.subr.bf16.mxu0 0
        %1227 = vmatpush1.bf16.msra.mxu0 %v1198
        %1228 = vmatprep.subr.bf16.mxu0 0
        %1229 = vmatpush1.bf16.msra.mxu0 0
        %1230 = vmatprep.subr.bf16.mxu0 0
        %1231 = vmatpush1.bf16.msra.mxu0 0
        %1232 = vmatprep.subr.bf16.mxu0 0
        %1233 = vmatpush1.bf16.msra.mxu0 0
        %1234 = vmatprep.subr.bf16.mxu0 0
        %1235 = vmatpush1.bf16.msra.mxu0 0
        %1236 = vmatprep.subr.bf16.mxu0 0
        %1237 = vmatpush1.bf16.msra.mxu0 0
        %1238 = vmatprep.subr.bf16.mxu0 0
        %1239 = vmatpush1.bf16.msra.mxu0 0
        %1240 = vmatprep.subr.bf16.mxu0 0
        %1241 = vmatpush1.bf16.msra.mxu0 0
        %1242 = vmatprep.subr.bf16.mxu0 0
        %1243 = vmatpush1.bf16.msra.mxu0 0
        %1244 = vmatprep.subr.bf16.mxu0 0
        %1245 = vmatpush1.bf16.msra.mxu0 0
        %1246 = vmatprep.subr.bf16.mxu0 0
        %1247 = vmatpush1.bf16.msra.mxu0 0
        %1248 = vmatprep.subr.bf16.mxu0 0
        %1249 = vmatpush1.bf16.msra.mxu0 0
        %1250 = vmatprep.subr.bf16.mxu0 0
        %1251 = vmatpush1.bf16.msra.mxu0 0
        %1252 = vmatprep.subr.bf16.mxu0 0
        %1253 = vmatpush1.bf16.msra.mxu0 0
        %1254 = vmatprep.subr.bf16.mxu0 0
        %1255 = vmatpush1.bf16.msra.mxu0 0
        %1256 = vmatprep.subr.bf16.mxu0 0
        %1257 = vmatpush1.bf16.msra.mxu0 0
        %1258 = vmatprep.mubr.bf16.mxu0 0
        %1259 = vmatmul.mubr.bf16.gmra.mrb[0].mxu0 %v1224
        %v1260 = vpop.f32.mrb[0].mxu0
        %v1261 = vadd.f32 0.0, %v1260
        %v1262 = vpop.f32.mrb[0].mxu0
        %v1263 = vpop.f32.mrb[0].mxu0
        %v1264 = vpop.f32.mrb[0].mxu0
        %1265 = vdwg.mxu0
        %v1267 = vsel %vm1222, %v1179, 0
        %1269 = vmatprep.subr.bf16.mxu0 0
        %1270 = vmatpush1.bf16.msra.mxu0 %v1214
        %1271 = vmatprep.subr.bf16.mxu0 0
        %1272 = vmatpush1.bf16.msra.mxu0 0
        %1273 = vmatprep.subr.bf16.mxu0 0
        %1274 = vmatpush1.bf16.msra.mxu0 0
        %1275 = vmatprep.subr.bf16.mxu0 0
        %1276 = vmatpush1.bf16.msra.mxu0 0
        %1277 = vmatprep.subr.bf16.mxu0 0
        %1278 = vmatpush1.bf16.msra.mxu0 0
        %1279 = vmatprep.subr.bf16.mxu0 0
        %1280 = vmatpush1.bf16.msra.mxu0 0
        %1281 = vmatprep.subr.bf16.mxu0 0
        %1282 = vmatpush1.bf16.msra.mxu0 0
        %1283 = vmatprep.subr.bf16.mxu0 0
        %1284 = vmatpush1.bf16.msra.mxu0 0
        %1285 = vmatprep.subr.bf16.mxu0 0
        %1286 = vmatpush1.bf16.msra.mxu0 0
        %1287 = vmatprep.subr.bf16.mxu0 0
        %1288 = vmatpush1.bf16.msra.mxu0 0
        %1289 = vmatprep.subr.bf16.mxu0 0
        %1290 = vmatpush1.bf16.msra.mxu0 0
        %1291 = vmatprep.subr.bf16.mxu0 0
        %1292 = vmatpush1.bf16.msra.mxu0 0
        %1293 = vmatprep.subr.bf16.mxu0 0
        %1294 = vmatpush1.bf16.msra.mxu0 0
        %1295 = vmatprep.subr.bf16.mxu0 0
        %1296 = vmatpush1.bf16.msra.mxu0 0
        %1297 = vmatprep.subr.bf16.mxu0 0
        %1298 = vmatpush1.bf16.msra.mxu0 0
        %1299 = vmatprep.subr.bf16.mxu0 0
        %1300 = vmatpush1.bf16.msra.mxu0 0
        %1301 = vmatprep.mubr.bf16.mxu0 0
        %1302 = vmatmul.mubr.bf16.gmra.mrb[0].mxu0 %v1267
        %v1303 = vpop.f32.mrb[0].mxu0
        %v1304 = vadd.f32 0.0, %v1303
        %v1305 = vpop.f32.mrb[0].mxu0
        %v1306 = vpop.f32.mrb[0].mxu0
        %v1307 = vpop.f32.mrb[0].mxu0
        %1308 = vdwg.mxu0
        %vm1309 = vcmask 64512
        %v1310 = vsel %vm1309, %v1261, -inf
        %1311 = vmax.xlane.f32.xlu0 %v1310
        %v1312 = vpop.xlane.xlu0 %1311
        %v1313 = vsel %vm1309, %v1304, -inf
        %1314 = vmax.xlane.f32.xlu0 %v1313
        %v1315 = vpop.xlane.xlu0 %1314
        %v1316 = vsub.f32 %v1261, %v1312
        %v1317 = vsub.f32 %v1304, %v1315
        %v1318 = vmul.f32 %v1316, 1.442695
        %v1319 = vpow.pop %v1318
        %v1320 = vmul.f32 %v1317, 1.442695
        %v1321 = vpow.pop %v1320
        %v1322 = vsel %vm1309, %v1319, 0.0
        %1323 = vadd.xlane.f32.xlu0 %v1322
        %v1324 = vpop.xlane.xlu0 %1323
        %v1325 = vsel %vm1309, %v1321, 0.0
        %1326 = vadd.xlane.f32.xlu0 %v1325
        %v1327 = vpop.xlane.xlu0 %1326
        %v1328 = vrcp.pop %v1324
        %v1329 = vrcp.pop %v1327
        %v1330 = vmul.f32 %v1319, %v1328
        %v1331 = vmul.f32 %v1321, %v1329
        %v1332 = vpack.c.bf16 %v1330, %v1330
        %v1333 = vpack.c.bf16 %v1331, %v1331
        %1334 = vxpose.xlu0.c.b16.start [1/8] %v1185, 128
        %1335 = vxpose.xlu0.c.b16.cont [2/8] 0, 128
        %1336 = vxpose.xlu0.c.b16.cont [3/8] 0, 128
        %1337 = vxpose.xlu0.c.b16.cont [4/8] 0, 128
        %1338 = vxpose.xlu0.c.b16.cont [5/8] 0, 128
        %1339 = vxpose.xlu0.c.b16.cont [6/8] 0, 128
        %1340 = vxpose.xlu0.c.b16.cont [7/8] 0, 128
        %1341 = vxpose.xlu0.c.b16.end [8/8] 0, 128
        %v1342 = vpop.trf.xlu0
        %v1343 = vpop.trf.xlu0
        %v1344 = vpop.trf.xlu0
        %v1345 = vpop.trf.xlu0
        %v1346 = vpop.trf.xlu0
        %v1347 = vpop.trf.xlu0
        %v1348 = vpop.trf.xlu0
        %v1349 = vpop.trf.xlu0
        %1350 = vxpose.xlu0.c.b16.start [1/8] %v1188, 128
        %1351 = vxpose.xlu0.c.b16.cont [2/8] 0, 128
        %1352 = vxpose.xlu0.c.b16.cont [3/8] 0, 128
        %1353 = vxpose.xlu0.c.b16.cont [4/8] 0, 128
        %1354 = vxpose.xlu0.c.b16.cont [5/8] 0, 128
        %1355 = vxpose.xlu0.c.b16.cont [6/8] 0, 128
        %1356 = vxpose.xlu0.c.b16.cont [7/8] 0, 128
        %1357 = vxpose.xlu0.c.b16.end [8/8] 0, 128
        %v1358 = vpop.trf.xlu0
        %v1359 = vpop.trf.xlu0
        %v1360 = vpop.trf.xlu0
        %v1361 = vpop.trf.xlu0
        %v1362 = vpop.trf.xlu0
        %v1363 = vpop.trf.xlu0
        %v1364 = vpop.trf.xlu0
        %v1365 = vpop.trf.xlu0
        %v1367 = vsel %vm1309, %v1342, 0
        %v1370 = vsel %vm1309, %v1332, 0
        %1372 = vmatprep.subr.bf16.mxu0 0
        %1373 = vmatpush1.bf16.xpose.msra.mxu0 %v1370
        %1374 = vmatprep.subr.bf16.mxu0 0
        %1375 = vmatpush1.bf16.xpose.msra.mxu0 0
        %1376 = vmatprep.subr.bf16.mxu0 0
        %1377 = vmatpush1.bf16.xpose.msra.mxu0 0
        %1378 = vmatprep.subr.bf16.mxu0 0
        %1379 = vmatpush1.bf16.xpose.msra.mxu0 0
        %1380 = vmatprep.subr.bf16.mxu0 0
        %1381 = vmatpush1.bf16.xpose.msra.mxu0 0
        %1382 = vmatprep.subr.bf16.mxu0 0
        %1383 = vmatpush1.bf16.xpose.msra.mxu0 0
        %1384 = vmatprep.subr.bf16.mxu0 0
        %1385 = vmatpush1.bf16.xpose.msra.mxu0 0
        %1386 = vmatprep.subr.bf16.mxu0 0
        %1387 = vmatpush1.bf16.xpose.msra.mxu0 0
        %1388 = vmatprep.subr.bf16.mxu0 0
        %1389 = vmatpush1.bf16.xpose.msra.mxu0 0
        %1390 = vmatprep.subr.bf16.mxu0 0
        %1391 = vmatpush1.bf16.xpose.msra.mxu0 0
        %1392 = vmatprep.subr.bf16.mxu0 0
        %1393 = vmatpush1.bf16.xpose.msra.mxu0 0
        %1394 = vmatprep.subr.bf16.mxu0 0
        %1395 = vmatpush1.bf16.xpose.msra.mxu0 0
        %1396 = vmatprep.subr.bf16.mxu0 0
        %1397 = vmatpush1.bf16.xpose.msra.mxu0 0
        %1398 = vmatprep.subr.bf16.mxu0 0
        %1399 = vmatpush1.bf16.xpose.msra.mxu0 0
        %1400 = vmatprep.subr.bf16.mxu0 0
        %1401 = vmatpush1.bf16.xpose.msra.mxu0 0
        %1402 = vmatprep.subr.bf16.mxu0 0
        %1403 = vmatpush1.bf16.xpose.msra.mxu0 0
        %1404 = vmatprep.mubr.bf16.mxu0 0
        %1405 = vmatmul.mubr.bf16.gmra.mrb[0].mxu0 %v1367
        %v1406 = vpop.f32.mrb[0].mxu0
        %v1407 = vadd.f32 0.0, %v1406
        %v1408 = vpop.f32.mrb[0].mxu0
        %v1409 = vpop.f32.mrb[0].mxu0
        %v1410 = vadd.f32 0.0, %v1409
        %v1411 = vpop.f32.mrb[0].mxu0
        %1412 = vdwg.mxu0
        %v1414 = vsel %vm1309, %v1358, 0
        %v1417 = vsel %vm1309, %v1333, 0
        %1419 = vmatprep.subr.bf16.mxu0 0
        %1420 = vmatpush1.bf16.xpose.msra.mxu0 %v1417
        %1421 = vmatprep.subr.bf16.mxu0 0
        %1422 = vmatpush1.bf16.xpose.msra.mxu0 0
        %1423 = vmatprep.subr.bf16.mxu0 0
        %1424 = vmatpush1.bf16.xpose.msra.mxu0 0
        %1425 = vmatprep.subr.bf16.mxu0 0
        %1426 = vmatpush1.bf16.xpose.msra.mxu0 0
        %1427 = vmatprep.subr.bf16.mxu0 0
        %1428 = vmatpush1.bf16.xpose.msra.mxu0 0
        %1429 = vmatprep.subr.bf16.mxu0 0
        %1430 = vmatpush1.bf16.xpose.msra.mxu0 0
        %1431 = vmatprep.subr.bf16.mxu0 0
        %1432 = vmatpush1.bf16.xpose.msra.mxu0 0
        %1433 = vmatprep.subr.bf16.mxu0 0
        %1434 = vmatpush1.bf16.xpose.msra.mxu0 0
        %1435 = vmatprep.subr.bf16.mxu0 0
        %1436 = vmatpush1.bf16.xpose.msra.mxu0 0
        %1437 = vmatprep.subr.bf16.mxu0 0
        %1438 = vmatpush1.bf16.xpose.msra.mxu0 0
        %1439 = vmatprep.subr.bf16.mxu0 0
        %1440 = vmatpush1.bf16.xpose.msra.mxu0 0
        %1441 = vmatprep.subr.bf16.mxu0 0
        %1442 = vmatpush1.bf16.xpose.msra.mxu0 0
        %1443 = vmatprep.subr.bf16.mxu0 0
        %1444 = vmatpush1.bf16.xpose.msra.mxu0 0
        %1445 = vmatprep.subr.bf16.mxu0 0
        %1446 = vmatpush1.bf16.xpose.msra.mxu0 0
        %1447 = vmatprep.subr.bf16.mxu0 0
        %1448 = vmatpush1.bf16.xpose.msra.mxu0 0
        %1449 = vmatprep.subr.bf16.mxu0 0
        %1450 = vmatpush1.bf16.xpose.msra.mxu0 0
        %1451 = vmatprep.mubr.bf16.mxu0 0
        %1452 = vmatmul.mubr.bf16.gmra.mrb[0].mxu0 %v1414
        %v1453 = vpop.f32.mrb[0].mxu0
        %v1454 = vadd.f32 0.0, %v1453
        %v1455 = vpop.f32.mrb[0].mxu0
        %v1456 = vpop.f32.mrb[0].mxu0
        %v1457 = vadd.f32 0.0, %v1456
        %v1458 = vpop.f32.mrb[0].mxu0
        %1459 = vdwg.mxu0
        %1460 = vxpose.xlu0.b32.start [1/16] %v1407, 128
        %1461 = vxpose.xlu0.b32.cont [2/16] %v1410, 128
        %1462 = vxpose.xlu0.b32.cont [3/16] 0.0, 128
        %1463 = vxpose.xlu0.b32.cont [4/16] 0.0, 128
        %1464 = vxpose.xlu0.b32.cont [5/16] 0.0, 128
        %1465 = vxpose.xlu0.b32.cont [6/16] 0.0, 128
        %1466 = vxpose.xlu0.b32.cont [7/16] 0.0, 128
        %1467 = vxpose.xlu0.b32.cont [8/16] 0.0, 128
        %1468 = vxpose.xlu0.b32.cont [9/16] 0.0, 128
        %1469 = vxpose.xlu0.b32.cont [10/16] 0.0, 128
        %1470 = vxpose.xlu0.b32.cont [11/16] 0.0, 128
        %1471 = vxpose.xlu0.b32.cont [12/16] 0.0, 128
        %1472 = vxpose.xlu0.b32.cont [13/16] 0.0, 128
        %1473 = vxpose.xlu0.b32.cont [14/16] 0.0, 128
        %1474 = vxpose.xlu0.b32.cont [15/16] 0.0, 128
        %1475 = vxpose.xlu0.b32.end [16/16] 0.0, 128
        %v1476 = vpop.trf.xlu0
        %v1477 = vpop.trf.xlu0
        %v1478 = vpop.trf.xlu0
        %v1479 = vpop.trf.xlu0
        %v1480 = vpop.trf.xlu0
        %v1481 = vpop.trf.xlu0
        %v1482 = vpop.trf.xlu0
        %v1483 = vpop.trf.xlu0
        %v1484 = vpop.trf.xlu0
        %v1485 = vpop.trf.xlu0
        %v1486 = vpop.trf.xlu0
        %v1487 = vpop.trf.xlu0
        %v1488 = vpop.trf.xlu0
        %v1489 = vpop.trf.xlu0
        %v1490 = vpop.trf.xlu0
        %v1491 = vpop.trf.xlu0
        %1492 = vxpose.xlu0.b32.start [1/16] %v1454, 128
        %1493 = vxpose.xlu0.b32.cont [2/16] %v1457, 128
        %1494 = vxpose.xlu0.b32.cont [3/16] 0.0, 128
        %1495 = vxpose.xlu0.b32.cont [4/16] 0.0, 128
        %1496 = vxpose.xlu0.b32.cont [5/16] 0.0, 128
        %1497 = vxpose.xlu0.b32.cont [6/16] 0.0, 128
        %1498 = vxpose.xlu0.b32.cont [7/16] 0.0, 128
        %1499 = vxpose.xlu0.b32.cont [8/16] 0.0, 128
        %1500 = vxpose.xlu0.b32.cont [9/16] 0.0, 128
        %1501 = vxpose.xlu0.b32.cont [10/16] 0.0, 128
        %1502 = vxpose.xlu0.b32.cont [11/16] 0.0, 128
        %1503 = vxpose.xlu0.b32.cont [12/16] 0.0, 128
        %1504 = vxpose.xlu0.b32.cont [13/16] 0.0, 128
        %1505 = vxpose.xlu0.b32.cont [14/16] 0.0, 128
        %1506 = vxpose.xlu0.b32.cont [15/16] 0.0, 128
        %1507 = vxpose.xlu0.b32.end [16/16] 0.0, 128
        %v1508 = vpop.trf.xlu0
        %v1509 = vpop.trf.xlu0
        %v1510 = vpop.trf.xlu0
        %v1511 = vpop.trf.xlu0
        %v1512 = vpop.trf.xlu0
        %v1513 = vpop.trf.xlu0
        %v1514 = vpop.trf.xlu0
        %v1515 = vpop.trf.xlu0
        %v1516 = vpop.trf.xlu0
        %v1517 = vpop.trf.xlu0
        %v1518 = vpop.trf.xlu0
        %v1519 = vpop.trf.xlu0
        %v1520 = vpop.trf.xlu0
        %v1521 = vpop.trf.xlu0
        %v1522 = vpop.trf.xlu0
        %v1523 = vpop.trf.xlu0
        %v1524 = vcombine.high %v1476, 0.0
        %v1526 = vunpack.c.l.s4 1983009808
        %v1527 = vunpack.c.0.s8 %v1526
        %v1528 = vlaneseq
        %v1529 = vshrl.u32 %v1528, 7
        %v1530 = vsub.s32 %v1527, %v1529
        %v1531 = vrot.slane %v1476, %v1530
        %v1533 = vunpack.c.l.s4 1983009808
        %v1534 = vunpack.c.0.s8 %v1533
        %v1535 = vlaneseq
        %v1536 = vshrl.u32 %v1535, 7
        %v1537 = vsub.s32 %v1534, %v1536
        %v1538 = vrot.slane %v1524, %v1537
        %v1539 = vcombine.high %v1508, 0.0
        %v1541 = vunpack.c.l.s4 1983009808
        %v1542 = vunpack.c.0.s8 %v1541
        %v1543 = vlaneseq
        %v1544 = vshrl.u32 %v1543, 7
        %v1545 = vsub.s32 %v1542, %v1544
        %v1546 = vrot.slane %v1508, %v1545
        %v1548 = vunpack.c.l.s4 1983009808
        %v1549 = vunpack.c.0.s8 %v1548
        %v1550 = vlaneseq
        %v1551 = vshrl.u32 %v1550, 7
        %v1552 = vsub.s32 %v1549, %v1551
        %v1553 = vrot.slane %v1539, %v1552
        %v1554 = vcombine.low %v1531, %v1546
        %v1555 = vcombine.high %v1531, %v1546
        %v1557 = vunpack.c.l.s4 1934713408
        %v1558 = vunpack.c.0.s8 %v1557
        %v1559 = vlaneseq
        %v1560 = vshrl.u32 %v1559, 7
        %v1561 = vsub.s32 %v1558, %v1560
        %v1562 = vrot.slane %v1554, %v1561
        %v1564 = vunpack.c.l.s4 1934713408
        %v1565 = vunpack.c.0.s8 %v1564
        %v1566 = vlaneseq
        %v1567 = vshrl.u32 %v1566, 7
        %v1568 = vsub.s32 %v1565, %v1567
        %v1569 = vrot.slane %v1555, %v1568
        %v1570 = vcombine.low %v1538, %v1553
        %v1571 = vcombine.high %v1538, %v1553
        %v1573 = vunpack.c.l.s4 1934713408
        %v1574 = vunpack.c.0.s8 %v1573
        %v1575 = vlaneseq
        %v1576 = vshrl.u32 %v1575, 7
        %v1577 = vsub.s32 %v1574, %v1576
        %v1578 = vrot.slane %v1570, %v1577
        %v1580 = vunpack.c.l.s4 1934713408
        %v1581 = vunpack.c.0.s8 %v1580
        %v1582 = vlaneseq
        %v1583 = vshrl.u32 %v1582, 7
        %v1584 = vsub.s32 %v1581, %v1583
        %v1585 = vrot.slane %v1571, %v1584
        %v1586 = vcombine.high %v1562, 0.0
        %v1587 = vcombine.high %v1569, 0.0
        %v1588 = vcombine.high %v1578, 0.0
        %v1589 = vcombine.high %v1585, 0.0
        %v1590 = vpack.c.bf16 %v1562, %v1562
        %v1591 = vpack.c.bf16 %v1586, %v1586
        %v1592 = vpack.c.bf16 %v1569, %v1569
        %v1593 = vpack.c.bf16 %v1587, %v1587
        %v1594 = vpack.c.bf16 %v1578, %v1578
        %v1595 = vpack.c.bf16 %v1588, %v1588
        %v1596 = vpack.c.bf16 %v1585, %v1585
        %v1597 = vpack.c.bf16 %v1589, %v1589
        %v1598 = vcombine.low %v1590, %v1594
        %v1600 = vunpack.c.l.s4 1983009808
        %v1601 = vunpack.c.0.s8 %v1600
        %v1602 = vlaneseq
        %v1603 = vshrl.u32 %v1602, 7
        %v1604 = vsub.s32 %v1601, %v1603
        %v1605 = vrot.slane %v1598, %v1604
        %v1606 = vcombine.low %v1592, %v1596
        %v1608 = vunpack.c.l.s4 1983009808
        %v1609 = vunpack.c.0.s8 %v1608
        %v1610 = vlaneseq
        %v1611 = vshrl.u32 %v1610, 7
        %v1612 = vsub.s32 %v1609, %v1611
        %v1613 = vrot.slane %v1606, %v1612
        %v1614 = vcombine.low %v1605, %v1613
        %v1616 = vunpack.c.l.s4 1934713408
        %v1617 = vunpack.c.0.s8 %v1616
        %v1618 = vlaneseq
        %v1619 = vshrl.u32 %v1618, 7
        %v1620 = vsub.s32 %v1617, %v1619
        %v1621 = vrot.slane %v1614, %v1620
        %v1622 = vcombine.low %v1591, %v1595
        %v1624 = vunpack.c.l.s4 1983009808
        %v1625 = vunpack.c.0.s8 %v1624
        %v1626 = vlaneseq
        %v1627 = vshrl.u32 %v1626, 7
        %v1628 = vsub.s32 %v1625, %v1627
        %v1629 = vrot.slane %v1622, %v1628
        %v1630 = vcombine.low %v1593, %v1597
        %v1632 = vunpack.c.l.s4 1983009808
        %v1633 = vunpack.c.0.s8 %v1632
        %v1634 = vlaneseq
        %v1635 = vshrl.u32 %v1634, 7
        %v1636 = vsub.s32 %v1633, %v1635
        %v1637 = vrot.slane %v1630, %v1636
        %v1638 = vcombine.low %v1629, %v1637
        %v1640 = vunpack.c.l.s4 1934713408
        %v1641 = vunpack.c.0.s8 %v1640
        %v1642 = vlaneseq
        %v1643 = vshrl.u32 %v1642, 7
        %v1644 = vsub.s32 %v1641, %v1643
        %v1645 = vrot.slane %v1638, %v1644
        %v1648 = vpack.i.b16 %v1645, %v1621
        %v1649 = vshrl.u32 %v1621, 16
        %v1650 = vshrl.u32 %v1645, 16
        %v1651 = vpack.i.b16 %v1650, %v1649
        %1652 = vrot.lane.b32.xlu0 %v1651, 16
        %v1653 = vpop.permute.xlu0 %1652
        %v1656 = vsel %vm1222, %v1648, %v1653
        %v1657 = vld [vmem:[#allocation10] sm:$0xf]
        %v1658 = vld [vmem:[#allocation10 + $0x4] sm:$0xf]
        %v1659 = vld [vmem:[#allocation10 + $0x8] sm:$0xf]
        %v1660 = vld [vmem:[#allocation10 + $0xc] sm:$0xf]
        %v1661 = vld [vmem:[#allocation11] sm:$0x1]
        %v1663 = vlaneseq
        %v1664 = vshrl.u32 %v1663, 7
        %v1665 = vsub.s32 0, %v1664
        %v1666 = vrot.slane %v1661, %v1665
        %v1672 = vunpack.c.l.b16 %v1657
        %v1673 = vunpack.c.l.b16 %v1658
        %v1674 = vunpack.c.l.b16 %v1659
        %v1675 = vunpack.c.l.b16 %v1660
        %v1676 = vpack.c.b16 %v1673, %v1672
        %v1677 = vpack.c.b16 %v1675, %v1674
        %v1680 = vsel %vm1006, %v1656, 0
        %1682 = vmatprep.subr.bf16.mxu0 0
        %1683 = vmatpush1.bf16.msra.mxu0 %v1676
        %1684 = vmatprep.subr.bf16.mxu0 0
        %1685 = vmatpush1.bf16.msra.mxu0 %v1677
        %1686 = vmatprep.subr.bf16.mxu0 0
        %1687 = vmatpush1.bf16.msra.mxu0 0
        %1688 = vmatprep.subr.bf16.mxu0 0
        %1689 = vmatpush1.bf16.msra.mxu0 0
        %1690 = vmatprep.subr.bf16.mxu0 0
        %1691 = vmatpush1.bf16.msra.mxu0 0
        %1692 = vmatprep.subr.bf16.mxu0 0
        %1693 = vmatpush1.bf16.msra.mxu0 0
        %1694 = vmatprep.subr.bf16.mxu0 0
        %1695 = vmatpush1.bf16.msra.mxu0 0
        %1696 = vmatprep.subr.bf16.mxu0 0
        %1697 = vmatpush1.bf16.msra.mxu0 0
        %1698 = vmatprep.subr.bf16.mxu0 0
        %1699 = vmatpush1.bf16.msra.mxu0 0
        %1700 = vmatprep.subr.bf16.mxu0 0
        %1701 = vmatpush1.bf16.msra.mxu0 0
        %1702 = vmatprep.subr.bf16.mxu0 0
        %1703 = vmatpush1.bf16.msra.mxu0 0
        %1704 = vmatprep.subr.bf16.mxu0 0
        %1705 = vmatpush1.bf16.msra.mxu0 0
        %1706 = vmatprep.subr.bf16.mxu0 0
        %1707 = vmatpush1.bf16.msra.mxu0 0
        %1708 = vmatprep.subr.bf16.mxu0 0
        %1709 = vmatpush1.bf16.msra.mxu0 0
        %1710 = vmatprep.subr.bf16.mxu0 0
        %1711 = vmatpush1.bf16.msra.mxu0 0
        %1712 = vmatprep.subr.bf16.mxu0 0
        %1713 = vmatpush1.bf16.msra.mxu0 0
        %1714 = vmatprep.mubr.bf16.mxu0 0
        %1715 = vmatmul.mubr.bf16.gmra.mrb[0].mxu0 %v1680
        %v1716 = vpop.f32.mrb[0].mxu0
        %v1717 = vadd.f32 %v1666, %v1716
        %v1718 = vpop.f32.mrb[0].mxu0
        %v1719 = vpop.f32.mrb[0].mxu0
        %v1720 = vpop.f32.mrb[0].mxu0
        %1721 = vdwg.mxu0
        %v1722 = vld [vmem:[#allocation13] sm:$0x1]
        %v1723 = vld [vmem:[#allocation14] sm:$0x1]
        %v1724 = vsel %vm1006, %v1717, 0.0
        %1725 = vadd.xlane.f32.xlu0 %v1724
        %v1726 = vpop.xlane.xlu0 %1725
        %v1727 = vrcp.pop 32.0
        %v1728 = vmul.f32 %v1726, %v1727
        %v1729 = vsub.f32 %v1717, %v1728
        %v1730 = vmul.f32 %v1729, %v1729
        %v1731 = vsel %vm1006, %v1730, 0.0
        %1732 = vadd.xlane.f32.xlu0 %v1731
        %v1733 = vpop.xlane.xlu0 %1732
        %v1734 = vmul.f32 %v1733, %v1727
        %v1735 = vadd.f32 %v1734, 1e-05
        %v1736 = vrsqrt.pop %v1735
        %v1737 = vmul.f32 %v1729, %v1736
        %v1739 = vlaneseq
        %v1740 = vshrl.u32 %v1739, 7
        %v1741 = vsub.s32 0, %v1740
        %v1742 = vrot.slane %v1722, %v1741
        %v1744 = vmul.f32 %v1737, %v1742
        %v1746 = vlaneseq
        %v1747 = vshrl.u32 %v1746, 7
        %v1748 = vsub.s32 0, %v1747
        %v1749 = vrot.slane %v1723, %v1748
        %v1751 = vadd.f32 %v1744, %v1749
        %v1752 = vadd.f32 %v978, %v1751
        %v1753 = vpack.c.bf16 %v1752, %v1752
        %v1754 = vld [vmem:[%s12] sm:$0xf]
        %v1755 = vld [vmem:[%s12 + $0x4] sm:$0xf]
        %v1756 = vld [vmem:[%s12 + $0x8] sm:$0xf]
        %v1757 = vld [vmem:[%s12 + $0xc] sm:$0xf]
        %v1762 = vunpack.c.l.b16 %v1754
        %v1763 = vunpack.c.l.b16 %v1755
        %v1764 = vunpack.c.l.b16 %v1756
        %v1765 = vunpack.c.l.b16 %v1757
        %v1766 = vpack.c.b16 %v1763, %v1762
        %v1767 = vpack.c.b16 %v1765, %v1764
        %v1771 = vsel %vm1006, %v1753, 0
        %1773 = vmatprep.subr.bf16.mxu0 0
        %1774 = vmatpush1.bf16.msra.mxu0 %v1766
        %1775 = vmatprep.subr.bf16.mxu0 0
        %1776 = vmatpush1.bf16.msra.mxu0 %v1767
        %1777 = vmatprep.subr.bf16.mxu0 0
        %1778 = vmatpush1.bf16.msra.mxu0 0
        %1779 = vmatprep.subr.bf16.mxu0 0
        %1780 = vmatpush1.bf16.msra.mxu0 0
        %1781 = vmatprep.subr.bf16.mxu0 0
        %1782 = vmatpush1.bf16.msra.mxu0 0
        %1783 = vmatprep.subr.bf16.mxu0 0
        %1784 = vmatpush1.bf16.msra.mxu0 0
        %1785 = vmatprep.subr.bf16.mxu0 0
        %1786 = vmatpush1.bf16.msra.mxu0 0
        %1787 = vmatprep.subr.bf16.mxu0 0
        %1788 = vmatpush1.bf16.msra.mxu0 0
        %1789 = vmatprep.subr.bf16.mxu0 0
        %1790 = vmatpush1.bf16.msra.mxu0 0
        %1791 = vmatprep.subr.bf16.mxu0 0
        %1792 = vmatpush1.bf16.msra.mxu0 0
        %1793 = vmatprep.subr.bf16.mxu0 0
        %1794 = vmatpush1.bf16.msra.mxu0 0
        %1795 = vmatprep.subr.bf16.mxu0 0
        %1796 = vmatpush1.bf16.msra.mxu0 0
        %1797 = vmatprep.subr.bf16.mxu0 0
        %1798 = vmatpush1.bf16.msra.mxu0 0
        %1799 = vmatprep.subr.bf16.mxu0 0
        %1800 = vmatpush1.bf16.msra.mxu0 0
        %1801 = vmatprep.subr.bf16.mxu0 0
        %1802 = vmatpush1.bf16.msra.mxu0 0
        %1803 = vmatprep.subr.bf16.mxu0 0
        %1804 = vmatpush1.bf16.msra.mxu0 0
        %1805 = vmatprep.mubr.bf16.mxu0 0
        %1806 = vmatmul.mubr.bf16.gmra.mrb[0].mxu0 %v1771
        %v1807 = vpop.f32.mrb[0].mxu0
        %v1808 = vadd.f32 0.0, %v1807
        %v1809 = vpop.f32.mrb[0].mxu0
        %v1810 = vpop.f32.mrb[0].mxu0
        %v1811 = vpop.f32.mrb[0].mxu0
        %1812 = vdwg.mxu0
        %v1813 = vld [vmem:[%s13] sm:$0xf]
        %v1814 = vld [vmem:[%s13 + $0x4] sm:$0xf]
        %v1815 = vld [vmem:[%s13 + $0x8] sm:$0xf]
        %v1816 = vld [vmem:[%s13 + $0xc] sm:$0xf]
        %v1821 = vunpack.c.l.b16 %v1813
        %v1822 = vunpack.c.l.b16 %v1814
        %v1823 = vunpack.c.l.b16 %v1815
        %v1824 = vunpack.c.l.b16 %v1816
        %v1825 = vpack.c.b16 %v1822, %v1821
        %v1826 = vpack.c.b16 %v1824, %v1823
        %v1830 = vsel %vm1006, %v982, 0
        %1832 = vmatprep.subr.bf16.mxu0 0
        %1833 = vmatpush1.bf16.msra.mxu0 %v1825
        %1834 = vmatprep.subr.bf16.mxu0 0
        %1835 = vmatpush1.bf16.msra.mxu0 %v1826
        %1836 = vmatprep.subr.bf16.mxu0 0
        %1837 = vmatpush1.bf16.msra.mxu0 0
        %1838 = vmatprep.subr.bf16.mxu0 0
        %1839 = vmatpush1.bf16.msra.mxu0 0
        %1840 = vmatprep.subr.bf16.mxu0 0
        %1841 = vmatpush1.bf16.msra.mxu0 0
        %1842 = vmatprep.subr.bf16.mxu0 0
        %1843 = vmatpush1.bf16.msra.mxu0 0
        %1844 = vmatprep.subr.bf16.mxu0 0
        %1845 = vmatpush1.bf16.msra.mxu0 0
        %1846 = vmatprep.subr.bf16.mxu0 0
        %1847 = vmatpush1.bf16.msra.mxu0 0
        %1848 = vmatprep.subr.bf16.mxu0 0
        %1849 = vmatpush1.bf16.msra.mxu0 0
        %1850 = vmatprep.subr.bf16.mxu0 0
        %1851 = vmatpush1.bf16.msra.mxu0 0
        %1852 = vmatprep.subr.bf16.mxu0 0
        %1853 = vmatpush1.bf16.msra.mxu0 0
        %1854 = vmatprep.subr.bf16.mxu0 0
        %1855 = vmatpush1.bf16.msra.mxu0 0
        %1856 = vmatprep.subr.bf16.mxu0 0
        %1857 = vmatpush1.bf16.msra.mxu0 0
        %1858 = vmatprep.subr.bf16.mxu0 0
        %1859 = vmatpush1.bf16.msra.mxu0 0
        %1860 = vmatprep.subr.bf16.mxu0 0
        %1861 = vmatpush1.bf16.msra.mxu0 0
        %1862 = vmatprep.subr.bf16.mxu0 0
        %1863 = vmatpush1.bf16.msra.mxu0 0
        %1864 = vmatprep.mubr.bf16.mxu0 0
        %1865 = vmatmul.mubr.bf16.gmra.mrb[0].mxu0 %v1830
        %v1866 = vpop.f32.mrb[0].mxu0
        %v1867 = vadd.f32 0.0, %v1866
        %v1868 = vpop.f32.mrb[0].mxu0
        %v1869 = vpop.f32.mrb[0].mxu0
        %v1870 = vadd.f32 0.0, %v1869
        %v1871 = vpop.f32.mrb[0].mxu0
        %1872 = vdwg.mxu0
        %v1873 = vld [vmem:[#allocation16] sm:$0xf]
        %v1874 = vld [vmem:[#allocation16 + $0x4] sm:$0xf]
        %v1875 = vld [vmem:[#allocation16 + $0x8] sm:$0xf]
        %v1876 = vld [vmem:[#allocation16 + $0xc] sm:$0xf]
        %v1881 = vunpack.c.l.b16 %v1873
        %v1882 = vunpack.c.l.b16 %v1874
        %v1883 = vunpack.c.l.b16 %v1875
        %v1884 = vunpack.c.l.b16 %v1876
        %v1885 = vpack.c.b16 %v1882, %v1881
        %v1886 = vpack.c.b16 %v1884, %v1883
        %1889 = vmatprep.subr.bf16.mxu0 0
        %1890 = vmatpush1.bf16.msra.mxu0 %v1885
        %1891 = vmatprep.subr.bf16.mxu0 0
        %1892 = vmatpush1.bf16.msra.mxu0 %v1886
        %1893 = vmatprep.subr.bf16.mxu0 0
        %1894 = vmatpush1.bf16.msra.mxu0 0
        %1895 = vmatprep.subr.bf16.mxu0 0
        %1896 = vmatpush1.bf16.msra.mxu0 0
        %1897 = vmatprep.subr.bf16.mxu0 0
        %1898 = vmatpush1.bf16.msra.mxu0 0
        %1899 = vmatprep.subr.bf16.mxu0 0
        %1900 = vmatpush1.bf16.msra.mxu0 0
        %1901 = vmatprep.subr.bf16.mxu0 0
        %1902 = vmatpush1.bf16.msra.mxu0 0
        %1903 = vmatprep.subr.bf16.mxu0 0
        %1904 = vmatpush1.bf16.msra.mxu0 0
        %1905 = vmatprep.subr.bf16.mxu0 0
        %1906 = vmatpush1.bf16.msra.mxu0 0
        %1907 = vmatprep.subr.bf16.mxu0 0
        %1908 = vmatpush1.bf16.msra.mxu0 0
        %1909 = vmatprep.subr.bf16.mxu0 0
        %1910 = vmatpush1.bf16.msra.mxu0 0
        %1911 = vmatprep.subr.bf16.mxu0 0
        %1912 = vmatpush1.bf16.msra.mxu0 0
        %1913 = vmatprep.subr.bf16.mxu0 0
        %1914 = vmatpush1.bf16.msra.mxu0 0
        %1915 = vmatprep.subr.bf16.mxu0 0
        %1916 = vmatpush1.bf16.msra.mxu0 0
        %1917 = vmatprep.subr.bf16.mxu0 0
        %1918 = vmatpush1.bf16.msra.mxu0 0
        %1919 = vmatprep.subr.bf16.mxu0 0
        %1920 = vmatpush1.bf16.msra.mxu0 0
        %1921 = vmatprep.mubr.bf16.mxu0 0
        %1922 = vmatmul.mubr.bf16.gmra.mrb[0].mxu0 %v1830
        %v1923 = vpop.f32.mrb[0].mxu0
        %v1924 = vadd.f32 0.0, %v1923
        %v1925 = vpop.f32.mrb[0].mxu0
        %v1926 = vpop.f32.mrb[0].mxu0
        %v1927 = vadd.f32 0.0, %v1926
        %v1928 = vpop.f32.mrb[0].mxu0
        %1929 = vdwg.mxu0
        %v1930 = vpack.c.bf16 %v1808, %v1808
        %1932 = vrot.lane.b32.xlu0 %v1930, 112
        %v1933 = vpop.permute.xlu0 %1932
        %v1934 = vpack.c.bf16 %v1870, %v1867
        %1936 = vrot.lane.b32.xlu0 %v1934, 112
        %v1937 = vpop.permute.xlu0 %1936
        %v1939 = vpack.c.bf16 %v1927, %v1924
        %1941 = vrot.lane.b32.xlu0 %v1939, 112
        %v1942 = vpop.permute.xlu0 %1941
        %1944 = vxpose.xlu0.c.b16.start [1/8] %v1934, 128
        %1945 = vxpose.xlu0.c.b16.cont [2/8] 0, 128
        %1946 = vxpose.xlu0.c.b16.cont [3/8] 0, 128
        %1947 = vxpose.xlu0.c.b16.cont [4/8] 0, 128
        %1948 = vxpose.xlu0.c.b16.cont [5/8] 0, 128
        %1949 = vxpose.xlu0.c.b16.cont [6/8] 0, 128
        %1950 = vxpose.xlu0.c.b16.cont [7/8] 0, 128
        %1951 = vxpose.xlu0.c.b16.end [8/8] 0, 128
        %v1952 = vpop.trf.xlu0
        %v1953 = vpop.trf.xlu0
        %v1954 = vpop.trf.xlu0
        %v1955 = vpop.trf.xlu0
        %v1956 = vpop.trf.xlu0
        %v1957 = vpop.trf.xlu0
        %v1958 = vpop.trf.xlu0
        %v1959 = vpop.trf.xlu0
        %1960 = vxpose.xlu0.c.b16.start [1/8] %v1937, 128
        %1961 = vxpose.xlu0.c.b16.cont [2/8] 0, 128
        %1962 = vxpose.xlu0.c.b16.cont [3/8] 0, 128
        %1963 = vxpose.xlu0.c.b16.cont [4/8] 0, 128
        %1964 = vxpose.xlu0.c.b16.cont [5/8] 0, 128
        %1965 = vxpose.xlu0.c.b16.cont [6/8] 0, 128
        %1966 = vxpose.xlu0.c.b16.cont [7/8] 0, 128
        %1967 = vxpose.xlu0.c.b16.end [8/8] 0, 128
        %v1968 = vpop.trf.xlu0
        %v1969 = vpop.trf.xlu0
        %v1970 = vpop.trf.xlu0
        %v1971 = vpop.trf.xlu0
        %v1972 = vpop.trf.xlu0
        %v1973 = vpop.trf.xlu0
        %v1974 = vpop.trf.xlu0
        %v1975 = vpop.trf.xlu0
        %v1977 = vsel %vm1222, %v1930, 0
        %1979 = vmatprep.subr.bf16.mxu0 0
        %1980 = vmatpush1.bf16.msra.mxu0 %v1952
        %1981 = vmatprep.subr.bf16.mxu0 0
        %1982 = vmatpush1.bf16.msra.mxu0 0
        %1983 = vmatprep.subr.bf16.mxu0 0
        %1984 = vmatpush1.bf16.msra.mxu0 0
        %1985 = vmatprep.subr.bf16.mxu0 0
        %1986 = vmatpush1.bf16.msra.mxu0 0
        %1987 = vmatprep.subr.bf16.mxu0 0
        %1988 = vmatpush1.bf16.msra.mxu0 0
        %1989 = vmatprep.subr.bf16.mxu0 0
        %1990 = vmatpush1.bf16.msra.mxu0 0
        %1991 = vmatprep.subr.bf16.mxu0 0
        %1992 = vmatpush1.bf16.msra.mxu0 0
        %1993 = vmatprep.subr.bf16.mxu0 0
        %1994 = vmatpush1.bf16.msra.mxu0 0
        %1995 = vmatprep.subr.bf16.mxu0 0
        %1996 = vmatpush1.bf16.msra.mxu0 0
        %1997 = vmatprep.subr.bf16.mxu0 0
        %1998 = vmatpush1.bf16.msra.mxu0 0
        %1999 = vmatprep.subr.bf16.mxu0 0
        %2000 = vmatpush1.bf16.msra.mxu0 0
        %2001 = vmatprep.subr.bf16.mxu0 0
        %2002 = vmatpush1.bf16.msra.mxu0 0
        %2003 = vmatprep.subr.bf16.mxu0 0
        %2004 = vmatpush1.bf16.msra.mxu0 0
        %2005 = vmatprep.subr.bf16.mxu0 0
        %2006 = vmatpush1.bf16.msra.mxu0 0
        %2007 = vmatprep.subr.bf16.mxu0 0
        %2008 = vmatpush1.bf16.msra.mxu0 0
        %2009 = vmatprep.subr.bf16.mxu0 0
        %2010 = vmatpush1.bf16.msra.mxu0 0
        %2011 = vmatprep.mubr.bf16.mxu0 0
        %2012 = vmatmul.mubr.bf16.gmra.mrb[0].mxu0 %v1977
        %v2013 = vpop.f32.mrb[0].mxu0
        %v2014 = vadd.f32 0.0, %v2013
        %v2015 = vpop.f32.mrb[0].mxu0
        %v2016 = vpop.f32.mrb[0].mxu0
        %v2017 = vpop.f32.mrb[0].mxu0
        %2018 = vdwg.mxu0
        %v2020 = vsel %vm1222, %v1933, 0
        %2022 = vmatprep.subr.bf16.mxu0 0
        %2023 = vmatpush1.bf16.msra.mxu0 %v1968
        %2024 = vmatprep.subr.bf16.mxu0 0
        %2025 = vmatpush1.bf16.msra.mxu0 0
        %2026 = vmatprep.subr.bf16.mxu0 0
        %2027 = vmatpush1.bf16.msra.mxu0 0
        %2028 = vmatprep.subr.bf16.mxu0 0
        %2029 = vmatpush1.bf16.msra.mxu0 0
        %2030 = vmatprep.subr.bf16.mxu0 0
        %2031 = vmatpush1.bf16.msra.mxu0 0
        %2032 = vmatprep.subr.bf16.mxu0 0
        %2033 = vmatpush1.bf16.msra.mxu0 0
        %2034 = vmatprep.subr.bf16.mxu0 0
        %2035 = vmatpush1.bf16.msra.mxu0 0
        %2036 = vmatprep.subr.bf16.mxu0 0
        %2037 = vmatpush1.bf16.msra.mxu0 0
        %2038 = vmatprep.subr.bf16.mxu0 0
        %2039 = vmatpush1.bf16.msra.mxu0 0
        %2040 = vmatprep.subr.bf16.mxu0 0
        %2041 = vmatpush1.bf16.msra.mxu0 0
        %2042 = vmatprep.subr.bf16.mxu0 0
        %2043 = vmatpush1.bf16.msra.mxu0 0
        %2044 = vmatprep.subr.bf16.mxu0 0
        %2045 = vmatpush1.bf16.msra.mxu0 0
        %2046 = vmatprep.subr.bf16.mxu0 0
        %2047 = vmatpush1.bf16.msra.mxu0 0
        %2048 = vmatprep.subr.bf16.mxu0 0
        %2049 = vmatpush1.bf16.msra.mxu0 0
        %2050 = vmatprep.subr.bf16.mxu0 0
        %2051 = vmatpush1.bf16.msra.mxu0 0
        %2052 = vmatprep.subr.bf16.mxu0 0
        %2053 = vmatpush1.bf16.msra.mxu0 0
        %2054 = vmatprep.mubr.bf16.mxu0 0
        %2055 = vmatmul.mubr.bf16.gmra.mrb[0].mxu0 %v2020
        %v2056 = vpop.f32.mrb[0].mxu0
        %v2057 = vadd.f32 0.0, %v2056
        %v2058 = vpop.f32.mrb[0].mxu0
        %v2059 = vpop.f32.mrb[0].mxu0
        %v2060 = vpop.f32.mrb[0].mxu0
        %2061 = vdwg.mxu0
        %v2062 = vsel %vm1222, %v2014, -inf
        %2063 = vmax.xlane.f32.xlu0 %v2062
        %v2064 = vpop.xlane.xlu0 %2063
        %v2065 = vsel %vm1222, %v2057, -inf
        %2066 = vmax.xlane.f32.xlu0 %v2065
        %v2067 = vpop.xlane.xlu0 %2066
        %v2068 = vsub.f32 %v2014, %v2064
        %v2069 = vsub.f32 %v2057, %v2067
        %v2070 = vmul.f32 %v2068, 1.442695
        %v2071 = vpow.pop %v2070
        %v2072 = vmul.f32 %v2069, 1.442695
        %v2073 = vpow.pop %v2072
        %v2074 = vsel %vm1222, %v2071, 0.0
        %2075 = vadd.xlane.f32.xlu0 %v2074
        %v2076 = vpop.xlane.xlu0 %2075
        %v2077 = vsel %vm1222, %v2073, 0.0
        %2078 = vadd.xlane.f32.xlu0 %v2077
        %v2079 = vpop.xlane.xlu0 %2078
        %v2080 = vrcp.pop %v2076
        %v2081 = vrcp.pop %v2079
        %v2082 = vmul.f32 %v2071, %v2080
        %v2083 = vmul.f32 %v2073, %v2081
        %v2084 = vpack.c.bf16 %v2082, %v2082
        %v2085 = vpack.c.bf16 %v2083, %v2083
        %2086 = vxpose.xlu0.c.b16.start [1/8] %v1939, 128
        %2087 = vxpose.xlu0.c.b16.cont [2/8] 0, 128
        %2088 = vxpose.xlu0.c.b16.cont [3/8] 0, 128
        %2089 = vxpose.xlu0.c.b16.cont [4/8] 0, 128
        %2090 = vxpose.xlu0.c.b16.cont [5/8] 0, 128
        %2091 = vxpose.xlu0.c.b16.cont [6/8] 0, 128
        %2092 = vxpose.xlu0.c.b16.cont [7/8] 0, 128
        %2093 = vxpose.xlu0.c.b16.end [8/8] 0, 128
        %v2094 = vpop.trf.xlu0
        %v2095 = vpop.trf.xlu0
        %v2096 = vpop.trf.xlu0
        %v2097 = vpop.trf.xlu0
        %v2098 = vpop.trf.xlu0
        %v2099 = vpop.trf.xlu0
        %v2100 = vpop.trf.xlu0
        %v2101 = vpop.trf.xlu0
        %2102 = vxpose.xlu0.c.b16.start [1/8] %v1942, 128
        %2103 = vxpose.xlu0.c.b16.cont [2/8] 0, 128
        %2104 = vxpose.xlu0.c.b16.cont [3/8] 0, 128
        %2105 = vxpose.xlu0.c.b16.cont [4/8] 0, 128
        %2106 = vxpose.xlu0.c.b16.cont [5/8] 0, 128
        %2107 = vxpose.xlu0.c.b16.cont [6/8] 0, 128
        %2108 = vxpose.xlu0.c.b16.cont [7/8] 0, 128
        %2109 = vxpose.xlu0.c.b16.end [8/8] 0, 128
        %v2110 = vpop.trf.xlu0
        %v2111 = vpop.trf.xlu0
        %v2112 = vpop.trf.xlu0
        %v2113 = vpop.trf.xlu0
        %v2114 = vpop.trf.xlu0
        %v2115 = vpop.trf.xlu0
        %v2116 = vpop.trf.xlu0
        %v2117 = vpop.trf.xlu0
        %v2119 = vsel %vm1222, %v2094, 0
        %v2122 = vsel %vm1222, %v2084, 0
        %2124 = vmatprep.subr.bf16.mxu0 0
        %2125 = vmatpush1.bf16.xpose.msra.mxu0 %v2122
        %2126 = vmatprep.subr.bf16.mxu0 0
        %2127 = vmatpush1.bf16.xpose.msra.mxu0 0
        %2128 = vmatprep.subr.bf16.mxu0 0
        %2129 = vmatpush1.bf16.xpose.msra.mxu0 0
        %2130 = vmatprep.subr.bf16.mxu0 0
        %2131 = vmatpush1.bf16.xpose.msra.mxu0 0
        %2132 = vmatprep.subr.bf16.mxu0 0
        %2133 = vmatpush1.bf16.xpose.msra.mxu0 0
        %2134 = vmatprep.subr.bf16.mxu0 0
        %2135 = vmatpush1.bf16.xpose.msra.mxu0 0
        %2136 = vmatprep.subr.bf16.mxu0 0
        %2137 = vmatpush1.bf16.xpose.msra.mxu0 0
        %2138 = vmatprep.subr.bf16.mxu0 0
        %2139 = vmatpush1.bf16.xpose.msra.mxu0 0
        %2140 = vmatprep.subr.bf16.mxu0 0
        %2141 = vmatpush1.bf16.xpose.msra.mxu0 0
        %2142 = vmatprep.subr.bf16.mxu0 0
        %2143 = vmatpush1.bf16.xpose.msra.mxu0 0
        %2144 = vmatprep.subr.bf16.mxu0 0
        %2145 = vmatpush1.bf16.xpose.msra.mxu0 0
        %2146 = vmatprep.subr.bf16.mxu0 0
        %2147 = vmatpush1.bf16.xpose.msra.mxu0 0
        %2148 = vmatprep.subr.bf16.mxu0 0
        %2149 = vmatpush1.bf16.xpose.msra.mxu0 0
        %2150 = vmatprep.subr.bf16.mxu0 0
        %2151 = vmatpush1.bf16.xpose.msra.mxu0 0
        %2152 = vmatprep.subr.bf16.mxu0 0
        %2153 = vmatpush1.bf16.xpose.msra.mxu0 0
        %2154 = vmatprep.subr.bf16.mxu0 0
        %2155 = vmatpush1.bf16.xpose.msra.mxu0 0
        %2156 = vmatprep.mubr.bf16.mxu0 0
        %2157 = vmatmul.mubr.bf16.gmra.mrb[0].mxu0 %v2119
        %v2158 = vpop.f32.mrb[0].mxu0
        %v2159 = vadd.f32 0.0, %v2158
        %v2160 = vpop.f32.mrb[0].mxu0
        %v2161 = vpop.f32.mrb[0].mxu0
        %v2162 = vadd.f32 0.0, %v2161
        %v2163 = vpop.f32.mrb[0].mxu0
        %2164 = vdwg.mxu0
        %v2166 = vsel %vm1222, %v2110, 0
        %v2169 = vsel %vm1222, %v2085, 0
        %2171 = vmatprep.subr.bf16.mxu0 0
        %2172 = vmatpush1.bf16.xpose.msra.mxu0 %v2169
        %2173 = vmatprep.subr.bf16.mxu0 0
        %2174 = vmatpush1.bf16.xpose.msra.mxu0 0
        %2175 = vmatprep.subr.bf16.mxu0 0
        %2176 = vmatpush1.bf16.xpose.msra.mxu0 0
        %2177 = vmatprep.subr.bf16.mxu0 0
        %2178 = vmatpush1.bf16.xpose.msra.mxu0 0
        %2179 = vmatprep.subr.bf16.mxu0 0
        %2180 = vmatpush1.bf16.xpose.msra.mxu0 0
        %2181 = vmatprep.subr.bf16.mxu0 0
        %2182 = vmatpush1.bf16.xpose.msra.mxu0 0
        %2183 = vmatprep.subr.bf16.mxu0 0
        %2184 = vmatpush1.bf16.xpose.msra.mxu0 0
        %2185 = vmatprep.subr.bf16.mxu0 0
        %2186 = vmatpush1.bf16.xpose.msra.mxu0 0
        %2187 = vmatprep.subr.bf16.mxu0 0
        %2188 = vmatpush1.bf16.xpose.msra.mxu0 0
        %2189 = vmatprep.subr.bf16.mxu0 0
        %2190 = vmatpush1.bf16.xpose.msra.mxu0 0
        %2191 = vmatprep.subr.bf16.mxu0 0
        %2192 = vmatpush1.bf16.xpose.msra.mxu0 0
        %2193 = vmatprep.subr.bf16.mxu0 0
        %2194 = vmatpush1.bf16.xpose.msra.mxu0 0
        %2195 = vmatprep.subr.bf16.mxu0 0
        %2196 = vmatpush1.bf16.xpose.msra.mxu0 0
        %2197 = vmatprep.subr.bf16.mxu0 0
        %2198 = vmatpush1.bf16.xpose.msra.mxu0 0
        %2199 = vmatprep.subr.bf16.mxu0 0
        %2200 = vmatpush1.bf16.xpose.msra.mxu0 0
        %2201 = vmatprep.subr.bf16.mxu0 0
        %2202 = vmatpush1.bf16.xpose.msra.mxu0 0
        %2203 = vmatprep.mubr.bf16.mxu0 0
        %2204 = vmatmul.mubr.bf16.gmra.mrb[0].mxu0 %v2166
        %v2205 = vpop.f32.mrb[0].mxu0
        %v2206 = vadd.f32 0.0, %v2205
        %v2207 = vpop.f32.mrb[0].mxu0
        %v2208 = vpop.f32.mrb[0].mxu0
        %v2209 = vadd.f32 0.0, %v2208
        %v2210 = vpop.f32.mrb[0].mxu0
        %2211 = vdwg.mxu0
        %2212 = vxpose.xlu0.b32.start [1/16] %v2159, 128
        %2213 = vxpose.xlu0.b32.cont [2/16] %v2162, 128
        %2214 = vxpose.xlu0.b32.cont [3/16] 0.0, 128
        %2215 = vxpose.xlu0.b32.cont [4/16] 0.0, 128
        %2216 = vxpose.xlu0.b32.cont [5/16] 0.0, 128
        %2217 = vxpose.xlu0.b32.cont [6/16] 0.0, 128
        %2218 = vxpose.xlu0.b32.cont [7/16] 0.0, 128
        %2219 = vxpose.xlu0.b32.cont [8/16] 0.0, 128
        %2220 = vxpose.xlu0.b32.cont [9/16] 0.0, 128
        %2221 = vxpose.xlu0.b32.cont [10/16] 0.0, 128
        %2222 = vxpose.xlu0.b32.cont [11/16] 0.0, 128
        %2223 = vxpose.xlu0.b32.cont [12/16] 0.0, 128
        %2224 = vxpose.xlu0.b32.cont [13/16] 0.0, 128
        %2225 = vxpose.xlu0.b32.cont [14/16] 0.0, 128
        %2226 = vxpose.xlu0.b32.cont [15/16] 0.0, 128
        %2227 = vxpose.xlu0.b32.end [16/16] 0.0, 128
        %v2228 = vpop.trf.xlu0
        %v2229 = vpop.trf.xlu0
        %v2230 = vpop.trf.xlu0
        %v2231 = vpop.trf.xlu0
        %v2232 = vpop.trf.xlu0
        %v2233 = vpop.trf.xlu0
        %v2234 = vpop.trf.xlu0
        %v2235 = vpop.trf.xlu0
        %v2236 = vpop.trf.xlu0
        %v2237 = vpop.trf.xlu0
        %v2238 = vpop.trf.xlu0
        %v2239 = vpop.trf.xlu0
        %v2240 = vpop.trf.xlu0
        %v2241 = vpop.trf.xlu0
        %v2242 = vpop.trf.xlu0
        %v2243 = vpop.trf.xlu0
        %2244 = vxpose.xlu0.b32.start [1/16] %v2206, 128
        %2245 = vxpose.xlu0.b32.cont [2/16] %v2209, 128
        %2246 = vxpose.xlu0.b32.cont [3/16] 0.0, 128
        %2247 = vxpose.xlu0.b32.cont [4/16] 0.0, 128
        %2248 = vxpose.xlu0.b32.cont [5/16] 0.0, 128
        %2249 = vxpose.xlu0.b32.cont [6/16] 0.0, 128
        %2250 = vxpose.xlu0.b32.cont [7/16] 0.0, 128
        %2251 = vxpose.xlu0.b32.cont [8/16] 0.0, 128
        %2252 = vxpose.xlu0.b32.cont [9/16] 0.0, 128
        %2253 = vxpose.xlu0.b32.cont [10/16] 0.0, 128
        %2254 = vxpose.xlu0.b32.cont [11/16] 0.0, 128
        %2255 = vxpose.xlu0.b32.cont [12/16] 0.0, 128
        %2256 = vxpose.xlu0.b32.cont [13/16] 0.0, 128
        %2257 = vxpose.xlu0.b32.cont [14/16] 0.0, 128
        %2258 = vxpose.xlu0.b32.cont [15/16] 0.0, 128
        %2259 = vxpose.xlu0.b32.end [16/16] 0.0, 128
        %v2260 = vpop.trf.xlu0
        %v2261 = vpop.trf.xlu0
        %v2262 = vpop.trf.xlu0
        %v2263 = vpop.trf.xlu0
        %v2264 = vpop.trf.xlu0
        %v2265 = vpop.trf.xlu0
        %v2266 = vpop.trf.xlu0
        %v2267 = vpop.trf.xlu0
        %v2268 = vpop.trf.xlu0
        %v2269 = vpop.trf.xlu0
        %v2270 = vpop.trf.xlu0
        %v2271 = vpop.trf.xlu0
        %v2272 = vpop.trf.xlu0
        %v2273 = vpop.trf.xlu0
        %v2274 = vpop.trf.xlu0
        %v2275 = vpop.trf.xlu0
        %v2276 = vcombine.high %v2228, 0.0
        %v2278 = vunpack.c.l.s4 1983009808
        %v2279 = vunpack.c.0.s8 %v2278
        %v2280 = vlaneseq
        %v2281 = vshrl.u32 %v2280, 7
        %v2282 = vsub.s32 %v2279, %v2281
        %v2283 = vrot.slane %v2228, %v2282
        %v2285 = vunpack.c.l.s4 1983009808
        %v2286 = vunpack.c.0.s8 %v2285
        %v2287 = vlaneseq
        %v2288 = vshrl.u32 %v2287, 7
        %v2289 = vsub.s32 %v2286, %v2288
        %v2290 = vrot.slane %v2276, %v2289
        %v2291 = vcombine.high %v2260, 0.0
        %v2293 = vunpack.c.l.s4 1983009808
        %v2294 = vunpack.c.0.s8 %v2293
        %v2295 = vlaneseq
        %v2296 = vshrl.u32 %v2295, 7
        %v2297 = vsub.s32 %v2294, %v2296
        %v2298 = vrot.slane %v2260, %v2297
        %v2300 = vunpack.c.l.s4 1983009808
        %v2301 = vunpack.c.0.s8 %v2300
        %v2302 = vlaneseq
        %v2303 = vshrl.u32 %v2302, 7
        %v2304 = vsub.s32 %v2301, %v2303
        %v2305 = vrot.slane %v2291, %v2304
        %v2306 = vcombine.low %v2283, %v2298
        %v2307 = vcombine.high %v2283, %v2298
        %v2309 = vunpack.c.l.s4 1934713408
        %v2310 = vunpack.c.0.s8 %v2309
        %v2311 = vlaneseq
        %v2312 = vshrl.u32 %v2311, 7
        %v2313 = vsub.s32 %v2310, %v2312
        %v2314 = vrot.slane %v2306, %v2313
        %v2316 = vunpack.c.l.s4 1934713408
        %v2317 = vunpack.c.0.s8 %v2316
        %v2318 = vlaneseq
        %v2319 = vshrl.u32 %v2318, 7
        %v2320 = vsub.s32 %v2317, %v2319
        %v2321 = vrot.slane %v2307, %v2320
        %v2322 = vcombine.low %v2290, %v2305
        %v2323 = vcombine.high %v2290, %v2305
        %v2325 = vunpack.c.l.s4 1934713408
        %v2326 = vunpack.c.0.s8 %v2325
        %v2327 = vlaneseq
        %v2328 = vshrl.u32 %v2327, 7
        %v2329 = vsub.s32 %v2326, %v2328
        %v2330 = vrot.slane %v2322, %v2329
        %v2332 = vunpack.c.l.s4 1934713408
        %v2333 = vunpack.c.0.s8 %v2332
        %v2334 = vlaneseq
        %v2335 = vshrl.u32 %v2334, 7
        %v2336 = vsub.s32 %v2333, %v2335
        %v2337 = vrot.slane %v2323, %v2336
        %v2338 = vcombine.high %v2314, 0.0
        %v2339 = vcombine.high %v2321, 0.0
        %v2340 = vcombine.high %v2330, 0.0
        %v2341 = vcombine.high %v2337, 0.0
        %v2342 = vpack.c.bf16 %v2314, %v2314
        %v2343 = vpack.c.bf16 %v2338, %v2338
        %v2344 = vpack.c.bf16 %v2321, %v2321
        %v2345 = vpack.c.bf16 %v2339, %v2339
        %v2346 = vpack.c.bf16 %v2330, %v2330
        %v2347 = vpack.c.bf16 %v2340, %v2340
        %v2348 = vpack.c.bf16 %v2337, %v2337
        %v2349 = vpack.c.bf16 %v2341, %v2341
        %v2350 = vcombine.low %v2342, %v2346
        %v2352 = vunpack.c.l.s4 1983009808
        %v2353 = vunpack.c.0.s8 %v2352
        %v2354 = vlaneseq
        %v2355 = vshrl.u32 %v2354, 7
        %v2356 = vsub.s32 %v2353, %v2355
        %v2357 = vrot.slane %v2350, %v2356
        %v2358 = vcombine.low %v2344, %v2348
        %v2360 = vunpack.c.l.s4 1983009808
        %v2361 = vunpack.c.0.s8 %v2360
        %v2362 = vlaneseq
        %v2363 = vshrl.u32 %v2362, 7
        %v2364 = vsub.s32 %v2361, %v2363
        %v2365 = vrot.slane %v2358, %v2364
        %v2366 = vcombine.low %v2357, %v2365
        %v2368 = vunpack.c.l.s4 1934713408
        %v2369 = vunpack.c.0.s8 %v2368
        %v2370 = vlaneseq
        %v2371 = vshrl.u32 %v2370, 7
        %v2372 = vsub.s32 %v2369, %v2371
        %v2373 = vrot.slane %v2366, %v2372
        %v2374 = vcombine.low %v2343, %v2347
        %v2376 = vunpack.c.l.s4 1983009808
        %v2377 = vunpack.c.0.s8 %v2376
        %v2378 = vlaneseq
        %v2379 = vshrl.u32 %v2378, 7
        %v2380 = vsub.s32 %v2377, %v2379
        %v2381 = vrot.slane %v2374, %v2380
        %v2382 = vcombine.low %v2345, %v2349
        %v2384 = vunpack.c.l.s4 1983009808
        %v2385 = vunpack.c.0.s8 %v2384
        %v2386 = vlaneseq
        %v2387 = vshrl.u32 %v2386, 7
        %v2388 = vsub.s32 %v2385, %v2387
        %v2389 = vrot.slane %v2382, %v2388
        %v2390 = vcombine.low %v2381, %v2389
        %v2392 = vunpack.c.l.s4 1934713408
        %v2393 = vunpack.c.0.s8 %v2392
        %v2394 = vlaneseq
        %v2395 = vshrl.u32 %v2394, 7
        %v2396 = vsub.s32 %v2393, %v2395
        %v2397 = vrot.slane %v2390, %v2396
        %v2400 = vpack.i.b16 %v2397, %v2373
        %v2401 = vshrl.u32 %v2373, 16
        %v2402 = vshrl.u32 %v2397, 16
        %v2403 = vpack.i.b16 %v2402, %v2401
        %2404 = vrot.lane.b32.xlu0 %v2403, 16
        %v2405 = vpop.permute.xlu0 %2404
        %v2408 = vsel %vm1222, %v2400, %v2405
        %v2409 = vld [vmem:[#allocation17] sm:$0xf]
        %v2410 = vld [vmem:[#allocation17 + $0x4] sm:$0xf]
        %v2411 = vld [vmem:[#allocation17 + $0x8] sm:$0xf]
        %v2412 = vld [vmem:[#allocation17 + $0xc] sm:$0xf]
        %v2413 = vld [vmem:[#allocation19] sm:$0x1]
        %v2415 = vlaneseq
        %v2416 = vshrl.u32 %v2415, 7
        %v2417 = vsub.s32 0, %v2416
        %v2418 = vrot.slane %v2413, %v2417
        %v2424 = vunpack.c.l.b16 %v2409
        %v2425 = vunpack.c.l.b16 %v2410
        %v2426 = vunpack.c.l.b16 %v2411
        %v2427 = vunpack.c.l.b16 %v2412
        %v2428 = vpack.c.b16 %v2425, %v2424
        %v2429 = vpack.c.b16 %v2427, %v2426
        %v2432 = vsel %vm1006, %v2408, 0
        %2434 = vmatprep.subr.bf16.mxu0 0
        %2435 = vmatpush1.bf16.msra.mxu0 %v2428
        %2436 = vmatprep.subr.bf16.mxu0 0
        %2437 = vmatpush1.bf16.msra.mxu0 %v2429
        %2438 = vmatprep.subr.bf16.mxu0 0
        %2439 = vmatpush1.bf16.msra.mxu0 0
        %2440 = vmatprep.subr.bf16.mxu0 0
        %2441 = vmatpush1.bf16.msra.mxu0 0
        %2442 = vmatprep.subr.bf16.mxu0 0
        %2443 = vmatpush1.bf16.msra.mxu0 0
        %2444 = vmatprep.subr.bf16.mxu0 0
        %2445 = vmatpush1.bf16.msra.mxu0 0
        %2446 = vmatprep.subr.bf16.mxu0 0
        %2447 = vmatpush1.bf16.msra.mxu0 0
        %2448 = vmatprep.subr.bf16.mxu0 0
        %2449 = vmatpush1.bf16.msra.mxu0 0
        %2450 = vmatprep.subr.bf16.mxu0 0
        %2451 = vmatpush1.bf16.msra.mxu0 0
        %2452 = vmatprep.subr.bf16.mxu0 0
        %2453 = vmatpush1.bf16.msra.mxu0 0
        %2454 = vmatprep.subr.bf16.mxu0 0
        %2455 = vmatpush1.bf16.msra.mxu0 0
        %2456 = vmatprep.subr.bf16.mxu0 0
        %2457 = vmatpush1.bf16.msra.mxu0 0
        %2458 = vmatprep.subr.bf16.mxu0 0
        %2459 = vmatpush1.bf16.msra.mxu0 0
        %2460 = vmatprep.subr.bf16.mxu0 0
        %2461 = vmatpush1.bf16.msra.mxu0 0
        %2462 = vmatprep.subr.bf16.mxu0 0
        %2463 = vmatpush1.bf16.msra.mxu0 0
        %2464 = vmatprep.subr.bf16.mxu0 0
        %2465 = vmatpush1.bf16.msra.mxu0 0
        %2466 = vmatprep.mubr.bf16.mxu0 0
        %2467 = vmatmul.mubr.bf16.gmra.mrb[0].mxu0 %v2432
        %v2468 = vpop.f32.mrb[0].mxu0
        %v2469 = vadd.f32 %v2418, %v2468
        %v2470 = vpop.f32.mrb[0].mxu0
        %v2471 = vpop.f32.mrb[0].mxu0
        %v2472 = vpop.f32.mrb[0].mxu0
        %2473 = vdwg.mxu0
        %v2474 = vld [vmem:[#allocation20] sm:$0x1]
        %v2475 = vld [vmem:[%s18] sm:$0x1]
        %v2476 = vsel %vm1006, %v2469, 0.0
        %2477 = vadd.xlane.f32.xlu0 %v2476
        %v2478 = vpop.xlane.xlu0 %2477
        %v2479 = vmul.f32 %v2478, %v1727
        %v2480 = vsub.f32 %v2469, %v2479
        %v2481 = vmul.f32 %v2480, %v2480
        %v2482 = vsel %vm1006, %v2481, 0.0
        %2483 = vadd.xlane.f32.xlu0 %v2482
        %v2484 = vpop.xlane.xlu0 %2483
        %v2485 = vmul.f32 %v2484, %v1727
        %v2486 = vadd.f32 %v2485, 1e-05
        %v2487 = vrsqrt.pop %v2486
        %v2488 = vmul.f32 %v2480, %v2487
        %v2490 = vlaneseq
        %v2491 = vshrl.u32 %v2490, 7
        %v2492 = vsub.s32 0, %v2491
        %v2493 = vrot.slane %v2474, %v2492
        %v2495 = vmul.f32 %v2488, %v2493
        %v2497 = vlaneseq
        %v2498 = vshrl.u32 %v2497, 7
        %v2499 = vsub.s32 0, %v2498
        %v2500 = vrot.slane %v2475, %v2499
        %v2502 = vadd.f32 %v2495, %v2500
        %v2503 = vadd.f32 %v1752, %v2502
        %v2504 = vsel %vm1222, %v2014, 0.0
        %v2505 = vsel %vm1222, %v2057, 0.0
        %v2506 = vadd.f32 %v2504, %v2505
        %v2507 = vmul.f32 %v2506, 0.5
        %v2508 = vsel %vm1222, %v2507, 0.0
        %2509 = vst [vmem:[%s967] sm:$0xff] %v2508
        %v2510 = vpack.c.bf16 %v2503, %v2503
        %v2511 = vld [vmem:[%s19] sm:$0xf]
        %v2512 = vld [vmem:[%s19 + $0x4] sm:$0xf]
        %v2513 = vld [vmem:[%s19 + $0x8] sm:$0xf]
        %v2514 = vld [vmem:[%s19 + $0xc] sm:$0xf]
        %v2515 = vld [vmem:[%s20] sm:$0x1]
        %v2517 = vlaneseq
        %v2518 = vshrl.u32 %v2517, 7
        %v2519 = vsub.s32 0, %v2518
        %v2520 = vrot.slane %v2515, %v2519
        %v2526 = vunpack.c.l.b16 %v2511
        %v2527 = vunpack.c.l.b16 %v2512
        %v2528 = vunpack.c.l.b16 %v2513
        %v2529 = vunpack.c.l.b16 %v2514
        %v2530 = vpack.c.b16 %v2527, %v2526
        %v2531 = vpack.c.b16 %v2529, %v2528
        %v2535 = vsel %vm1006, %v2510, 0
        %2537 = vmatprep.subr.bf16.mxu0 0
        %2538 = vmatpush1.bf16.msra.mxu0 %v2530
        %2539 = vmatprep.subr.bf16.mxu0 0
        %2540 = vmatpush1.bf16.msra.mxu0 %v2531
        %2541 = vmatprep.subr.bf16.mxu0 0
        %2542 = vmatpush1.bf16.msra.mxu0 0
        %2543 = vmatprep.subr.bf16.mxu0 0
        %2544 = vmatpush1.bf16.msra.mxu0 0
        %2545 = vmatprep.subr.bf16.mxu0 0
        %2546 = vmatpush1.bf16.msra.mxu0 0
        %2547 = vmatprep.subr.bf16.mxu0 0
        %2548 = vmatpush1.bf16.msra.mxu0 0
        %2549 = vmatprep.subr.bf16.mxu0 0
        %2550 = vmatpush1.bf16.msra.mxu0 0
        %2551 = vmatprep.subr.bf16.mxu0 0
        %2552 = vmatpush1.bf16.msra.mxu0 0
        %2553 = vmatprep.subr.bf16.mxu0 0
        %2554 = vmatpush1.bf16.msra.mxu0 0
        %2555 = vmatprep.subr.bf16.mxu0 0
        %2556 = vmatpush1.bf16.msra.mxu0 0
        %2557 = vmatprep.subr.bf16.mxu0 0
        %2558 = vmatpush1.bf16.msra.mxu0 0
        %2559 = vmatprep.subr.bf16.mxu0 0
        %2560 = vmatpush1.bf16.msra.mxu0 0
        %2561 = vmatprep.subr.bf16.mxu0 0
        %2562 = vmatpush1.bf16.msra.mxu0 0
        %2563 = vmatprep.subr.bf16.mxu0 0
        %2564 = vmatpush1.bf16.msra.mxu0 0
        %2565 = vmatprep.subr.bf16.mxu0 0
        %2566 = vmatpush1.bf16.msra.mxu0 0
        %2567 = vmatprep.subr.bf16.mxu0 0
        %2568 = vmatpush1.bf16.msra.mxu0 0
        %2569 = vmatprep.mubr.bf16.mxu0 0
        %2570 = vmatmul.mubr.bf16.gmra.mrb[0].mxu0 %v2535
        %v2571 = vpop.f32.mrb[0].mxu0
        %v2572 = vadd.f32 %v2520, %v2571
        %v2573 = vpop.f32.mrb[0].mxu0
        %v2574 = vpop.f32.mrb[0].mxu0
        %v2575 = vpop.f32.mrb[0].mxu0
        %2576 = vdwg.mxu0
        %v2577 = vmul.f32 %v2572, 0.5
        %v2578 = vmul.f32 %v2572, 0.70710677
        %vm2579 = vcmp.ge.f32.partialorder %v2578, 0.0
        %v2580 = vsel %vm2579, 1.0, -1.0
        %v2581 = vand.u32 2147483647, %v2578
        %v2582 = vmul.f32 %v2581, 0.3275911
        %v2583 = vadd.f32 %v2582, 1.0
        %v2584 = vrcp.pop %v2583
        %v2585 = vmul.f32 %v2584, 1.0614054
        %v2586 = vadd.f32 %v2585, -1.4531521
        %v2587 = vmul.f32 %v2586, %v2584
        %v2588 = vadd.f32 %v2587, 1.4214138
        %v2589 = vmul.f32 %v2588, %v2584
        %v2590 = vadd.f32 %v2589, -0.28449672
        %v2591 = vmul.f32 %v2590, %v2584
        %v2592 = vadd.f32 %v2591, 0.2548296
        %v2593 = vmul.f32 %v2592, %v2584
        %v2594 = vsub.f32 0.0, %v2581
        %v2595 = vmul.f32 %v2594, %v2581
        %v2596 = vmul.f32 %v2595, 1.442695
        %v2597 = vpow.pop %v2596
        %v2598 = vmul.f32 %v2593, %v2597
        %v2599 = vsub.f32 1.0, %v2598
        %v2600 = vmul.f32 %v2580, %v2599
        %v2601 = vadd.f32 %v2600, 1.0
        %v2602 = vmul.f32 %v2577, %v2601
        %v2603 = vpack.c.bf16 %v2602, %v2602
        %v2604 = vld [vmem:[%s21] sm:$0xf]
        %v2605 = vld [vmem:[%s21 + $0x4] sm:$0xf]
        %v2606 = vld [vmem:[%s21 + $0x8] sm:$0xf]
        %v2607 = vld [vmem:[%s21 + $0xc] sm:$0xf]
        %v2608 = vld [vmem:[%s21 + $0x10] sm:$0xf]
        %v2609 = vld [vmem:[%s21 + $0x14] sm:$0xf]
        %v2610 = vld [vmem:[%s21 + $0x18] sm:$0xf]
        %v2611 = vld [vmem:[%s21 + $0x1c] sm:$0xf]
        %v2612 = vld [vmem:[%s21 + $0x20] sm:$0xf]
        %v2613 = vld [vmem:[%s21 + $0x24] sm:$0xf]
        %v2614 = vld [vmem:[%s21 + $0x28] sm:$0xf]
        %v2615 = vld [vmem:[%s21 + $0x2c] sm:$0xf]
        %v2616 = vld [vmem:[%s21 + $0x30] sm:$0xf]
        %v2617 = vld [vmem:[%s21 + $0x34] sm:$0xf]
        %v2618 = vld [vmem:[%s21 + $0x38] sm:$0xf]
        %v2619 = vld [vmem:[%s21 + $0x3c] sm:$0xf]
        %v2620 = vld [vmem:[%s22] sm:$0x1]
        %v2622 = vlaneseq
        %v2623 = vshrl.u32 %v2622, 7
        %v2624 = vsub.s32 0, %v2623
        %v2625 = vrot.slane %v2620, %v2624
        %v2643 = vunpack.c.l.b16 %v2604
        %v2644 = vunpack.c.l.b16 %v2605
        %v2645 = vunpack.c.l.b16 %v2606
        %v2646 = vunpack.c.l.b16 %v2607
        %v2647 = vunpack.c.l.b16 %v2608
        %v2648 = vunpack.c.l.b16 %v2609
        %v2649 = vunpack.c.l.b16 %v2610
        %v2650 = vunpack.c.l.b16 %v2611
        %v2651 = vunpack.c.l.b16 %v2612
        %v2652 = vunpack.c.l.b16 %v2613
        %v2653 = vunpack.c.l.b16 %v2614
        %v2654 = vunpack.c.l.b16 %v2615
        %v2655 = vunpack.c.l.b16 %v2616
        %v2656 = vunpack.c.l.b16 %v2617
        %v2657 = vunpack.c.l.b16 %v2618
        %v2658 = vunpack.c.l.b16 %v2619
        %v2659 = vpack.c.b16 %v2644, %v2643
        %v2660 = vpack.c.b16 %v2646, %v2645
        %v2661 = vpack.c.b16 %v2648, %v2647
        %v2662 = vpack.c.b16 %v2650, %v2649
        %v2663 = vpack.c.b16 %v2652, %v2651
        %v2664 = vpack.c.b16 %v2654, %v2653
        %v2665 = vpack.c.b16 %v2656, %v2655
        %v2666 = vpack.c.b16 %v2658, %v2657
        %2675 = vmatprep.subr.bf16.mxu0 0
        %2676 = vmatpush1.bf16.msra.mxu0 %v2659
        %2677 = vmatprep.subr.bf16.mxu0 0
        %2678 = vmatpush1.bf16.msra.mxu0 %v2660
        %2679 = vmatprep.subr.bf16.mxu0 0
        %2680 = vmatpush1.bf16.msra.mxu0 %v2661
        %2681 = vmatprep.subr.bf16.mxu0 0
        %2682 = vmatpush1.bf16.msra.mxu0 %v2662
        %2683 = vmatprep.subr.bf16.mxu0 0
        %2684 = vmatpush1.bf16.msra.mxu0 %v2663
        %2685 = vmatprep.subr.bf16.mxu0 0
        %2686 = vmatpush1.bf16.msra.mxu0 %v2664
        %2687 = vmatprep.subr.bf16.mxu0 0
        %2688 = vmatpush1.bf16.msra.mxu0 %v2665
        %2689 = vmatprep.subr.bf16.mxu0 0
        %2690 = vmatpush1.bf16.msra.mxu0 %v2666
        %2691 = vmatprep.subr.bf16.mxu0 0
        %2692 = vmatpush1.bf16.msra.mxu0 0
        %2693 = vmatprep.subr.bf16.mxu0 0
        %2694 = vmatpush1.bf16.msra.mxu0 0
        %2695 = vmatprep.subr.bf16.mxu0 0
        %2696 = vmatpush1.bf16.msra.mxu0 0
        %2697 = vmatprep.subr.bf16.mxu0 0
        %2698 = vmatpush1.bf16.msra.mxu0 0
        %2699 = vmatprep.subr.bf16.mxu0 0
        %2700 = vmatpush1.bf16.msra.mxu0 0
        %2701 = vmatprep.subr.bf16.mxu0 0
        %2702 = vmatpush1.bf16.msra.mxu0 0
        %2703 = vmatprep.subr.bf16.mxu0 0
        %2704 = vmatpush1.bf16.msra.mxu0 0
        %2705 = vmatprep.subr.bf16.mxu0 0
        %2706 = vmatpush1.bf16.msra.mxu0 0
        %2707 = vmatprep.mubr.bf16.mxu0 0
        %2708 = vmatmul.mubr.bf16.gmra.mrb[0].mxu0 %v2603
        %v2709 = vpop.f32.mrb[0].mxu0
        %v2710 = vadd.f32 %v2625, %v2709
        %v2711 = vpop.f32.mrb[0].mxu0
        %v2712 = vpop.f32.mrb[0].mxu0
        %v2713 = vpop.f32.mrb[0].mxu0
        %2714 = vdwg.mxu0
        %v2715 = vadd.f32 %v2503, %v2710
        %v2716 = vld [vmem:[%s23] sm:$0x1]
        %v2717 = vld [vmem:[%s24] sm:$0x1]
        %v2718 = vsel %vm1006, %v2715, 0.0
        %2719 = vadd.xlane.f32.xlu0 %v2718
        %v2720 = vpop.xlane.xlu0 %2719
        %v2721 = vmul.f32 %v2720, %v1727
        %v2722 = vsub.f32 %v2715, %v2721
        %v2723 = vmul.f32 %v2722, %v2722
        %v2724 = vsel %vm1006, %v2723, 0.0
        %2725 = vadd.xlane.f32.xlu0 %v2724
        %v2726 = vpop.xlane.xlu0 %2725
        %v2727 = vmul.f32 %v2726, %v1727
        %v2728 = vadd.f32 %v2727, 1e-05
        %v2729 = vrsqrt.pop %v2728
        %v2730 = vmul.f32 %v2722, %v2729
        %v2732 = vlaneseq
        %v2733 = vshrl.u32 %v2732, 7
        %v2734 = vsub.s32 0, %v2733
        %v2735 = vrot.slane %v2716, %v2734
        %v2737 = vmul.f32 %v2730, %v2735
        %v2739 = vlaneseq
        %v2740 = vshrl.u32 %v2739, 7
        %v2741 = vsub.s32 0, %v2740
        %v2742 = vrot.slane %v2717, %v2741
        %v2744 = vadd.f32 %v2737, %v2742
        %v2745 = vsel %vm1006, %v2744, 0.0
        %2746 = vst [vmem:[%s960] sm:$0xff] %v2745
        %s2747 = sand.u32 %s594, 1
        %s2748 = scalar_lea.sflag [#allocation4], %s2747
        %s2749 = sand.u32 %s594, 1
        %s2750 = smul.addr %s2749, 8
        %s2751 = scalar_lea.vmem [#allocation22], %s2750
        %s2752 = sand.u32 %s620, 1
        %s2753 = scalar_lea.sflag [#allocation24], %s2752
        %s2754 = sand.u32 %s620, 1
        %s2755 = smul.addr %s2754, 8
        %s2756 = scalar_lea.vmem [#allocation23], %s2755
        // Predicated region
        $region169: #{tpu_custom_call.1} parent=119 // pred_check
          %p2757 = pneg %p604
        $region170: #{tpu_custom_call.1} parent=119 // pred_check_branch
          %2759 = sbr.rel (%p2757) target = $region172
        $region171: #{tpu_custom_call.1} parent=119 // pred_region
          %s2761 = ssub.s32 128, 128
          %2762 = vsyncadd %s2748, %s2761
          %s2763 = smul.addr %s51, 128
          %s2764 = scalar_lea.hbm %s25, %s2763
          %s2766 = sshll.u32 %s2751, 4
          %s2767 = int_to_ptr.vmem [resolvable:$true] %s2766
          %2769 = dma.vmem_to_hbm [thread:$0]  %s2767, 128, %s2764, %s2748
        $region172: #{tpu_custom_call.1} parent=119 // pred_fallthru
          _
        // Predicated region
        $region173: #{tpu_custom_call.1} parent=119 // pred_check
          %p2770 = pneg %p630
        $region174: #{tpu_custom_call.1} parent=119 // pred_check_branch
          %2772 = sbr.rel (%p2770) target = $region176
        $region175: #{tpu_custom_call.1} parent=119 // pred_region
          %s2774 = ssub.s32 128, 128
          %2775 = vsyncadd %s2753, %s2774
          %s2776 = smul.addr %s51, 128
          %s2777 = scalar_lea.hbm %s26, %s2776
          %s2779 = sshll.u32 %s2756, 4
          %s2780 = int_to_ptr.vmem [resolvable:$true] %s2779
          %2782 = dma.vmem_to_hbm [thread:$0]  %s2780, 128, %s2777, %s2753
        $region176: #{tpu_custom_call.1} parent=119 // pred_fallthru
          _
      $region120: #{tpu_custom_call.1} parent=5 // pred_fallthru
        _
      %p2783 = scmp.le.s32.totalorder 2, %s46
      // Predicated region
      $region177: #{tpu_custom_call.1} parent=5 // pred_check
        %p2784 = pneg %p2783
      $region178: #{tpu_custom_call.1} parent=5 // pred_check_branch
        %2786 = sbr.rel (%p2784) target = $region180
      $region179: #{tpu_custom_call.1} parent=5 // pred_region
        %s2787 = ssub.s32 %s46, 2
        // Predicated region
        $region181: #{tpu_custom_call.1} parent=179 // pred_check
          %p2788 = pneg %p610
        $region182: #{tpu_custom_call.1} parent=179 // pred_check_branch
          %2790 = sbr.rel (%p2788) target = $region184
        $region183: #{tpu_custom_call.1} parent=179 // pred_region
          %s2791 = sand.u32 %s595, 1
          %s2792 = scalar_lea.sflag [#allocation4], %s2791
          %s2793 = sand.u32 %s595, 1
          %s2794 = smul.addr %s2793, 8
          %s2795 = scalar_lea.vmem [#allocation22], %s2794
          %2796 = dma.done %s2792, 128
        $region184: #{tpu_custom_call.1} parent=179 // pred_fallthru
          _
        // Predicated region
        $region185: #{tpu_custom_call.1} parent=179 // pred_check
          %p2797 = pneg %p636
        $region186: #{tpu_custom_call.1} parent=179 // pred_check_branch
          %2799 = sbr.rel (%p2797) target = $region188
        $region187: #{tpu_custom_call.1} parent=179 // pred_region
          %s2800 = sand.u32 %s621, 1
          %s2801 = scalar_lea.sflag [#allocation24], %s2800
          %s2802 = sand.u32 %s621, 1
          %s2803 = smul.addr %s2802, 8
          %s2804 = scalar_lea.vmem [#allocation23], %s2803
          %2805 = dma.done %s2801, 128
        $region188: #{tpu_custom_call.1} parent=179 // pred_fallthru
          _
      $region180: #{tpu_custom_call.1} parent=5 // pred_fallthru
        _
    $region6: #{tpu_custom_call.1} parent=1 // loop_footer
      %s50 = sadd.s32 1, %s46
    $region7: #{tpu_custom_call.1} parent=1 // loop_footer_branch
      %45 = sbr.rel target = $region3
    $region8: #{tpu_custom_call.1} parent=1 // loop_exit
      _
    %2806 = vsyncpa [#allocation3], 1
    %s2807 = scalar_lea.sflag [#allocation3], 1
    %2808 = vsyncpa %s2807, 1
    %2809 = vsyncpa [#allocation6], 1
    %2810 = vsyncpa [#allocation9], 1
    %2811 = vsyncpa [#allocation12], 1
    %2812 = vsyncpa [#allocation15], 1
    %2813 = vsyncpa [#allocation18], 1
    %2814 = vsyncpa [#allocation21], 1
    %2815 = vsyncpa [#allocation4], 1
    %s2816 = scalar_lea.sflag [#allocation4], 1
    %2817 = vsyncpa %s2816, 1
    %2818 = vsyncpa [#allocation24], 1
    %s2819 = scalar_lea.sflag [#allocation24], 1
    %2820 = vsyncpa %s2819, 1

</llo_original>
